<compile_context>
chip_gen: v6e
topology: v6e:2x2x1
jax: 0.10.0
libtpu: 0.0.40
codegen_flags: <defaults>
</compile_context>

<pallas_src>
import math
import functools

import jax
import jax.numpy as jnp
from jax.experimental import pallas as pl
from jax.experimental.pallas import tpu as pltpu


# ----------------------------------------------------------------------------
# Fused, streamed bidirectional LSTM kernel (one grid step = one time chunk).
#
# xf_ref : (Tc*Bp, E)    bf16  fwd time chunk c            (rows = (t, b))
# xb_ref : (Tc*Bp, E)    bf16  bwd time chunk C-1-c
# wx_ref : (E, 8*Hp)     bf16  [W_ih_fwd | W_ih_bwd], per-gate padded
# wh_ref : (2*Hp, 8*Hp)  bf16  block-diagonal [W_hh_fwd ; W_hh_bwd]
# b_ref  : (1, 8*Hp)     f32   combined (b_ih + b_hh) per direction
# outf   : (Tc*Bp, Hp)   bf16  fwd outputs for chunk c
# outb   : (Tc*Bp, Hp)   bf16  bwd outputs for chunk C-1-c
# hT_ref : (Bp, 2*Hp)    f32   final [h_fwd_T | h_bwd_0]
# Gate order is i, f, g, o (PyTorch nn.LSTM convention), each gate Hp wide.
# ----------------------------------------------------------------------------
def bilstm_kernel(xf_ref, xb_ref, wx_ref, wh_ref, b_ref,
                  outf_ref, outb_ref, hT_ref,
                  gx_sc, h_sc, c_sc, *, chunk_t, batch_p, hidden_p, unroll):
    Tc, Bp, Hp = chunk_t, batch_p, hidden_p
    G = 4 * Hp  # per-direction gate width

    c_idx = pl.program_id(0)

    @pl.when(c_idx == 0)
    def _():
        h_sc[...] = jnp.zeros_like(h_sc)
        c_sc[...] = jnp.zeros_like(c_sc)

    # ---- Per-chunk hoisted input projection (both directions) ------------
    # bf16 MXU matmuls, f32 accumulation, bias folded in once; stored bf16.
    gx_f = (jnp.dot(xf_ref[...], wx_ref[:, 0:G],
                    preferred_element_type=jnp.float32) + b_ref[:, 0:G])
    gx_b = (jnp.dot(xb_ref[...], wx_ref[:, G:2 * G],
                    preferred_element_type=jnp.float32) + b_ref[:, G:2 * G])
    gx_sc[:, 0:G] = gx_f.astype(jnp.bfloat16)
    gx_sc[:, G:2 * G] = gx_b.astype(jnp.bfloat16)

    def sigmoid1(x):
        # One EUP op (tanh) + cheap VPU, instead of exp + reciprocal.
        return 0.5 * jnp.tanh(0.5 * x) + 0.5

    def lstm_cell(gates, c_prev):
        i = sigmoid1(gates[:, 0 * Hp:1 * Hp])
        f = sigmoid1(gates[:, 1 * Hp:2 * Hp])
        g = jnp.tanh(gates[:, 2 * Hp:3 * Hp])
        o = sigmoid1(gates[:, 3 * Hp:4 * Hp])
        c_new = f * c_prev + i * g
        h_new = o * jnp.tanh(c_new)
        return h_new, c_new

    def step(s, carry):
        # fwd consumes local time s; bwd consumes local time Tc-1-s
        # (its chunk is already the mirrored one, so the global sweep is
        #  strictly decreasing in time).
        row_f = pl.multiple_of(s * Bp, Bp)
        row_b = pl.multiple_of((Tc - 1 - s) * Bp, Bp)

        # Single MXU matmul covers BOTH directions (block-diagonal W_hh).
        # h_sc is bf16 already -> no cast on the critical path.
        rec = jnp.dot(h_sc[...], wh_ref[...],
                      preferred_element_type=jnp.float32)        # (Bp, 2G)

        gates_f = gx_sc[pl.ds(row_f, Bp), 0:G] + rec[:, 0:G]
        gates_b = gx_sc[pl.ds(row_b, Bp), G:2 * G] + rec[:, G:2 * G]

        h_f, c_f = lstm_cell(gates_f, c_sc[:, 0:Hp])
        h_b, c_b = lstm_cell(gates_b, c_sc[:, Hp:2 * Hp])

        h_f16 = h_f.astype(jnp.bfloat16)
        h_b16 = h_b.astype(jnp.bfloat16)
        h_sc[:, 0:Hp] = h_f16
        h_sc[:, Hp:2 * Hp] = h_b16
        c_sc[:, 0:Hp] = c_f
        c_sc[:, Hp:2 * Hp] = c_b

        # Lane-dense, 128-aligned output writes (streamed back to HBM by the
        # out BlockSpecs when the chunk advances).
        outf_ref[pl.ds(row_f, Bp), :] = h_f16
        outb_ref[pl.ds(row_b, Bp), :] = h_b16
        return carry

    jax.lax.fori_loop(0, Tc, step, 0, unroll=unroll)

    @pl.when(c_idx == pl.num_programs(0) - 1)
    def _():
        hT_ref[...] = h_sc[...].astype(jnp.float32)


# ----------------------------------------------------------------------------
# Parameter fusion / padding helpers.
# ----------------------------------------------------------------------------
def _round_up(x, m):
    return ((x + m - 1) // m) * m


def _pad_gate_cols(w, H, Hp):
    """(rows, 4H) -> (rows, 4Hp): zero-pad each gate block (i, f, g, o)."""
    if Hp == H:
        return w
    blocks = [jnp.pad(w[:, k * H:(k + 1) * H], ((0, 0), (0, Hp - H)))
              for k in range(4)]
    return jnp.concatenate(blocks, axis=1)


def fuse_bilstm_params(params, H):
    """Build fused, padded, bf16 operands for the bidirectional kernel."""
    Hp = _round_up(max(H, 128), 128)
    wih_f, whh_f, b_f = params["fwd"]    # (E, 4H), (H, 4H), (1, 4H)
    wih_b, whh_b, b_b = params["bwd"]

    wx = jnp.concatenate([_pad_gate_cols(wih_f, H, Hp),
                          _pad_gate_cols(wih_b, H, Hp)], axis=1)   # (E, 8Hp)

    def pad_whh(w):
        w = _pad_gate_cols(w, H, Hp)                               # (H, 4Hp)
        return jnp.pad(w, ((0, Hp - H), (0, 0)))                   # (Hp, 4Hp)

    wh = jnp.zeros((2 * Hp, 8 * Hp), jnp.float32)
    wh = wh.at[:Hp, :4 * Hp].set(pad_whh(whh_f))
    wh = wh.at[Hp:, 4 * Hp:].set(pad_whh(whh_b))                   # block-diag

    bias = jnp.concatenate([_pad_gate_cols(b_f, H, Hp),
                            _pad_gate_cols(b_b, H, Hp)], axis=1)   # (1, 8Hp)

    return (wx.astype(jnp.bfloat16), wh.astype(jnp.bfloat16),
            bias.astype(jnp.float32), Hp)


def _pick_time_chunk(S, target):
    """Largest divisor of S that is <= target (falls back to S)."""
    t = max(1, min(int(target), S))
    while S % t != 0:
        t -= 1
    return t


def _vmem_budget_bytes(E, Bp, Hp, Tc):
    """Resident VMEM estimate (double-buffered streams + weights + scratch)."""
    bf16, f32 = 2, 4
    weights = (E * 8 * Hp * bf16 + 2 * Hp * 8 * Hp * bf16 + 8 * Hp * f32)
    x_chunks = 2 * 2 * Tc * Bp * E * bf16            # 2 dirs x double buffer
    out_chunks = 2 * 2 * Tc * Bp * Hp * bf16
    h_t = 2 * Bp * 2 * Hp * f32
    scratch = Tc * Bp * 8 * Hp * bf16 + Bp * 2 * Hp * (bf16 + f32)
    resident = 2 * weights + x_chunks + out_chunks + h_t + scratch
    # generous headroom, but keep under v7x's 64 MiB physical VMEM.
    return min(max(int(1.5 * resident) + (4 << 20), 8 << 20), 64 << 20)


# ----------------------------------------------------------------------------
# WordRNN.forward equivalent (bidirectional LSTM on ELMo-style embeddings).
# ----------------------------------------------------------------------------
def word_rnn_forward(embeddings, params, *, hidden_size, time_chunk=32):
    """embeddings: (B, S, E) -- stand-in for elmo(...)['elmo_representations'][0]."""
    B, S, E = embeddings.shape
    H = hidden_size
    wx, wh, bias, Hp = fuse_bilstm_params(params, H)
    Bp = _round_up(B, 8)
    Tc = _pick_time_chunk(S, time_chunk)
    C = S // Tc                                       # number of time chunks

    # embeddings.permute(1, 0, 2) -> time-major, padded batch, bf16 rows.
    x = jnp.transpose(embeddings, (1, 0, 2))                 # (S, B, E)
    x = jnp.pad(x, ((0, 0), (0, Bp - B), (0, 0)))            # (S, Bp, E)
    x2 = x.reshape(S * Bp, E).astype(jnp.bfloat16)

    kernel = functools.partial(bilstm_kernel, chunk_t=Tc, batch_p=Bp,
                               hidden_p=Hp, unroll=min(4, Tc))

    cost = pl.CostEstimate(
        flops=2 * S * Bp * E * 8 * Hp + 2 * S * Bp * 2 * Hp * 8 * Hp,
        transcendentals=5 * 2 * S * Bp * Hp,
        bytes_accessed=(2 * S * Bp * E * 2                       # x read 2x
                        + (E * 8 * Hp + 2 * Hp * 8 * Hp) * 2 + 8 * Hp * 4
                        + 2 * S * Bp * Hp * 2 + Bp * 2 * Hp * 4))

    out_f2, out_b2, hT = pl.pallas_call(
        kernel,
        grid=(C,),
        out_shape=(jax.ShapeDtypeStruct((S * Bp, Hp), jnp.bfloat16),
                   jax.ShapeDtypeStruct((S * Bp, Hp), jnp.bfloat16),
                   jax.ShapeDtypeStruct((Bp, 2 * Hp), jnp.float32)),
        in_specs=[
            pl.BlockSpec((Tc * Bp, E), lambda c: (c, 0)),            # x fwd
            pl.BlockSpec((Tc * Bp, E), lambda c: (C - 1 - c, 0)),    # x bwd
            pl.BlockSpec((E, 8 * Hp), lambda c: (0, 0)),             # wx
            pl.BlockSpec((2 * Hp, 8 * Hp), lambda c: (0, 0)),        # wh
            pl.BlockSpec((1, 8 * Hp), lambda c: (0, 0)),             # bias
        ],
        out_specs=(
            pl.BlockSpec((Tc * Bp, Hp), lambda c: (c, 0)),           # out fwd
            pl.BlockSpec((Tc * Bp, Hp), lambda c: (C - 1 - c, 0)),   # out bwd
            pl.BlockSpec((Bp, 2 * Hp), lambda c: (0, 0)),            # hT
        ),
        scratch_shapes=[
            pltpu.VMEM((Tc * Bp, 8 * Hp), jnp.bfloat16),   # gx (per-chunk x-proj)
            pltpu.VMEM((Bp, 2 * Hp), jnp.bfloat16),        # h state (MXU LHS)
            pltpu.VMEM((Bp, 2 * Hp), jnp.float32),         # c state
        ],
        compiler_params=pltpu.CompilerParams(
            dimension_semantics=("arbitrary",),
            vmem_limit_bytes=_vmem_budget_bytes(E, Bp, Hp, Tc)),
        cost_estimate=cost,
    )(x2, x2, wx, wh, bias)

    out_f = out_f2.reshape(S, Bp, Hp)
    out_b = out_b2.reshape(S, Bp, Hp)

    if Hp == H and Bp == B:
        # Padding is a no-op: avoid extra slicing passes.
        output_word = jnp.concatenate([out_f, out_b], axis=-1).astype(jnp.float32)
        last_hidden = hT
    else:
        output_word = jnp.concatenate([out_f[:, :B, :H], out_b[:, :B, :H]],
                                      axis=-1).astype(jnp.float32)   # (S, B, 2H)
        last_hidden = jnp.concatenate([hT[:B, :H], hT[:B, Hp:Hp + H]],
                                      axis=1)                         # (B, 2H)
    return output_word, last_hidden


# ----------------------------------------------------------------------------
# Deterministic parameter init (PyTorch nn.LSTM shapes, uniform(-1/sqrt(H), .)).
# ----------------------------------------------------------------------------
def init_lstm_params(key, embed_size, hidden_size):
    k = 1.0 / math.sqrt(hidden_size)
    ks = jax.random.split(key, 8)

    def u(kk, shape):
        return jax.random.uniform(kk, shape, jnp.float32, minval=-k, maxval=k)

    params = {}
    for name, off in (("fwd", 0), ("bwd", 4)):
        w_ih = u(ks[off + 0], (4 * hidden_size, embed_size))   # weight_ih_l0[_reverse]
        w_hh = u(ks[off + 1], (4 * hidden_size, hidden_size))  # weight_hh_l0[_reverse]
        b_ih = u(ks[off + 2], (4 * hidden_size,))
        b_hh = u(ks[off + 3], (4 * hidden_size,))
        params[name] = (w_ih.T, w_hh.T, (b_ih + b_hh)[None, :])
    return params


# ----------------------------------------------------------------------------
# Pure-JAX reference (lax.scan LSTM, bf16 matmul operands / f32 state).
# ----------------------------------------------------------------------------
def lstm_direction_ref(x, w_ih_t, w_hh_t, b):
    H = w_hh_t.shape[0]
    B = x.shape[1]
    wih = w_ih_t.astype(jnp.bfloat16)
    whh = w_hh_t.astype(jnp.bfloat16)

    def step(carry, x_t):
        h, c = carry
        gates = (jnp.dot(x_t.astype(jnp.bfloat16), wih,
                         preferred_element_type=jnp.float32)
                 + jnp.dot(h.astype(jnp.bfloat16), whh,
                           preferred_element_type=jnp.float32)
                 + b)
        i = jax.nn.sigmoid(gates[:, :H])
        f = jax.nn.sigmoid(gates[:, H:2 * H])
        g = jnp.tanh(gates[:, 2 * H:3 * H])
        o = jax.nn.sigmoid(gates[:, 3 * H:])
        c = f * c + i * g
        h = o * jnp.tanh(c)
        return (h, c), h

    init = (jnp.zeros((B, H), jnp.float32), jnp.zeros((B, H), jnp.float32))
    (hT, _), out = jax.lax.scan(step, init, x)
    return out, hT


def word_rnn_forward_ref(embeddings, params):
    embedded = jnp.transpose(embeddings, (1, 0, 2))
    out_f, h_f = lstm_direction_ref(embedded, *params["fwd"])
    out_b_rev, h_b = lstm_direction_ref(embedded[::-1], *params["bwd"])
    out_b = out_b_rev[::-1]
    return (jnp.concatenate([out_f, out_b], axis=-1),
            jnp.concatenate([h_f, h_b], axis=1))


if __name__ == "__main__":
    # Small shapes consistent with the module's forward:
    # batch B=2, seq S=8, embed E=128 (stand-in for 1024), hidden H=32 (stand-in for 256)
    B, S, E, H = 2, 8, 128, 32

    key = jax.random.PRNGKey(0)
    k_emb, k_params = jax.random.split(key)

    # TODO(synk): ELMo embedder + batch_to_ids (pretrained external model, downloaded
    # weights) has no Pallas equivalent; synthetic ELMo-output embeddings stand in.
    # (nn.LSTM dropout=0.2 is a no-op for a single layer; ELMo dropout is inference-off.)
    embeddings = jax.random.normal(k_emb, (B, S, E), jnp.float32)

    params = init_lstm_params(k_params, E, H)

    # time_chunk=4 -> 2 streamed chunks, exercising the grid pipeline.
    fwd = jax.jit(functools.partial(word_rnn_forward, hidden_size=H,
                                    time_chunk=4))
    output_word, last_hidden = fwd(embeddings, params)
    jax.block_until_ready((output_word, last_hidden))

    # Shape checks matching the PyTorch module's return values.
    assert output_word.shape == (S, B, 2 * H), output_word.shape
    assert last_hidden.shape == (B, 2 * H), last_hidden.shape

    # Numerical check against pure-JAX LSTM reference (bf16 gx/h/out rounding
    # in the kernel -> slightly looser tolerance than pure-f32 state).
    ref_out, ref_last = word_rnn_forward_ref(embeddings, params)
    assert jnp.allclose(output_word, ref_out, atol=2e-2, rtol=2e-2)
    assert jnp.allclose(last_hidden, ref_last, atol=2e-2, rtol=2e-2)

    print("KERNEL_OK")
</pallas_src>

<mosaic_0001>
module attributes {stable_mosaic.version = 11 : i64} {
  func.func @bilstm_kernel(%arg0: i32, %arg1: memref<32x128xbf16, #tpu.memory_space<vmem>>, %arg2: memref<32x128xbf16, #tpu.memory_space<vmem>>, %arg3: memref<128x1024xbf16, #tpu.memory_space<vmem>>, %arg4: memref<256x1024xbf16, #tpu.memory_space<vmem>>, %arg5: memref<1x1024xf32, #tpu.memory_space<vmem>>, %arg6: memref<32x128xbf16, #tpu.memory_space<vmem>>, %arg7: memref<32x128xbf16, #tpu.memory_space<vmem>>, %arg8: memref<8x256xf32, #tpu.memory_space<vmem>>, %arg9: memref<32x1024xbf16, #tpu.memory_space<vmem>>, %arg10: memref<8x256xbf16, #tpu.memory_space<vmem>>, %arg11: memref<8x256xf32, #tpu.memory_space<vmem>>) attributes {dimension_semantics = [#tpu.dimension_semantics<arbitrary>], iteration_bounds = array<i64: 2>, scalar_prefetch = 0 : i64, scratch_operands = 3 : i64, tpu.core_type = #tpu.core_type<tc>, window_params = [{transform_indices = @transform_0, window_bounds = array<i64: 32, 128>}, {transform_indices = @transform_1, window_bounds = array<i64: 32, 128>}, {pipeline_mode = #tpu.pipeline_mode<synchronous>, transform_indices = @transform_2, window_bounds = array<i64: 128, 1024>}, {pipeline_mode = #tpu.pipeline_mode<synchronous>, transform_indices = @transform_3, window_bounds = array<i64: 256, 1024>}, {pipeline_mode = #tpu.pipeline_mode<synchronous>, transform_indices = @transform_4, window_bounds = array<i64: 1, 1024>}, {transform_indices = @transform_5, window_bounds = array<i64: 32, 128>}, {transform_indices = @transform_6, window_bounds = array<i64: 32, 128>}, {pipeline_mode = #tpu.pipeline_mode<synchronous>, transform_indices = @transform_7, window_bounds = array<i64: 8, 256>}]} {
    %c0_i32 = arith.constant 0 : i32
    %0 = arith.cmpi eq, %arg0, %c0_i32 : i32
    %1 = arith.extui %0 : i1 to i32
    %c0_i32_0 = arith.constant 0 : i32
    %2 = arith.cmpi ne, %1, %c0_i32_0 : i32
    scf.if %2 {
      %cst_185 = arith.constant 0.000000e+00 : bf16
      %390 = vector.broadcast %cst_185 : bf16 to vector<8x256xbf16>
      %c0_186 = arith.constant 0 : index
      %c0_187 = arith.constant 0 : index
      %391 = vector.load %arg10[%c0_186, %c0_187] : memref<8x256xbf16, #tpu.memory_space<vmem>>, vector<8x256xbf16>
      tpu.vector_store %arg10[%c0_186, %c0_187], %390 {strides = array<i32>} : memref<8x256xbf16, #tpu.memory_space<vmem>>, vector<8x256xbf16>,
      %cst_188 = arith.constant 0.000000e+00 : f32
      %392 = vector.broadcast %cst_188 : f32 to vector<8x256xf32>
      %c0_189 = arith.constant 0 : index
      %c0_190 = arith.constant 0 : index
      %393 = vector.load %arg11[%c0_189, %c0_190] : memref<8x256xf32, #tpu.memory_space<vmem>>, vector<8x256xf32>
      tpu.vector_store %arg11[%c0_189, %c0_190], %392 {strides = array<i32>} : memref<8x256xf32, #tpu.memory_space<vmem>>, vector<8x256xf32>,
    } else {
    }
    %c0 = arith.constant 0 : index
    %c0_1 = arith.constant 0 : index
    %3 = vector.load %arg1[%c0, %c0_1] : memref<32x128xbf16, #tpu.memory_space<vmem>>, vector<32x128xbf16>
    %c0_2 = arith.constant 0 : index
    %c0_3 = arith.constant 0 : index
    %4 = vector.load %arg3[%c0_2, %c0_3] : memref<128x1024xbf16, #tpu.memory_space<vmem>>, vector<128x512xbf16>
    %cst = arith.constant dense<0.000000e+00> : vector<32x512xf32>
    %5 = tpu.matmul %3, %4, %cst {dimension_numbers = #tpu.dot_dimension_numbers<[1], [0], [0], [1], [0, 0, 1, 1], [], []>} : vector<32x128xbf16>, vector<128x512xbf16>, vector<32x512xf32> -> vector<32x512xf32>
    %c0_4 = arith.constant 0 : index
    %c0_5 = arith.constant 0 : index
    %6 = vector.load %arg5[%c0_4, %c0_5] : memref<1x1024xf32, #tpu.memory_space<vmem>>, vector<1x512xf32>
    %7 = vector.broadcast %6 : vector<1x512xf32> to vector<32x512xf32>
    %8 = arith.addf %5, %7 : vector<32x512xf32>
    %c0_6 = arith.constant 0 : index
    %c0_7 = arith.constant 0 : index
    %9 = vector.load %arg2[%c0_6, %c0_7] : memref<32x128xbf16, #tpu.memory_space<vmem>>, vector<32x128xbf16>
    %c0_8 = arith.constant 0 : index
    %c512 = arith.constant 512 : index
    %10 = vector.load %arg3[%c0_8, %c512] : memref<128x1024xbf16, #tpu.memory_space<vmem>>, vector<128x512xbf16>
    %cst_9 = arith.constant dense<0.000000e+00> : vector<32x512xf32>
    %11 = tpu.matmul %9, %10, %cst_9 {dimension_numbers = #tpu.dot_dimension_numbers<[1], [0], [0], [1], [0, 0, 1, 1], [], []>} : vector<32x128xbf16>, vector<128x512xbf16>, vector<32x512xf32> -> vector<32x512xf32>
    %c0_10 = arith.constant 0 : index
    %c512_11 = arith.constant 512 : index
    %12 = vector.load %arg5[%c0_10, %c512_11] : memref<1x1024xf32, #tpu.memory_space<vmem>>, vector<1x512xf32>
    %13 = vector.broadcast %12 : vector<1x512xf32> to vector<32x512xf32>
    %14 = arith.addf %11, %13 : vector<32x512xf32>
    %15 = arith.truncf %8 : vector<32x512xf32> to vector<32x512xbf16>
    %c0_12 = arith.constant 0 : index
    %c0_13 = arith.constant 0 : index
    %16 = vector.load %arg9[%c0_12, %c0_13] : memref<32x1024xbf16, #tpu.memory_space<vmem>>, vector<32x512xbf16>
    tpu.vector_store %arg9[%c0_12, %c0_13], %15 {strides = array<i32>} : memref<32x1024xbf16, #tpu.memory_space<vmem>>, vector<32x512xbf16>,
    %17 = arith.truncf %14 : vector<32x512xf32> to vector<32x512xbf16>
    %c0_14 = arith.constant 0 : index
    %c512_15 = arith.constant 512 : index
    %18 = vector.load %arg9[%c0_14, %c512_15] : memref<32x1024xbf16, #tpu.memory_space<vmem>>, vector<32x512xbf16>
    tpu.vector_store %arg9[%c0_14, %c512_15], %17 {strides = array<i32>} : memref<32x1024xbf16, #tpu.memory_space<vmem>>, vector<32x512xbf16>,
    %c0_i32_16 = arith.constant 0 : i32
    %c8_i32 = arith.constant 8 : i32
    %19 = arith.muli %c0_i32_16, %c8_i32 : i32
    %20 = tpu.assume_multiple %19, 8 : i32
    %c3_i32 = arith.constant 3 : i32
    %21 = arith.subi %c3_i32, %c0_i32_16 : i32
    %c8_i32_17 = arith.constant 8 : i32
    %22 = arith.muli %21, %c8_i32_17 : i32
    %23 = tpu.assume_multiple %22, 8 : i32
    %c0_18 = arith.constant 0 : index
    %c0_19 = arith.constant 0 : index
    %24 = vector.load %arg10[%c0_18, %c0_19] : memref<8x256xbf16, #tpu.memory_space<vmem>>, vector<8x256xbf16>
    %c0_20 = arith.constant 0 : index
    %c0_21 = arith.constant 0 : index
    %25 = vector.load %arg4[%c0_20, %c0_21] : memref<256x1024xbf16, #tpu.memory_space<vmem>>, vector<256x1024xbf16>
    %cst_22 = arith.constant dense<0.000000e+00> : vector<8x1024xf32>
    %26 = tpu.matmul %24, %25, %cst_22 {dimension_numbers = #tpu.dot_dimension_numbers<[1], [0], [0], [1], [0, 0, 1, 1], [], []>} : vector<8x256xbf16>, vector<256x1024xbf16>, vector<8x1024xf32> -> vector<8x1024xf32>
    %27 = arith.index_cast %20 : i32 to index
    %c0_23 = arith.constant 0 : index
    %28 = vector.load %arg9[%27, %c0_23] : memref<32x1024xbf16, #tpu.memory_space<vmem>>, vector<8x512xbf16>
    %29 = vector.extract_strided_slice %26 {offsets = [0, 0], sizes = [8, 512], strides = [1, 1]} : vector<8x1024xf32> to vector<8x512xf32>
    %30 = arith.extf %28 : vector<8x512xbf16> to vector<8x512xf32>
    %31 = arith.addf %30, %29 : vector<8x512xf32>
    %32 = arith.index_cast %23 : i32 to index
    %c512_24 = arith.constant 512 : index
    %33 = vector.load %arg9[%32, %c512_24] : memref<32x1024xbf16, #tpu.memory_space<vmem>>, vector<8x512xbf16>
    %34 = vector.extract_strided_slice %26 {offsets = [0, 512], sizes = [8, 512], strides = [1, 1]} : vector<8x1024xf32> to vector<8x512xf32>
    %35 = arith.extf %33 : vector<8x512xbf16> to vector<8x512xf32>
    %36 = arith.addf %35, %34 : vector<8x512xf32>
    %c0_25 = arith.constant 0 : index
    %c0_26 = arith.constant 0 : index
    %37 = vector.load %arg11[%c0_25, %c0_26] : memref<8x256xf32, #tpu.memory_space<vmem>>, vector<8x128xf32>
    %38 = vector.extract_strided_slice %31 {offsets = [0, 0], sizes = [8, 128], strides = [1, 1]} : vector<8x512xf32> to vector<8x128xf32>
    %cst_27 = arith.constant 5.000000e-01 : f32
    %39 = vector.broadcast %cst_27 : f32 to vector<8x128xf32>
    %40 = arith.mulf %39, %38 : vector<8x128xf32>
    %41 = math.tanh %40 : vector<8x128xf32>
    %cst_28 = arith.constant 5.000000e-01 : f32
    %42 = vector.broadcast %cst_28 : f32 to vector<8x128xf32>
    %43 = arith.mulf %42, %41 : vector<8x128xf32>
    %cst_29 = arith.constant 5.000000e-01 : f32
    %44 = vector.broadcast %cst_29 : f32 to vector<8x128xf32>
    %45 = arith.addf %43, %44 : vector<8x128xf32>
    %46 = vector.extract_strided_slice %31 {offsets = [0, 128], sizes = [8, 128], strides = [1, 1]} : vector<8x512xf32> to vector<8x128xf32>
    %cst_30 = arith.constant 5.000000e-01 : f32
    %47 = vector.broadcast %cst_30 : f32 to vector<8x128xf32>
    %48 = arith.mulf %47, %46 : vector<8x128xf32>
    %49 = math.tanh %48 : vector<8x128xf32>
    %cst_31 = arith.constant 5.000000e-01 : f32
    %50 = vector.broadcast %cst_31 : f32 to vector<8x128xf32>
    %51 = arith.mulf %50, %49 : vector<8x128xf32>
    %cst_32 = arith.constant 5.000000e-01 : f32
    %52 = vector.broadcast %cst_32 : f32 to vector<8x128xf32>
    %53 = arith.addf %51, %52 : vector<8x128xf32>
    %54 = vector.extract_strided_slice %31 {offsets = [0, 256], sizes = [8, 128], strides = [1, 1]} : vector<8x512xf32> to vector<8x128xf32>
    %55 = math.tanh %54 : vector<8x128xf32>
    %56 = vector.extract_strided_slice %31 {offsets = [0, 384], sizes = [8, 128], strides = [1, 1]} : vector<8x512xf32> to vector<8x128xf32>
    %cst_33 = arith.constant 5.000000e-01 : f32
    %57 = vector.broadcast %cst_33 : f32 to vector<8x128xf32>
    %58 = arith.mulf %57, %56 : vector<8x128xf32>
    %59 = math.tanh %58 : vector<8x128xf32>
    %cst_34 = arith.constant 5.000000e-01 : f32
    %60 = vector.broadcast %cst_34 : f32 to vector<8x128xf32>
    %61 = arith.mulf %60, %59 : vector<8x128xf32>
    %cst_35 = arith.constant 5.000000e-01 : f32
    %62 = vector.broadcast %cst_35 : f32 to vector<8x128xf32>
    %63 = arith.addf %61, %62 : vector<8x128xf32>
    %64 = arith.mulf %53, %37 : vector<8x128xf32>
    %65 = arith.mulf %45, %55 : vector<8x128xf32>
    %66 = arith.addf %64, %65 : vector<8x128xf32>
    %67 = math.tanh %66 : vector<8x128xf32>
    %68 = arith.mulf %63, %67 : vector<8x128xf32>
    %c0_36 = arith.constant 0 : index
    %c128 = arith.constant 128 : index
    %69 = vector.load %arg11[%c0_36, %c128] : memref<8x256xf32, #tpu.memory_space<vmem>>, vector<8x128xf32>
    %70 = vector.extract_strided_slice %36 {offsets = [0, 0], sizes = [8, 128], strides = [1, 1]} : vector<8x512xf32> to vector<8x128xf32>
    %cst_37 = arith.constant 5.000000e-01 : f32
    %71 = vector.broadcast %cst_37 : f32 to vector<8x128xf32>
    %72 = arith.mulf %71, %70 : vector<8x128xf32>
    %73 = math.tanh %72 : vector<8x128xf32>
    %cst_38 = arith.constant 5.000000e-01 : f32
    %74 = vector.broadcast %cst_38 : f32 to vector<8x128xf32>
    %75 = arith.mulf %74, %73 : vector<8x128xf32>
    %cst_39 = arith.constant 5.000000e-01 : f32
    %76 = vector.broadcast %cst_39 : f32 to vector<8x128xf32>
    %77 = arith.addf %75, %76 : vector<8x128xf32>
    %78 = vector.extract_strided_slice %36 {offsets = [0, 128], sizes = [8, 128], strides = [1, 1]} : vector<8x512xf32> to vector<8x128xf32>
    %cst_40 = arith.constant 5.000000e-01 : f32
    %79 = vector.broadcast %cst_40 : f32 to vector<8x128xf32>
    %80 = arith.mulf %79, %78 : vector<8x128xf32>
    %81 = math.tanh %80 : vector<8x128xf32>
    %cst_41 = arith.constant 5.000000e-01 : f32
    %82 = vector.broadcast %cst_41 : f32 to vector<8x128xf32>
    %83 = arith.mulf %82, %81 : vector<8x128xf32>
    %cst_42 = arith.constant 5.000000e-01 : f32
    %84 = vector.broadcast %cst_42 : f32 to vector<8x128xf32>
    %85 = arith.addf %83, %84 : vector<8x128xf32>
    %86 = vector.extract_strided_slice %36 {offsets = [0, 256], sizes = [8, 128], strides = [1, 1]} : vector<8x512xf32> to vector<8x128xf32>
    %87 = math.tanh %86 : vector<8x128xf32>
    %88 = vector.extract_strided_slice %36 {offsets = [0, 384], sizes = [8, 128], strides = [1, 1]} : vector<8x512xf32> to vector<8x128xf32>
    %cst_43 = arith.constant 5.000000e-01 : f32
    %89 = vector.broadcast %cst_43 : f32 to vector<8x128xf32>
    %90 = arith.mulf %89, %88 : vector<8x128xf32>
    %91 = math.tanh %90 : vector<8x128xf32>
    %cst_44 = arith.constant 5.000000e-01 : f32
    %92 = vector.broadcast %cst_44 : f32 to vector<8x128xf32>
    %93 = arith.mulf %92, %91 : vector<8x128xf32>
    %cst_45 = arith.constant 5.000000e-01 : f32
    %94 = vector.broadcast %cst_45 : f32 to vector<8x128xf32>
    %95 = arith.addf %93, %94 : vector<8x128xf32>
    %96 = arith.mulf %85, %69 : vector<8x128xf32>
    %97 = arith.mulf %77, %87 : vector<8x128xf32>
    %98 = arith.addf %96, %97 : vector<8x128xf32>
    %99 = math.tanh %98 : vector<8x128xf32>
    %100 = arith.mulf %95, %99 : vector<8x128xf32>
    %101 = arith.truncf %68 : vector<8x128xf32> to vector<8x128xbf16>
    %102 = arith.truncf %100 : vector<8x128xf32> to vector<8x128xbf16>
    %c0_46 = arith.constant 0 : index
    %c0_47 = arith.constant 0 : index
    %103 = vector.load %arg10[%c0_46, %c0_47] : memref<8x256xbf16, #tpu.memory_space<vmem>>, vector<8x128xbf16>
    tpu.vector_store %arg10[%c0_46, %c0_47], %101 {strides = array<i32>} : memref<8x256xbf16, #tpu.memory_space<vmem>>, vector<8x128xbf16>,
    %c0_48 = arith.constant 0 : index
    %c128_49 = arith.constant 128 : index
    %104 = vector.load %arg10[%c0_48, %c128_49] : memref<8x256xbf16, #tpu.memory_space<vmem>>, vector<8x128xbf16>
    tpu.vector_store %arg10[%c0_48, %c128_49], %102 {strides = array<i32>} : memref<8x256xbf16, #tpu.memory_space<vmem>>, vector<8x128xbf16>,
    %c0_50 = arith.constant 0 : index
    %c0_51 = arith.constant 0 : index
    %105 = vector.load %arg11[%c0_50, %c0_51] : memref<8x256xf32, #tpu.memory_space<vmem>>, vector<8x128xf32>
    tpu.vector_store %arg11[%c0_50, %c0_51], %66 {strides = array<i32>} : memref<8x256xf32, #tpu.memory_space<vmem>>, vector<8x128xf32>,
    %c0_52 = arith.constant 0 : index
    %c128_53 = arith.constant 128 : index
    %106 = vector.load %arg11[%c0_52, %c128_53] : memref<8x256xf32, #tpu.memory_space<vmem>>, vector<8x128xf32>
    tpu.vector_store %arg11[%c0_52, %c128_53], %98 {strides = array<i32>} : memref<8x256xf32, #tpu.memory_space<vmem>>, vector<8x128xf32>,
    %107 = arith.index_cast %20 : i32 to index
    %c0_54 = arith.constant 0 : index
    %108 = vector.load %arg6[%107, %c0_54] : memref<32x128xbf16, #tpu.memory_space<vmem>>, vector<8x128xbf16>
    tpu.vector_store %arg6[%107, %c0_54], %101 {strides = array<i32>} : memref<32x128xbf16, #tpu.memory_space<vmem>>, vector<8x128xbf16>,
    %109 = arith.index_cast %23 : i32 to index
    %c0_55 = arith.constant 0 : index
    %110 = vector.load %arg7[%109, %c0_55] : memref<32x128xbf16, #tpu.memory_space<vmem>>, vector<8x128xbf16>
    tpu.vector_store %arg7[%109, %c0_55], %102 {strides = array<i32>} : memref<32x128xbf16, #tpu.memory_space<vmem>>, vector<8x128xbf16>,
    %c1_i32 = arith.constant 1 : i32
    %c8_i32_56 = arith.constant 8 : i32
    %111 = arith.muli %c1_i32, %c8_i32_56 : i32
    %112 = tpu.assume_multiple %111, 8 : i32
    %c3_i32_57 = arith.constant 3 : i32
    %113 = arith.subi %c3_i32_57, %c1_i32 : i32
    %c8_i32_58 = arith.constant 8 : i32
    %114 = arith.muli %113, %c8_i32_58 : i32
    %115 = tpu.assume_multiple %114, 8 : i32
    %c0_59 = arith.constant 0 : index
    %c0_60 = arith.constant 0 : index
    %116 = vector.load %arg10[%c0_59, %c0_60] : memref<8x256xbf16, #tpu.memory_space<vmem>>, vector<8x256xbf16>
    %c0_61 = arith.constant 0 : index
    %c0_62 = arith.constant 0 : index
    %117 = vector.load %arg4[%c0_61, %c0_62] : memref<256x1024xbf16, #tpu.memory_space<vmem>>, vector<256x1024xbf16>
    %cst_63 = arith.constant dense<0.000000e+00> : vector<8x1024xf32>
    %118 = tpu.matmul %116, %117, %cst_63 {dimension_numbers = #tpu.dot_dimension_numbers<[1], [0], [0], [1], [0, 0, 1, 1], [], []>} : vector<8x256xbf16>, vector<256x1024xbf16>, vector<8x1024xf32> -> vector<8x1024xf32>
    %119 = arith.index_cast %112 : i32 to index
    %c0_64 = arith.constant 0 : index
    %120 = vector.load %arg9[%119, %c0_64] : memref<32x1024xbf16, #tpu.memory_space<vmem>>, vector<8x512xbf16>
    %121 = vector.extract_strided_slice %118 {offsets = [0, 0], sizes = [8, 512], strides = [1, 1]} : vector<8x1024xf32> to vector<8x512xf32>
    %122 = arith.extf %120 : vector<8x512xbf16> to vector<8x512xf32>
    %123 = arith.addf %122, %121 : vector<8x512xf32>
    %124 = arith.index_cast %115 : i32 to index
    %c512_65 = arith.constant 512 : index
    %125 = vector.load %arg9[%124, %c512_65] : memref<32x1024xbf16, #tpu.memory_space<vmem>>, vector<8x512xbf16>
    %126 = vector.extract_strided_slice %118 {offsets = [0, 512], sizes = [8, 512], strides = [1, 1]} : vector<8x1024xf32> to vector<8x512xf32>
    %127 = arith.extf %125 : vector<8x512xbf16> to vector<8x512xf32>
    %128 = arith.addf %127, %126 : vector<8x512xf32>
    %c0_66 = arith.constant 0 : index
    %c0_67 = arith.constant 0 : index
    %129 = vector.load %arg11[%c0_66, %c0_67] : memref<8x256xf32, #tpu.memory_space<vmem>>, vector<8x128xf32>
    %130 = vector.extract_strided_slice %123 {offsets = [0, 0], sizes = [8, 128], strides = [1, 1]} : vector<8x512xf32> to vector<8x128xf32>
    %cst_68 = arith.constant 5.000000e-01 : f32
    %131 = vector.broadcast %cst_68 : f32 to vector<8x128xf32>
    %132 = arith.mulf %131, %130 : vector<8x128xf32>
    %133 = math.tanh %132 : vector<8x128xf32>
    %cst_69 = arith.constant 5.000000e-01 : f32
    %134 = vector.broadcast %cst_69 : f32 to vector<8x128xf32>
    %135 = arith.mulf %134, %133 : vector<8x128xf32>
    %cst_70 = arith.constant 5.000000e-01 : f32
    %136 = vector.broadcast %cst_70 : f32 to vector<8x128xf32>
    %137 = arith.addf %135, %136 : vector<8x128xf32>
    %138 = vector.extract_strided_slice %123 {offsets = [0, 128], sizes = [8, 128], strides = [1, 1]} : vector<8x512xf32> to vector<8x128xf32>
    %cst_71 = arith.constant 5.000000e-01 : f32
    %139 = vector.broadcast %cst_71 : f32 to vector<8x128xf32>
    %140 = arith.mulf %139, %138 : vector<8x128xf32>
    %141 = math.tanh %140 : vector<8x128xf32>
    %cst_72 = arith.constant 5.000000e-01 : f32
    %142 = vector.broadcast %cst_72 : f32 to vector<8x128xf32>
    %143 = arith.mulf %142, %141 : vector<8x128xf32>
    %cst_73 = arith.constant 5.000000e-01 : f32
    %144 = vector.broadcast %cst_73 : f32 to vector<8x128xf32>
    %145 = arith.addf %143, %144 : vector<8x128xf32>
    %146 = vector.extract_strided_slice %123 {offsets = [0, 256], sizes = [8, 128], strides = [1, 1]} : vector<8x512xf32> to vector<8x128xf32>
    %147 = math.tanh %146 : vector<8x128xf32>
    %148 = vector.extract_strided_slice %123 {offsets = [0, 384], sizes = [8, 128], strides = [1, 1]} : vector<8x512xf32> to vector<8x128xf32>
    %cst_74 = arith.constant 5.000000e-01 : f32
    %149 = vector.broadcast %cst_74 : f32 to vector<8x128xf32>
    %150 = arith.mulf %149, %148 : vector<8x128xf32>
    %151 = math.tanh %150 : vector<8x128xf32>
    %cst_75 = arith.constant 5.000000e-01 : f32
    %152 = vector.broadcast %cst_75 : f32 to vector<8x128xf32>
    %153 = arith.mulf %152, %151 : vector<8x128xf32>
    %cst_76 = arith.constant 5.000000e-01 : f32
    %154 = vector.broadcast %cst_76 : f32 to vector<8x128xf32>
    %155 = arith.addf %153, %154 : vector<8x128xf32>
    %156 = arith.mulf %145, %129 : vector<8x128xf32>
    %157 = arith.mulf %137, %147 : vector<8x128xf32>
    %158 = arith.addf %156, %157 : vector<8x128xf32>
    %159 = math.tanh %158 : vector<8x128xf32>
    %160 = arith.mulf %155, %159 : vector<8x128xf32>
    %c0_77 = arith.constant 0 : index
    %c128_78 = arith.constant 128 : index
    %161 = vector.load %arg11[%c0_77, %c128_78] : memref<8x256xf32, #tpu.memory_space<vmem>>, vector<8x128xf32>
    %162 = vector.extract_strided_slice %128 {offsets = [0, 0], sizes = [8, 128], strides = [1, 1]} : vector<8x512xf32> to vector<8x128xf32>
    %cst_79 = arith.constant 5.000000e-01 : f32
    %163 = vector.broadcast %cst_79 : f32 to vector<8x128xf32>
    %164 = arith.mulf %163, %162 : vector<8x128xf32>
    %165 = math.tanh %164 : vector<8x128xf32>
    %cst_80 = arith.constant 5.000000e-01 : f32
    %166 = vector.broadcast %cst_80 : f32 to vector<8x128xf32>
    %167 = arith.mulf %166, %165 : vector<8x128xf32>
    %cst_81 = arith.constant 5.000000e-01 : f32
    %168 = vector.broadcast %cst_81 : f32 to vector<8x128xf32>
    %169 = arith.addf %167, %168 : vector<8x128xf32>
    %170 = vector.extract_strided_slice %128 {offsets = [0, 128], sizes = [8, 128], strides = [1, 1]} : vector<8x512xf32> to vector<8x128xf32>
    %cst_82 = arith.constant 5.000000e-01 : f32
    %171 = vector.broadcast %cst_82 : f32 to vector<8x128xf32>
    %172 = arith.mulf %171, %170 : vector<8x128xf32>
    %173 = math.tanh %172 : vector<8x128xf32>
    %cst_83 = arith.constant 5.000000e-01 : f32
    %174 = vector.broadcast %cst_83 : f32 to vector<8x128xf32>
    %175 = arith.mulf %174, %173 : vector<8x128xf32>
    %cst_84 = arith.constant 5.000000e-01 : f32
    %176 = vector.broadcast %cst_84 : f32 to vector<8x128xf32>
    %177 = arith.addf %175, %176 : vector<8x128xf32>
    %178 = vector.extract_strided_slice %128 {offsets = [0, 256], sizes = [8, 128], strides = [1, 1]} : vector<8x512xf32> to vector<8x128xf32>
    %179 = math.tanh %178 : vector<8x128xf32>
    %180 = vector.extract_strided_slice %128 {offsets = [0, 384], sizes = [8, 128], strides = [1, 1]} : vector<8x512xf32> to vector<8x128xf32>
    %cst_85 = arith.constant 5.000000e-01 : f32
    %181 = vector.broadcast %cst_85 : f32 to vector<8x128xf32>
    %182 = arith.mulf %181, %180 : vector<8x128xf32>
    %183 = math.tanh %182 : vector<8x128xf32>
    %cst_86 = arith.constant 5.000000e-01 : f32
    %184 = vector.broadcast %cst_86 : f32 to vector<8x128xf32>
    %185 = arith.mulf %184, %183 : vector<8x128xf32>
    %cst_87 = arith.constant 5.000000e-01 : f32
    %186 = vector.broadcast %cst_87 : f32 to vector<8x128xf32>
    %187 = arith.addf %185, %186 : vector<8x128xf32>
    %188 = arith.mulf %177, %161 : vector<8x128xf32>
    %189 = arith.mulf %169, %179 : vector<8x128xf32>
    %190 = arith.addf %188, %189 : vector<8x128xf32>
    %191 = math.tanh %190 : vector<8x128xf32>
    %192 = arith.mulf %187, %191 : vector<8x128xf32>
    %193 = arith.truncf %160 : vector<8x128xf32> to vector<8x128xbf16>
    %194 = arith.truncf %192 : vector<8x128xf32> to vector<8x128xbf16>
    %c0_88 = arith.constant 0 : index
    %c0_89 = arith.constant 0 : index
    %195 = vector.load %arg10[%c0_88, %c0_89] : memref<8x256xbf16, #tpu.memory_space<vmem>>, vector<8x128xbf16>
    tpu.vector_store %arg10[%c0_88, %c0_89], %193 {strides = array<i32>} : memref<8x256xbf16, #tpu.memory_space<vmem>>, vector<8x128xbf16>,
    %c0_90 = arith.constant 0 : index
    %c128_91 = arith.constant 128 : index
    %196 = vector.load %arg10[%c0_90, %c128_91] : memref<8x256xbf16, #tpu.memory_space<vmem>>, vector<8x128xbf16>
    tpu.vector_store %arg10[%c0_90, %c128_91], %194 {strides = array<i32>} : memref<8x256xbf16, #tpu.memory_space<vmem>>, vector<8x128xbf16>,
    %c0_92 = arith.constant 0 : index
    %c0_93 = arith.constant 0 : index
    %197 = vector.load %arg11[%c0_92, %c0_93] : memref<8x256xf32, #tpu.memory_space<vmem>>, vector<8x128xf32>
    tpu.vector_store %arg11[%c0_92, %c0_93], %158 {strides = array<i32>} : memref<8x256xf32, #tpu.memory_space<vmem>>, vector<8x128xf32>,
    %c0_94 = arith.constant 0 : index
    %c128_95 = arith.constant 128 : index
    %198 = vector.load %arg11[%c0_94, %c128_95] : memref<8x256xf32, #tpu.memory_space<vmem>>, vector<8x128xf32>
    tpu.vector_store %arg11[%c0_94, %c128_95], %190 {strides = array<i32>} : memref<8x256xf32, #tpu.memory_space<vmem>>, vector<8x128xf32>,
    %199 = arith.index_cast %112 : i32 to index
    %c0_96 = arith.constant 0 : index
    %200 = vector.load %arg6[%199, %c0_96] : memref<32x128xbf16, #tpu.memory_space<vmem>>, vector<8x128xbf16>
    tpu.vector_store %arg6[%199, %c0_96], %193 {strides = array<i32>} : memref<32x128xbf16, #tpu.memory_space<vmem>>, vector<8x128xbf16>,
    %201 = arith.index_cast %115 : i32 to index
    %c0_97 = arith.constant 0 : index
    %202 = vector.load %arg7[%201, %c0_97] : memref<32x128xbf16, #tpu.memory_space<vmem>>, vector<8x128xbf16>
    tpu.vector_store %arg7[%201, %c0_97], %194 {strides = array<i32>} : memref<32x128xbf16, #tpu.memory_space<vmem>>, vector<8x128xbf16>,
    %c2_i32 = arith.constant 2 : i32
    %c8_i32_98 = arith.constant 8 : i32
    %203 = arith.muli %c2_i32, %c8_i32_98 : i32
    %204 = tpu.assume_multiple %203, 8 : i32
    %c3_i32_99 = arith.constant 3 : i32
    %205 = arith.subi %c3_i32_99, %c2_i32 : i32
    %c8_i32_100 = arith.constant 8 : i32
    %206 = arith.muli %205, %c8_i32_100 : i32
    %207 = tpu.assume_multiple %206, 8 : i32
    %c0_101 = arith.constant 0 : index
    %c0_102 = arith.constant 0 : index
    %208 = vector.load %arg10[%c0_101, %c0_102] : memref<8x256xbf16, #tpu.memory_space<vmem>>, vector<8x256xbf16>
    %c0_103 = arith.constant 0 : index
    %c0_104 = arith.constant 0 : index
    %209 = vector.load %arg4[%c0_103, %c0_104] : memref<256x1024xbf16, #tpu.memory_space<vmem>>, vector<256x1024xbf16>
    %cst_105 = arith.constant dense<0.000000e+00> : vector<8x1024xf32>
    %210 = tpu.matmul %208, %209, %cst_105 {dimension_numbers = #tpu.dot_dimension_numbers<[1], [0], [0], [1], [0, 0, 1, 1], [], []>} : vector<8x256xbf16>, vector<256x1024xbf16>, vector<8x1024xf32> -> vector<8x1024xf32>
    %211 = arith.index_cast %204 : i32 to index
    %c0_106 = arith.constant 0 : index
    %212 = vector.load %arg9[%211, %c0_106] : memref<32x1024xbf16, #tpu.memory_space<vmem>>, vector<8x512xbf16>
    %213 = vector.extract_strided_slice %210 {offsets = [0, 0], sizes = [8, 512], strides = [1, 1]} : vector<8x1024xf32> to vector<8x512xf32>
    %214 = arith.extf %212 : vector<8x512xbf16> to vector<8x512xf32>
    %215 = arith.addf %214, %213 : vector<8x512xf32>
    %216 = arith.index_cast %207 : i32 to index
    %c512_107 = arith.constant 512 : index
    %217 = vector.load %arg9[%216, %c512_107] : memref<32x1024xbf16, #tpu.memory_space<vmem>>, vector<8x512xbf16>
    %218 = vector.extract_strided_slice %210 {offsets = [0, 512], sizes = [8, 512], strides = [1, 1]} : vector<8x1024xf32> to vector<8x512xf32>
    %219 = arith.extf %217 : vector<8x512xbf16> to vector<8x512xf32>
    %220 = arith.addf %219, %218 : vector<8x512xf32>
    %c0_108 = arith.constant 0 : index
    %c0_109 = arith.constant 0 : index
    %221 = vector.load %arg11[%c0_108, %c0_109] : memref<8x256xf32, #tpu.memory_space<vmem>>, vector<8x128xf32>
    %222 = vector.extract_strided_slice %215 {offsets = [0, 0], sizes = [8, 128], strides = [1, 1]} : vector<8x512xf32> to vector<8x128xf32>
    %cst_110 = arith.constant 5.000000e-01 : f32
    %223 = vector.broadcast %cst_110 : f32 to vector<8x128xf32>
    %224 = arith.mulf %223, %222 : vector<8x128xf32>
    %225 = math.tanh %224 : vector<8x128xf32>
    %cst_111 = arith.constant 5.000000e-01 : f32
    %226 = vector.broadcast %cst_111 : f32 to vector<8x128xf32>
    %227 = arith.mulf %226, %225 : vector<8x128xf32>
    %cst_112 = arith.constant 5.000000e-01 : f32
    %228 = vector.broadcast %cst_112 : f32 to vector<8x128xf32>
    %229 = arith.addf %227, %228 : vector<8x128xf32>
    %230 = vector.extract_strided_slice %215 {offsets = [0, 128], sizes = [8, 128], strides = [1, 1]} : vector<8x512xf32> to vector<8x128xf32>
    %cst_113 = arith.constant 5.000000e-01 : f32
    %231 = vector.broadcast %cst_113 : f32 to vector<8x128xf32>
    %232 = arith.mulf %231, %230 : vector<8x128xf32>
    %233 = math.tanh %232 : vector<8x128xf32>
    %cst_114 = arith.constant 5.000000e-01 : f32
    %234 = vector.broadcast %cst_114 : f32 to vector<8x128xf32>
    %235 = arith.mulf %234, %233 : vector<8x128xf32>
    %cst_115 = arith.constant 5.000000e-01 : f32
    %236 = vector.broadcast %cst_115 : f32 to vector<8x128xf32>
    %237 = arith.addf %235, %236 : vector<8x128xf32>
    %238 = vector.extract_strided_slice %215 {offsets = [0, 256], sizes = [8, 128], strides = [1, 1]} : vector<8x512xf32> to vector<8x128xf32>
    %239 = math.tanh %238 : vector<8x128xf32>
    %240 = vector.extract_strided_slice %215 {offsets = [0, 384], sizes = [8, 128], strides = [1, 1]} : vector<8x512xf32> to vector<8x128xf32>
    %cst_116 = arith.constant 5.000000e-01 : f32
    %241 = vector.broadcast %cst_116 : f32 to vector<8x128xf32>
    %242 = arith.mulf %241, %240 : vector<8x128xf32>
    %243 = math.tanh %242 : vector<8x128xf32>
    %cst_117 = arith.constant 5.000000e-01 : f32
    %244 = vector.broadcast %cst_117 : f32 to vector<8x128xf32>
    %245 = arith.mulf %244, %243 : vector<8x128xf32>
    %cst_118 = arith.constant 5.000000e-01 : f32
    %246 = vector.broadcast %cst_118 : f32 to vector<8x128xf32>
    %247 = arith.addf %245, %246 : vector<8x128xf32>
    %248 = arith.mulf %237, %221 : vector<8x128xf32>
    %249 = arith.mulf %229, %239 : vector<8x128xf32>
    %250 = arith.addf %248, %249 : vector<8x128xf32>
    %251 = math.tanh %250 : vector<8x128xf32>
    %252 = arith.mulf %247, %251 : vector<8x128xf32>
    %c0_119 = arith.constant 0 : index
    %c128_120 = arith.constant 128 : index
    %253 = vector.load %arg11[%c0_119, %c128_120] : memref<8x256xf32, #tpu.memory_space<vmem>>, vector<8x128xf32>
    %254 = vector.extract_strided_slice %220 {offsets = [0, 0], sizes = [8, 128], strides = [1, 1]} : vector<8x512xf32> to vector<8x128xf32>
    %cst_121 = arith.constant 5.000000e-01 : f32
    %255 = vector.broadcast %cst_121 : f32 to vector<8x128xf32>
    %256 = arith.mulf %255, %254 : vector<8x128xf32>
    %257 = math.tanh %256 : vector<8x128xf32>
    %cst_122 = arith.constant 5.000000e-01 : f32
    %258 = vector.broadcast %cst_122 : f32 to vector<8x128xf32>
    %259 = arith.mulf %258, %257 : vector<8x128xf32>
    %cst_123 = arith.constant 5.000000e-01 : f32
    %260 = vector.broadcast %cst_123 : f32 to vector<8x128xf32>
    %261 = arith.addf %259, %260 : vector<8x128xf32>
    %262 = vector.extract_strided_slice %220 {offsets = [0, 128], sizes = [8, 128], strides = [1, 1]} : vector<8x512xf32> to vector<8x128xf32>
    %cst_124 = arith.constant 5.000000e-01 : f32
    %263 = vector.broadcast %cst_124 : f32 to vector<8x128xf32>
    %264 = arith.mulf %263, %262 : vector<8x128xf32>
    %265 = math.tanh %264 : vector<8x128xf32>
    %cst_125 = arith.constant 5.000000e-01 : f32
    %266 = vector.broadcast %cst_125 : f32 to vector<8x128xf32>
    %267 = arith.mulf %266, %265 : vector<8x128xf32>
    %cst_126 = arith.constant 5.000000e-01 : f32
    %268 = vector.broadcast %cst_126 : f32 to vector<8x128xf32>
    %269 = arith.addf %267, %268 : vector<8x128xf32>
    %270 = vector.extract_strided_slice %220 {offsets = [0, 256], sizes = [8, 128], strides = [1, 1]} : vector<8x512xf32> to vector<8x128xf32>
    %271 = math.tanh %270 : vector<8x128xf32>
    %272 = vector.extract_strided_slice %220 {offsets = [0, 384], sizes = [8, 128], strides = [1, 1]} : vector<8x512xf32> to vector<8x128xf32>
    %cst_127 = arith.constant 5.000000e-01 : f32
    %273 = vector.broadcast %cst_127 : f32 to vector<8x128xf32>
    %274 = arith.mulf %273, %272 : vector<8x128xf32>
    %275 = math.tanh %274 : vector<8x128xf32>
    %cst_128 = arith.constant 5.000000e-01 : f32
    %276 = vector.broadcast %cst_128 : f32 to vector<8x128xf32>
    %277 = arith.mulf %276, %275 : vector<8x128xf32>
    %cst_129 = arith.constant 5.000000e-01 : f32
    %278 = vector.broadcast %cst_129 : f32 to vector<8x128xf32>
    %279 = arith.addf %277, %278 : vector<8x128xf32>
    %280 = arith.mulf %269, %253 : vector<8x128xf32>
    %281 = arith.mulf %261, %271 : vector<8x128xf32>
    %282 = arith.addf %280, %281 : vector<8x128xf32>
    %283 = math.tanh %282 : vector<8x128xf32>
    %284 = arith.mulf %279, %283 : vector<8x128xf32>
    %285 = arith.truncf %252 : vector<8x128xf32> to vector<8x128xbf16>
    %286 = arith.truncf %284 : vector<8x128xf32> to vector<8x128xbf16>
    %c0_130 = arith.constant 0 : index
    %c0_131 = arith.constant 0 : index
    %287 = vector.load %arg10[%c0_130, %c0_131] : memref<8x256xbf16, #tpu.memory_space<vmem>>, vector<8x128xbf16>
    tpu.vector_store %arg10[%c0_130, %c0_131], %285 {strides = array<i32>} : memref<8x256xbf16, #tpu.memory_space<vmem>>, vector<8x128xbf16>,
    %c0_132 = arith.constant 0 : index
    %c128_133 = arith.constant 128 : index
    %288 = vector.load %arg10[%c0_132, %c128_133] : memref<8x256xbf16, #tpu.memory_space<vmem>>, vector<8x128xbf16>
    tpu.vector_store %arg10[%c0_132, %c128_133], %286 {strides = array<i32>} : memref<8x256xbf16, #tpu.memory_space<vmem>>, vector<8x128xbf16>,
    %c0_134 = arith.constant 0 : index
    %c0_135 = arith.constant 0 : index
    %289 = vector.load %arg11[%c0_134, %c0_135] : memref<8x256xf32, #tpu.memory_space<vmem>>, vector<8x128xf32>
    tpu.vector_store %arg11[%c0_134, %c0_135], %250 {strides = array<i32>} : memref<8x256xf32, #tpu.memory_space<vmem>>, vector<8x128xf32>,
    %c0_136 = arith.constant 0 : index
    %c128_137 = arith.constant 128 : index
    %290 = vector.load %arg11[%c0_136, %c128_137] : memref<8x256xf32, #tpu.memory_space<vmem>>, vector<8x128xf32>
    tpu.vector_store %arg11[%c0_136, %c128_137], %282 {strides = array<i32>} : memref<8x256xf32, #tpu.memory_space<vmem>>, vector<8x128xf32>,
    %291 = arith.index_cast %204 : i32 to index
    %c0_138 = arith.constant 0 : index
    %292 = vector.load %arg6[%291, %c0_138] : memref<32x128xbf16, #tpu.memory_space<vmem>>, vector<8x128xbf16>
    tpu.vector_store %arg6[%291, %c0_138], %285 {strides = array<i32>} : memref<32x128xbf16, #tpu.memory_space<vmem>>, vector<8x128xbf16>,
    %293 = arith.index_cast %207 : i32 to index
    %c0_139 = arith.constant 0 : index
    %294 = vector.load %arg7[%293, %c0_139] : memref<32x128xbf16, #tpu.memory_space<vmem>>, vector<8x128xbf16>
    tpu.vector_store %arg7[%293, %c0_139], %286 {strides = array<i32>} : memref<32x128xbf16, #tpu.memory_space<vmem>>, vector<8x128xbf16>,
    %c3_i32_140 = arith.constant 3 : i32
    %c8_i32_141 = arith.constant 8 : i32
    %295 = arith.muli %c3_i32_140, %c8_i32_141 : i32
    %296 = tpu.assume_multiple %295, 8 : i32
    %c3_i32_142 = arith.constant 3 : i32
    %297 = arith.subi %c3_i32_142, %c3_i32_140 : i32
    %c8_i32_143 = arith.constant 8 : i32
    %298 = arith.muli %297, %c8_i32_143 : i32
    %299 = tpu.assume_multiple %298, 8 : i32
    %c0_144 = arith.constant 0 : index
    %c0_145 = arith.constant 0 : index
    %300 = vector.load %arg10[%c0_144, %c0_145] : memref<8x256xbf16, #tpu.memory_space<vmem>>, vector<8x256xbf16>
    %c0_146 = arith.constant 0 : index
    %c0_147 = arith.constant 0 : index
    %301 = vector.load %arg4[%c0_146, %c0_147] : memref<256x1024xbf16, #tpu.memory_space<vmem>>, vector<256x1024xbf16>
    %cst_148 = arith.constant dense<0.000000e+00> : vector<8x1024xf32>
    %302 = tpu.matmul %300, %301, %cst_148 {dimension_numbers = #tpu.dot_dimension_numbers<[1], [0], [0], [1], [0, 0, 1, 1], [], []>} : vector<8x256xbf16>, vector<256x1024xbf16>, vector<8x1024xf32> -> vector<8x1024xf32>
    %303 = arith.index_cast %296 : i32 to index
    %c0_149 = arith.constant 0 : index
    %304 = vector.load %arg9[%303, %c0_149] : memref<32x1024xbf16, #tpu.memory_space<vmem>>, vector<8x512xbf16>
    %305 = vector.extract_strided_slice %302 {offsets = [0, 0], sizes = [8, 512], strides = [1, 1]} : vector<8x1024xf32> to vector<8x512xf32>
    %306 = arith.extf %304 : vector<8x512xbf16> to vector<8x512xf32>
    %307 = arith.addf %306, %305 : vector<8x512xf32>
    %308 = arith.index_cast %299 : i32 to index
    %c512_150 = arith.constant 512 : index
    %309 = vector.load %arg9[%308, %c512_150] : memref<32x1024xbf16, #tpu.memory_space<vmem>>, vector<8x512xbf16>
    %310 = vector.extract_strided_slice %302 {offsets = [0, 512], sizes = [8, 512], strides = [1, 1]} : vector<8x1024xf32> to vector<8x512xf32>
    %311 = arith.extf %309 : vector<8x512xbf16> to vector<8x512xf32>
    %312 = arith.addf %311, %310 : vector<8x512xf32>
    %c0_151 = arith.constant 0 : index
    %c0_152 = arith.constant 0 : index
    %313 = vector.load %arg11[%c0_151, %c0_152] : memref<8x256xf32, #tpu.memory_space<vmem>>, vector<8x128xf32>
    %314 = vector.extract_strided_slice %307 {offsets = [0, 0], sizes = [8, 128], strides = [1, 1]} : vector<8x512xf32> to vector<8x128xf32>
    %cst_153 = arith.constant 5.000000e-01 : f32
    %315 = vector.broadcast %cst_153 : f32 to vector<8x128xf32>
    %316 = arith.mulf %315, %314 : vector<8x128xf32>
    %317 = math.tanh %316 : vector<8x128xf32>
    %cst_154 = arith.constant 5.000000e-01 : f32
    %318 = vector.broadcast %cst_154 : f32 to vector<8x128xf32>
    %319 = arith.mulf %318, %317 : vector<8x128xf32>
    %cst_155 = arith.constant 5.000000e-01 : f32
    %320 = vector.broadcast %cst_155 : f32 to vector<8x128xf32>
    %321 = arith.addf %319, %320 : vector<8x128xf32>
    %322 = vector.extract_strided_slice %307 {offsets = [0, 128], sizes = [8, 128], strides = [1, 1]} : vector<8x512xf32> to vector<8x128xf32>
    %cst_156 = arith.constant 5.000000e-01 : f32
    %323 = vector.broadcast %cst_156 : f32 to vector<8x128xf32>
    %324 = arith.mulf %323, %322 : vector<8x128xf32>
    %325 = math.tanh %324 : vector<8x128xf32>
    %cst_157 = arith.constant 5.000000e-01 : f32
    %326 = vector.broadcast %cst_157 : f32 to vector<8x128xf32>
    %327 = arith.mulf %326, %325 : vector<8x128xf32>
    %cst_158 = arith.constant 5.000000e-01 : f32
    %328 = vector.broadcast %cst_158 : f32 to vector<8x128xf32>
    %329 = arith.addf %327, %328 : vector<8x128xf32>
    %330 = vector.extract_strided_slice %307 {offsets = [0, 256], sizes = [8, 128], strides = [1, 1]} : vector<8x512xf32> to vector<8x128xf32>
    %331 = math.tanh %330 : vector<8x128xf32>
    %332 = vector.extract_strided_slice %307 {offsets = [0, 384], sizes = [8, 128], strides = [1, 1]} : vector<8x512xf32> to vector<8x128xf32>
    %cst_159 = arith.constant 5.000000e-01 : f32
    %333 = vector.broadcast %cst_159 : f32 to vector<8x128xf32>
    %334 = arith.mulf %333, %332 : vector<8x128xf32>
    %335 = math.tanh %334 : vector<8x128xf32>
    %cst_160 = arith.constant 5.000000e-01 : f32
    %336 = vector.broadcast %cst_160 : f32 to vector<8x128xf32>
    %337 = arith.mulf %336, %335 : vector<8x128xf32>
    %cst_161 = arith.constant 5.000000e-01 : f32
    %338 = vector.broadcast %cst_161 : f32 to vector<8x128xf32>
    %339 = arith.addf %337, %338 : vector<8x128xf32>
    %340 = arith.mulf %329, %313 : vector<8x128xf32>
    %341 = arith.mulf %321, %331 : vector<8x128xf32>
    %342 = arith.addf %340, %341 : vector<8x128xf32>
    %343 = math.tanh %342 : vector<8x128xf32>
    %344 = arith.mulf %339, %343 : vector<8x128xf32>
    %c0_162 = arith.constant 0 : index
    %c128_163 = arith.constant 128 : index
    %345 = vector.load %arg11[%c0_162, %c128_163] : memref<8x256xf32, #tpu.memory_space<vmem>>, vector<8x128xf32>
    %346 = vector.extract_strided_slice %312 {offsets = [0, 0], sizes = [8, 128], strides = [1, 1]} : vector<8x512xf32> to vector<8x128xf32>
    %cst_164 = arith.constant 5.000000e-01 : f32
    %347 = vector.broadcast %cst_164 : f32 to vector<8x128xf32>
    %348 = arith.mulf %347, %346 : vector<8x128xf32>
    %349 = math.tanh %348 : vector<8x128xf32>
    %cst_165 = arith.constant 5.000000e-01 : f32
    %350 = vector.broadcast %cst_165 : f32 to vector<8x128xf32>
    %351 = arith.mulf %350, %349 : vector<8x128xf32>
    %cst_166 = arith.constant 5.000000e-01 : f32
    %352 = vector.broadcast %cst_166 : f32 to vector<8x128xf32>
    %353 = arith.addf %351, %352 : vector<8x128xf32>
    %354 = vector.extract_strided_slice %312 {offsets = [0, 128], sizes = [8, 128], strides = [1, 1]} : vector<8x512xf32> to vector<8x128xf32>
    %cst_167 = arith.constant 5.000000e-01 : f32
    %355 = vector.broadcast %cst_167 : f32 to vector<8x128xf32>
    %356 = arith.mulf %355, %354 : vector<8x128xf32>
    %357 = math.tanh %356 : vector<8x128xf32>
    %cst_168 = arith.constant 5.000000e-01 : f32
    %358 = vector.broadcast %cst_168 : f32 to vector<8x128xf32>
    %359 = arith.mulf %358, %357 : vector<8x128xf32>
    %cst_169 = arith.constant 5.000000e-01 : f32
    %360 = vector.broadcast %cst_169 : f32 to vector<8x128xf32>
    %361 = arith.addf %359, %360 : vector<8x128xf32>
    %362 = vector.extract_strided_slice %312 {offsets = [0, 256], sizes = [8, 128], strides = [1, 1]} : vector<8x512xf32> to vector<8x128xf32>
    %363 = math.tanh %362 : vector<8x128xf32>
    %364 = vector.extract_strided_slice %312 {offsets = [0, 384], sizes = [8, 128], strides = [1, 1]} : vector<8x512xf32> to vector<8x128xf32>
    %cst_170 = arith.constant 5.000000e-01 : f32
    %365 = vector.broadcast %cst_170 : f32 to vector<8x128xf32>
    %366 = arith.mulf %365, %364 : vector<8x128xf32>
    %367 = math.tanh %366 : vector<8x128xf32>
    %cst_171 = arith.constant 5.000000e-01 : f32
    %368 = vector.broadcast %cst_171 : f32 to vector<8x128xf32>
    %369 = arith.mulf %368, %367 : vector<8x128xf32>
    %cst_172 = arith.constant 5.000000e-01 : f32
    %370 = vector.broadcast %cst_172 : f32 to vector<8x128xf32>
    %371 = arith.addf %369, %370 : vector<8x128xf32>
    %372 = arith.mulf %361, %345 : vector<8x128xf32>
    %373 = arith.mulf %353, %363 : vector<8x128xf32>
    %374 = arith.addf %372, %373 : vector<8x128xf32>
    %375 = math.tanh %374 : vector<8x128xf32>
    %376 = arith.mulf %371, %375 : vector<8x128xf32>
    %377 = arith.truncf %344 : vector<8x128xf32> to vector<8x128xbf16>
    %378 = arith.truncf %376 : vector<8x128xf32> to vector<8x128xbf16>
    %c0_173 = arith.constant 0 : index
    %c0_174 = arith.constant 0 : index
    %379 = vector.load %arg10[%c0_173, %c0_174] : memref<8x256xbf16, #tpu.memory_space<vmem>>, vector<8x128xbf16>
    tpu.vector_store %arg10[%c0_173, %c0_174], %377 {strides = array<i32>} : memref<8x256xbf16, #tpu.memory_space<vmem>>, vector<8x128xbf16>,
    %c0_175 = arith.constant 0 : index
    %c128_176 = arith.constant 128 : index
    %380 = vector.load %arg10[%c0_175, %c128_176] : memref<8x256xbf16, #tpu.memory_space<vmem>>, vector<8x128xbf16>
    tpu.vector_store %arg10[%c0_175, %c128_176], %378 {strides = array<i32>} : memref<8x256xbf16, #tpu.memory_space<vmem>>, vector<8x128xbf16>,
    %c0_177 = arith.constant 0 : index
    %c0_178 = arith.constant 0 : index
    %381 = vector.load %arg11[%c0_177, %c0_178] : memref<8x256xf32, #tpu.memory_space<vmem>>, vector<8x128xf32>
    tpu.vector_store %arg11[%c0_177, %c0_178], %342 {strides = array<i32>} : memref<8x256xf32, #tpu.memory_space<vmem>>, vector<8x128xf32>,
    %c0_179 = arith.constant 0 : index
    %c128_180 = arith.constant 128 : index
    %382 = vector.load %arg11[%c0_179, %c128_180] : memref<8x256xf32, #tpu.memory_space<vmem>>, vector<8x128xf32>
    tpu.vector_store %arg11[%c0_179, %c128_180], %374 {strides = array<i32>} : memref<8x256xf32, #tpu.memory_space<vmem>>, vector<8x128xf32>,
    %383 = arith.index_cast %296 : i32 to index
    %c0_181 = arith.constant 0 : index
    %384 = vector.load %arg6[%383, %c0_181] : memref<32x128xbf16, #tpu.memory_space<vmem>>, vector<8x128xbf16>
    tpu.vector_store %arg6[%383, %c0_181], %377 {strides = array<i32>} : memref<32x128xbf16, #tpu.memory_space<vmem>>, vector<8x128xbf16>,
    %385 = arith.index_cast %299 : i32 to index
    %c0_182 = arith.constant 0 : index
    %386 = vector.load %arg7[%385, %c0_182] : memref<32x128xbf16, #tpu.memory_space<vmem>>, vector<8x128xbf16>
    tpu.vector_store %arg7[%385, %c0_182], %378 {strides = array<i32>} : memref<32x128xbf16, #tpu.memory_space<vmem>>, vector<8x128xbf16>,
    %c4_i32 = arith.constant 4 : i32
    %c1_i32_183 = arith.constant 1 : i32
    %387 = arith.cmpi eq, %arg0, %c1_i32_183 : i32
    %388 = arith.extui %387 : i1 to i32
    %c0_i32_184 = arith.constant 0 : i32
    %389 = arith.cmpi ne, %388, %c0_i32_184 : i32
    scf.if %389 {
      %c0_185 = arith.constant 0 : index
      %c0_186 = arith.constant 0 : index
      %390 = vector.load %arg10[%c0_185, %c0_186] : memref<8x256xbf16, #tpu.memory_space<vmem>>, vector<8x256xbf16>
      %391 = arith.extf %390 : vector<8x256xbf16> to vector<8x256xf32>
      %c0_187 = arith.constant 0 : index
      %c0_188 = arith.constant 0 : index
      %392 = vector.load %arg8[%c0_187, %c0_188] : memref<8x256xf32, #tpu.memory_space<vmem>>, vector<8x256xf32>
      tpu.vector_store %arg8[%c0_187, %c0_188], %391 {strides = array<i32>} : memref<8x256xf32, #tpu.memory_space<vmem>>, vector<8x256xf32>,
    } else {
    }
    return
  }
  func.func @transform_0(%arg0: i32) -> (i32, i32) {
    %c0_i32 = arith.constant 0 : i32
    %c0_i32_0 = arith.constant 0 : i32
    return %arg0, %c0_i32 : i32, i32
  }
  func.func @transform_1(%arg0: i32) -> (i32, i32) {
    %c1_i32 = arith.constant 1 : i32
    %0 = arith.subi %c1_i32, %arg0 : i32
    %c0_i32 = arith.constant 0 : i32
    %c0_i32_0 = arith.constant 0 : i32
    return %0, %c0_i32 : i32, i32
  }
  func.func @transform_2(%arg0: i32) -> (i32, i32) {
    %c0_i32 = arith.constant 0 : i32
    %c0_i32_0 = arith.constant 0 : i32
    %c0_i32_1 = arith.constant 0 : i32
    return %c0_i32, %c0_i32_0 : i32, i32
  }
  func.func @transform_3(%arg0: i32) -> (i32, i32) {
    %c0_i32 = arith.constant 0 : i32
    %c0_i32_0 = arith.constant 0 : i32
    %c0_i32_1 = arith.constant 0 : i32
    return %c0_i32, %c0_i32_0 : i32, i32
  }
  func.func @transform_4(%arg0: i32) -> (i32, i32) {
    %c0_i32 = arith.constant 0 : i32
    %c0_i32_0 = arith.constant 0 : i32
    %c0_i32_1 = arith.constant 0 : i32
    return %c0_i32, %c0_i32_0 : i32, i32
  }
  func.func @transform_5(%arg0: i32) -> (i32, i32) {
    %c0_i32 = arith.constant 0 : i32
    %c0_i32_0 = arith.constant 0 : i32
    return %arg0, %c0_i32 : i32, i32
  }
  func.func @transform_6(%arg0: i32) -> (i32, i32) {
    %c1_i32 = arith.constant 1 : i32
    %0 = arith.subi %c1_i32, %arg0 : i32
    %c0_i32 = arith.constant 0 : i32
    %c0_i32_0 = arith.constant 0 : i32
    return %0, %c0_i32 : i32, i32
  }
  func.func @transform_7(%arg0: i32) -> (i32, i32) {
    %c0_i32 = arith.constant 0 : i32
    %c0_i32_0 = arith.constant 0 : i32
    %c0_i32_1 = arith.constant 0 : i32
    return %c0_i32, %c0_i32_0 : i32, i32
  }
}

</mosaic_0001>

<llo_original>
// kernel: word_rnn_forward.1
$region0: #{word_rnn_forward.1}
  #allocation0 [shape = 'u32[]', space=smem, size = 0x4, offset = 0x4, fixed_abs, tag = 'smem constant byte address 0x4 - core index']
  #allocation1 [shape = 'u32[144,128]{1,0:T(1,128)}', space=vmem, size = 0x12000, scoped, tag = 'internal scratch']
  #allocation2 [shape = 'bf16[32,1024]{1,0:T(8,128)(2,1)}', space=vmem, size = 0x10000, scoped, tag = 'scratch operand']
  #allocation3 [shape = 'bf16[8,256]{1,0:T(8,128)(2,1)}', space=vmem, size = 0x1000, scoped, tag = 'scratch operand']
  #allocation4 [shape = 'f32[8,256]{1,0:T(8,128)}', space=vmem, size = 0x2000, scoped, tag = 'scratch operand']
  %s0 = inlined_call_operand.vmem [shape: bf16[64,128], index: 0, kind: input, shape index: {}, may-alias: {0,1}]
  %s1 = inlined_call_operand.vmem [shape: bf16[64,128], index: 1, kind: input, shape index: {}, may-alias: {0,1}]
  %s2 = inlined_call_operand.vmem [shape: bf16[128,1024], index: 2, kind: input, shape index: {}]
  %s3 = inlined_call_operand.vmem [shape: bf16[256,1024], index: 3, kind: input, shape index: {}]
  %s4 = inlined_call_operand.vmem [shape: f32[1,1024], index: 4, kind: input, shape index: {}]
  %s5 = inlined_call_operand.vmem [shape: bf16[64,128], index: 5, kind: output, shape index: {0}]
  %s6 = inlined_call_operand.vmem [shape: bf16[64,128], index: 6, kind: output, shape index: {1}]
  %s7 = inlined_call_operand.vmem [shape: f32[8,256], index: 7, kind: output, shape index: {2}]
  %8 = xla_tuple %s5, %s6, %s7
  %s9 = sld [smem:[#allocation0]]
  $region77: #{word_rnn_forward.1} parent=0
    _
  %s11 = ssub.s32 1, %s9
  %s12 = scalar_select 0, %s11, %s9
  loop: start=0, step=1, limit=4
  $region2: #{word_rnn_forward.1} parent=0 // loop_pre_header
    _
  $region3: #{word_rnn_forward.1} parent=0 // loop_header
    %s14 = sphi 0, %s18
    %p15 = scmp.ge.s32.totalorder %s14, 4
    %s24 = sphi 0, %s26
    %s27 = sphi 0, %s24
    %s28 = sphi 0, %s27
    %s44 = sphi 0, %s28
    %s52 = sphi 0, %s54
    %s55 = sphi 0, %s52
    %s56 = sphi 0, %s55
    %s72 = sphi 0, %s56
    %s76 = sphi 0, %s76
    %s78 = sphi 0, %s76
    %s79 = sphi 0, %s78
    %s93 = sphi 0, %s79
    %s97 = sphi 0, %s97
    %s99 = sphi 0, %s97
    %s100 = sphi 0, %s99
    %s114 = sphi 0, %s100
    %s118 = sphi 0, %s118
    %s120 = sphi 0, %s118
    %s121 = sphi 0, %s120
    %s135 = sphi 0, %s121
    %s141 = sphi 0, %s143
    %s144 = sphi 0, %s141
    %s145 = sphi 0, %s144
    %s161 = sphi 0, %s145
    %s169 = sphi 0, %s171
    %s172 = sphi 0, %s169
    %s173 = sphi 0, %s172
    %s189 = sphi 0, %s173
    %s193 = sphi 0, %s193
    %s195 = sphi 0, %s193
    %s196 = sphi 0, %s195
    %s210 = sphi 0, %s196
  $region4: #{word_rnn_forward.1} parent=0 // loop_header_branch
    %17 = sbr.rel (%p15) target = $region8
  $region5: #{word_rnn_forward.1} parent=0 // loop_body
    %s19 = ssub.s32 %s14, 1
    %s20 = ssub.s32 %s14, 2
    %s21 = sadd.s32 %s14, 1
    %s22 = ssub.s32 %s14, %s21
    %p23 = scmp.eq.s32.totalorder %s22, 0
    %s25 = sadd.s32 %s24, 1
    %s26 = scalar_select %p23, %s24, %s25
    %p29 = pneg %p23
    %p30 = scmp.eq.s32.totalorder %s14, 1
    %p31 = por %p29, %p30
    %p32 = scmp.ne.s32.totalorder %s24, %s27
    %p33 = scmp.eq.s32.totalorder %s14, 0
    %p34 = por %p32, %p33
    %p35 = scmp.ne.s32.totalorder %s24, %s27
    %p36 = scmp.eq.s32.totalorder %s19, 1
    %p37 = por %p35, %p36
    %p38 = scmp.ne.s32.totalorder %s27, %s28
    %p39 = scmp.eq.s32.totalorder %s19, 0
    %p40 = por %p38, %p39
    %p41 = scmp.ne.s32.totalorder %s27, %s28
    %p42 = scmp.eq.s32.totalorder %s20, 1
    %p43 = por %p41, %p42
    %p45 = scmp.ne.s32.totalorder %s28, %s44
    %p46 = scmp.eq.s32.totalorder %s20, 0
    %p47 = por %p45, %p46
    %s48 = ssub.s32 1, %s14
    %s49 = ssub.s32 1, %s21
    %s50 = ssub.s32 %s48, %s49
    %p51 = scmp.eq.s32.totalorder %s50, 0
    %s53 = sadd.s32 %s52, 1
    %s54 = scalar_select %p51, %s52, %s53
    %p57 = pneg %p51
    %p58 = scmp.eq.s32.totalorder %s14, 1
    %p59 = por %p57, %p58
    %p60 = scmp.ne.s32.totalorder %s52, %s55
    %p61 = scmp.eq.s32.totalorder %s14, 0
    %p62 = por %p60, %p61
    %p63 = scmp.ne.s32.totalorder %s52, %s55
    %p64 = scmp.eq.s32.totalorder %s19, 1
    %p65 = por %p63, %p64
    %p66 = scmp.ne.s32.totalorder %s55, %s56
    %p67 = scmp.eq.s32.totalorder %s19, 0
    %p68 = por %p66, %p67
    %p69 = scmp.ne.s32.totalorder %s55, %s56
    %p70 = scmp.eq.s32.totalorder %s20, 1
    %p71 = por %p69, %p70
    %p73 = scmp.ne.s32.totalorder %s56, %s72
    %p74 = scmp.eq.s32.totalorder %s20, 0
    %p75 = por %p73, %p74
    %s77 = sadd.s32 %s76, 1
    %p80 = scmp.eq.s32.totalorder %s14, 1
    %p81 = scmp.ne.s32.totalorder %s76, %s78
    %p82 = scmp.eq.s32.totalorder %s14, 0
    %p83 = por %p81, %p82
    %p84 = scmp.ne.s32.totalorder %s76, %s78
    %p85 = scmp.eq.s32.totalorder %s19, 1
    %p86 = por %p84, %p85
    %p87 = scmp.ne.s32.totalorder %s78, %s79
    %p88 = scmp.eq.s32.totalorder %s19, 0
    %p89 = por %p87, %p88
    %p90 = scmp.ne.s32.totalorder %s78, %s79
    %p91 = scmp.eq.s32.totalorder %s20, 1
    %p92 = por %p90, %p91
    %p94 = scmp.ne.s32.totalorder %s79, %s93
    %p95 = scmp.eq.s32.totalorder %s20, 0
    %p96 = por %p94, %p95
    %s98 = sadd.s32 %s97, 1
    %p101 = scmp.eq.s32.totalorder %s14, 1
    %p102 = scmp.ne.s32.totalorder %s97, %s99
    %p103 = scmp.eq.s32.totalorder %s14, 0
    %p104 = por %p102, %p103
    %p105 = scmp.ne.s32.totalorder %s97, %s99
    %p106 = scmp.eq.s32.totalorder %s19, 1
    %p107 = por %p105, %p106
    %p108 = scmp.ne.s32.totalorder %s99, %s100
    %p109 = scmp.eq.s32.totalorder %s19, 0
    %p110 = por %p108, %p109
    %p111 = scmp.ne.s32.totalorder %s99, %s100
    %p112 = scmp.eq.s32.totalorder %s20, 1
    %p113 = por %p111, %p112
    %p115 = scmp.ne.s32.totalorder %s100, %s114
    %p116 = scmp.eq.s32.totalorder %s20, 0
    %p117 = por %p115, %p116
    %s119 = sadd.s32 %s118, 1
    %p122 = scmp.eq.s32.totalorder %s14, 1
    %p123 = scmp.ne.s32.totalorder %s118, %s120
    %p124 = scmp.eq.s32.totalorder %s14, 0
    %p125 = por %p123, %p124
    %p126 = scmp.ne.s32.totalorder %s118, %s120
    %p127 = scmp.eq.s32.totalorder %s19, 1
    %p128 = por %p126, %p127
    %p129 = scmp.ne.s32.totalorder %s120, %s121
    %p130 = scmp.eq.s32.totalorder %s19, 0
    %p131 = por %p129, %p130
    %p132 = scmp.ne.s32.totalorder %s120, %s121
    %p133 = scmp.eq.s32.totalorder %s20, 1
    %p134 = por %p132, %p133
    %p136 = scmp.ne.s32.totalorder %s121, %s135
    %p137 = scmp.eq.s32.totalorder %s20, 0
    %p138 = por %p136, %p137
    %s139 = ssub.s32 %s14, %s21
    %p140 = scmp.eq.s32.totalorder %s139, 0
    %s142 = sadd.s32 %s141, 1
    %s143 = scalar_select %p140, %s141, %s142
    %p146 = pneg %p140
    %p147 = scmp.eq.s32.totalorder %s14, 1
    %p148 = por %p146, %p147
    %p149 = scmp.ne.s32.totalorder %s141, %s144
    %p150 = scmp.eq.s32.totalorder %s14, 0
    %p151 = por %p149, %p150
    %p152 = scmp.ne.s32.totalorder %s141, %s144
    %p153 = scmp.eq.s32.totalorder %s19, 1
    %p154 = por %p152, %p153
    %p155 = scmp.ne.s32.totalorder %s144, %s145
    %p156 = scmp.eq.s32.totalorder %s19, 0
    %p157 = por %p155, %p156
    %p158 = scmp.ne.s32.totalorder %s144, %s145
    %p159 = scmp.eq.s32.totalorder %s20, 1
    %p160 = por %p158, %p159
    %p162 = scmp.ne.s32.totalorder %s145, %s161
    %p163 = scmp.eq.s32.totalorder %s20, 0
    %p164 = por %p162, %p163
    %s165 = ssub.s32 1, %s14
    %s166 = ssub.s32 1, %s21
    %s167 = ssub.s32 %s165, %s166
    %p168 = scmp.eq.s32.totalorder %s167, 0
    %s170 = sadd.s32 %s169, 1
    %s171 = scalar_select %p168, %s169, %s170
    %p174 = pneg %p168
    %p175 = scmp.eq.s32.totalorder %s14, 1
    %p176 = por %p174, %p175
    %p177 = scmp.ne.s32.totalorder %s169, %s172
    %p178 = scmp.eq.s32.totalorder %s14, 0
    %p179 = por %p177, %p178
    %p180 = scmp.ne.s32.totalorder %s169, %s172
    %p181 = scmp.eq.s32.totalorder %s19, 1
    %p182 = por %p180, %p181
    %p183 = scmp.ne.s32.totalorder %s172, %s173
    %p184 = scmp.eq.s32.totalorder %s19, 0
    %p185 = por %p183, %p184
    %p186 = scmp.ne.s32.totalorder %s172, %s173
    %p187 = scmp.eq.s32.totalorder %s20, 1
    %p188 = por %p186, %p187
    %p190 = scmp.ne.s32.totalorder %s173, %s189
    %p191 = scmp.eq.s32.totalorder %s20, 0
    %p192 = por %p190, %p191
    %s194 = sadd.s32 %s193, 1
    %p197 = scmp.eq.s32.totalorder %s14, 1
    %p198 = scmp.ne.s32.totalorder %s193, %s195
    %p199 = scmp.eq.s32.totalorder %s14, 0
    %p200 = por %p198, %p199
    %p201 = scmp.ne.s32.totalorder %s193, %s195
    %p202 = scmp.eq.s32.totalorder %s19, 1
    %p203 = por %p201, %p202
    %p204 = scmp.ne.s32.totalorder %s195, %s196
    %p205 = scmp.eq.s32.totalorder %s19, 0
    %p206 = por %p204, %p205
    %p207 = scmp.ne.s32.totalorder %s195, %s196
    %p208 = scmp.eq.s32.totalorder %s20, 1
    %p209 = por %p207, %p208
    %p211 = scmp.ne.s32.totalorder %s196, %s210
    %p212 = scmp.eq.s32.totalorder %s20, 0
    %p213 = por %p211, %p212
    %p214 = scmp.le.s32.totalorder 1, %s14
    %p215 = scmp.lt.s32.totalorder %s14, 3
    %p216 = pnand %p214, %p215
    %p217 = pneg %p216
    // Predicated region
    $region9: #{word_rnn_forward.1} parent=5 // pred_check
      _
    $region10: #{word_rnn_forward.1} parent=5 // pred_check_branch
      %219 = sbr.rel (%p216) target = $region12
    $region11: #{word_rnn_forward.1} parent=5 // pred_region
      %s220 = ssub.s32 %s14, 1
      // Predicated region
      $region13: #{word_rnn_forward.1} parent=11 // pred_check
        %p221 = pneg %p89
      $region14: #{word_rnn_forward.1} parent=11 // pred_check_branch
        %223 = sbr.rel (%p221) target = $region16
      $region15: #{word_rnn_forward.1} parent=11 // pred_region
        _
      $region16: #{word_rnn_forward.1} parent=11 // pred_fallthru
        _
      // Predicated region
      $region17: #{word_rnn_forward.1} parent=11 // pred_check
        %p224 = pneg %p110
      $region18: #{word_rnn_forward.1} parent=11 // pred_check_branch
        %226 = sbr.rel (%p224) target = $region20
      $region19: #{word_rnn_forward.1} parent=11 // pred_region
        _
      $region20: #{word_rnn_forward.1} parent=11 // pred_fallthru
        _
      // Predicated region
      $region21: #{word_rnn_forward.1} parent=11 // pred_check
        %p227 = pneg %p131
      $region22: #{word_rnn_forward.1} parent=11 // pred_check_branch
        %229 = sbr.rel (%p227) target = $region24
      $region23: #{word_rnn_forward.1} parent=11 // pred_region
        _
      $region24: #{word_rnn_forward.1} parent=11 // pred_fallthru
        _
    $region12: #{word_rnn_forward.1} parent=5 // pred_fallthru
      _
    %p230 = scmp.lt.s32.totalorder %s14, 2
    // Predicated region
    $region25: #{word_rnn_forward.1} parent=5 // pred_check
      %p231 = pneg %p230
    $region26: #{word_rnn_forward.1} parent=5 // pred_check_branch
      %233 = sbr.rel (%p231) target = $region28
    $region27: #{word_rnn_forward.1} parent=5 // pred_region
      // Predicated region
      $region29: #{word_rnn_forward.1} parent=27 // pred_check
        %p234 = pneg %p34
      $region30: #{word_rnn_forward.1} parent=27 // pred_check_branch
        %236 = sbr.rel (%p234) target = $region32
      $region31: #{word_rnn_forward.1} parent=27 // pred_region
        %s237 = smul.u32 4, %s14
        %p238 = scmp.lt.s32.totalorder %s237, 7
        %s239 = scalar_select %p238, %s237, 7
        %s240 = smul.addr %s239, 4
        %s241 = scalar_lea.vmem %s0, %s240
        %s242 = smul.u32 4, %s14
      $region32: #{word_rnn_forward.1} parent=27 // pred_fallthru
        _
      // Predicated region
      $region33: #{word_rnn_forward.1} parent=27 // pred_check
        %p243 = pneg %p62
      $region34: #{word_rnn_forward.1} parent=27 // pred_check_branch
        %245 = sbr.rel (%p243) target = $region36
      $region35: #{word_rnn_forward.1} parent=27 // pred_region
        %s246 = ssub.s32 1, %s14
        %s247 = smul.u32 4, %s246
        %p248 = scmp.lt.s32.totalorder %s247, 7
        %s249 = scalar_select %p248, %s247, 7
        %s250 = smul.addr %s249, 4
        %s251 = scalar_lea.vmem %s1, %s250
        %s252 = ssub.s32 1, %s14
        %s253 = smul.u32 4, %s252
      $region36: #{word_rnn_forward.1} parent=27 // pred_fallthru
        _
    $region28: #{word_rnn_forward.1} parent=5 // pred_fallthru
      _
    %p254 = scmp.le.s32.totalorder 1, %s14
    %p255 = scmp.lt.s32.totalorder %s14, 3
    %p256 = pnand %p254, %p255
    %p257 = pneg %p256
    // Predicated region
    $region37: #{word_rnn_forward.1} parent=5 // pred_check
      _
    $region38: #{word_rnn_forward.1} parent=5 // pred_check_branch
      %259 = sbr.rel (%p256) target = $region40
    $region39: #{word_rnn_forward.1} parent=5 // pred_region
      %s260 = ssub.s32 %s14, 1
      %s261 = smul.u32 4, %s19
      %p262 = scmp.lt.s32.totalorder %s261, 7
      %s263 = scalar_select %p262, %s261, 7
      %s264 = smul.addr %s263, 4
      %s265 = scalar_lea.vmem %s0, %s264
      %p266 = pneg %p40
      %p267 = pneg %p37
      %s268 = ssub.s32 1, %s19
      %s269 = smul.u32 4, %s268
      %p270 = scmp.lt.s32.totalorder %s269, 7
      %s271 = scalar_select %p270, %s269, 7
      %s272 = smul.addr %s271, 4
      %s273 = scalar_lea.vmem %s1, %s272
      %p274 = pneg %p68
      %p275 = pneg %p65
      %p276 = pneg %p89
      %p277 = pneg %p86
      %p278 = pneg %p110
      %p279 = pneg %p107
      %p280 = pneg %p131
      %p281 = pneg %p128
      %p282 = pneg %p157
      %p283 = pneg %p154
      %s284 = smul.u32 4, %s19
      %p285 = scmp.lt.s32.totalorder %s284, 7
      %s286 = scalar_select %p285, %s284, 7
      %s287 = smul.addr %s286, 4
      %s288 = scalar_lea.vmem %s5, %s287
      %p289 = pneg %p185
      %p290 = pneg %p182
      %s291 = ssub.s32 1, %s19
      %s292 = smul.u32 4, %s291
      %p293 = scmp.lt.s32.totalorder %s292, 7
      %s294 = scalar_select %p293, %s292, 7
      %s295 = smul.addr %s294, 4
      %s296 = scalar_lea.vmem %s6, %s295
      %p297 = pneg %p206
      %p298 = pneg %p203
      %s299 = smul.u32 4, %s19
      %p300 = scmp.lt.s32.totalorder %s299, 7
      %s301 = scalar_select %p300, %s299, 7
      %s302 = smul.addr %s301, 4
      %s303 = scalar_lea.vmem %s0, %s302
      %s304 = smul.u32 4, %s19
      %s305 = ssub.s32 1, %s19
      %s306 = smul.u32 4, %s305
      %p307 = scmp.lt.s32.totalorder %s306, 7
      %s308 = scalar_select %p307, %s306, 7
      %s309 = smul.addr %s308, 4
      %s310 = scalar_lea.vmem %s1, %s309
      %s311 = ssub.s32 1, %s19
      %s312 = smul.u32 4, %s311
      %s313 = smul.u32 4, %s19
      %p314 = scmp.lt.s32.totalorder %s313, 7
      %s315 = scalar_select %p314, %s313, 7
      %s316 = smul.addr %s315, 4
      %s317 = scalar_lea.vmem %s5, %s316
      %s318 = smul.u32 4, %s19
      %s319 = ssub.s32 1, %s19
      %s320 = smul.u32 4, %s319
      %p321 = scmp.lt.s32.totalorder %s320, 7
      %s322 = scalar_select %p321, %s320, 7
      %s323 = smul.addr %s322, 4
      %s324 = scalar_lea.vmem %s6, %s323
      %s325 = ssub.s32 1, %s19
      %s326 = smul.u32 4, %s325
      %p328 = scmp.eq.s32.totalorder %s19, 0
      // Predicated region
      $region41: #{word_rnn_forward.1} parent=39 // pred_check
        %p329 = pneg %p328
      $region42: #{word_rnn_forward.1} parent=39 // pred_check_branch
        %331 = sbr.rel (%p329) target = $region44
      $region43: #{word_rnn_forward.1} parent=39 // pred_region
        %332 = vst [vmem:[#allocation3] sm:$0xff] 0
        %333 = vst [vmem:[#allocation4] sm:$0xff] 0.0
        %334 = vst [vmem:[#allocation4 + $0x8] sm:$0xff] 0.0
      $region44: #{word_rnn_forward.1} parent=39 // pred_fallthru
        _
      %v335 = vld [vmem:[%s303] sm:$0xf]
      %v336 = vld [vmem:[%s303 + $0x4] sm:$0xf]
      %v337 = vld [vmem:[%s303 + $0x8] sm:$0xf]
      %v338 = vld [vmem:[%s303 + $0xc] sm:$0xf]
      %v339 = vld [vmem:[%s2] sm:$0xff]
      %v340 = vld [vmem:[%s2 + $0x8] sm:$0xff]
      %v341 = vld [vmem:[%s2 + $0x20] sm:$0xff]
      %v342 = vld [vmem:[%s2 + $0x28] sm:$0xff]
      %v343 = vld [vmem:[%s2 + $0x40] sm:$0xff]
      %v344 = vld [vmem:[%s2 + $0x48] sm:$0xff]
      %v345 = vld [vmem:[%s2 + $0x60] sm:$0xff]
      %v346 = vld [vmem:[%s2 + $0x68] sm:$0xff]
      %v347 = vld [vmem:[%s2 + $0x80] sm:$0xff]
      %v348 = vld [vmem:[%s2 + $0x88] sm:$0xff]
      %v349 = vld [vmem:[%s2 + $0xa0] sm:$0xff]
      %v350 = vld [vmem:[%s2 + $0xa8] sm:$0xff]
      %v351 = vld [vmem:[%s2 + $0xc0] sm:$0xff]
      %v352 = vld [vmem:[%s2 + $0xc8] sm:$0xff]
      %v353 = vld [vmem:[%s2 + $0xe0] sm:$0xff]
      %v354 = vld [vmem:[%s2 + $0xe8] sm:$0xff]
      %v355 = vld [vmem:[%s2 + $0x100] sm:$0xff]
      %v356 = vld [vmem:[%s2 + $0x108] sm:$0xff]
      %v357 = vld [vmem:[%s2 + $0x120] sm:$0xff]
      %v358 = vld [vmem:[%s2 + $0x128] sm:$0xff]
      %v359 = vld [vmem:[%s2 + $0x140] sm:$0xff]
      %v360 = vld [vmem:[%s2 + $0x148] sm:$0xff]
      %v361 = vld [vmem:[%s2 + $0x160] sm:$0xff]
      %v362 = vld [vmem:[%s2 + $0x168] sm:$0xff]
      %v363 = vld [vmem:[%s2 + $0x180] sm:$0xff]
      %v364 = vld [vmem:[%s2 + $0x188] sm:$0xff]
      %v365 = vld [vmem:[%s2 + $0x1a0] sm:$0xff]
      %v366 = vld [vmem:[%s2 + $0x1a8] sm:$0xff]
      %v367 = vld [vmem:[%s2 + $0x1c0] sm:$0xff]
      %v368 = vld [vmem:[%s2 + $0x1c8] sm:$0xff]
      %v369 = vld [vmem:[%s2 + $0x1e0] sm:$0xff]
      %v370 = vld [vmem:[%s2 + $0x1e8] sm:$0xff]
      %v371 = vld [vmem:[%s4] sm:$0xf]
      %v373 = vlaneseq
      %v374 = vshrl.u32 %v373, 7
      %v375 = vsub.s32 0, %v374
      %v376 = vrot.slane %v371, %v375
      %v377 = vlaneseq
      %v378 = vshrl.u32 %v377, 7
      %v379 = vsub.s32 1, %v378
      %v380 = vrot.slane %v371, %v379
      %v381 = vlaneseq
      %v382 = vshrl.u32 %v381, 7
      %v383 = vsub.s32 2, %v382
      %v384 = vrot.slane %v371, %v383
      %v385 = vlaneseq
      %v386 = vshrl.u32 %v385, 7
      %v387 = vsub.s32 3, %v386
      %v388 = vrot.slane %v371, %v387
      %v397 = vunpack.c.l.b16 %v335
      %v398 = vunpack.c.l.b16 %v336
      %v399 = vunpack.c.l.b16 %v337
      %v400 = vunpack.c.l.b16 %v338
      %v401 = vpack.c.b16 %v398, %v397
      %v402 = vpack.c.b16 %v400, %v399
      %v437 = vunpack.c.l.b16 %v339
      %v438 = vunpack.c.h.b16 %v339
      %v439 = vunpack.c.l.b16 %v340
      %v440 = vunpack.c.h.b16 %v340
      %v441 = vunpack.c.l.b16 %v341
      %v442 = vunpack.c.h.b16 %v341
      %v443 = vunpack.c.l.b16 %v342
      %v444 = vunpack.c.h.b16 %v342
      %v445 = vunpack.c.l.b16 %v343
      %v446 = vunpack.c.h.b16 %v343
      %v447 = vunpack.c.l.b16 %v344
      %v448 = vunpack.c.h.b16 %v344
      %v449 = vunpack.c.l.b16 %v345
      %v450 = vunpack.c.h.b16 %v345
      %v451 = vunpack.c.l.b16 %v346
      %v452 = vunpack.c.h.b16 %v346
      %v453 = vunpack.c.l.b16 %v347
      %v454 = vunpack.c.h.b16 %v347
      %v455 = vunpack.c.l.b16 %v348
      %v456 = vunpack.c.h.b16 %v348
      %v457 = vunpack.c.l.b16 %v349
      %v458 = vunpack.c.h.b16 %v349
      %v459 = vunpack.c.l.b16 %v350
      %v460 = vunpack.c.h.b16 %v350
      %v461 = vunpack.c.l.b16 %v351
      %v462 = vunpack.c.h.b16 %v351
      %v463 = vunpack.c.l.b16 %v352
      %v464 = vunpack.c.h.b16 %v352
      %v465 = vunpack.c.l.b16 %v353
      %v466 = vunpack.c.h.b16 %v353
      %v467 = vunpack.c.l.b16 %v354
      %v468 = vunpack.c.h.b16 %v354
      %v469 = vunpack.c.l.b16 %v355
      %v470 = vunpack.c.h.b16 %v355
      %v471 = vunpack.c.l.b16 %v356
      %v472 = vunpack.c.h.b16 %v356
      %v473 = vunpack.c.l.b16 %v357
      %v474 = vunpack.c.h.b16 %v357
      %v475 = vunpack.c.l.b16 %v358
      %v476 = vunpack.c.h.b16 %v358
      %v477 = vunpack.c.l.b16 %v359
      %v478 = vunpack.c.h.b16 %v359
      %v479 = vunpack.c.l.b16 %v360
      %v480 = vunpack.c.h.b16 %v360
      %v481 = vunpack.c.l.b16 %v361
      %v482 = vunpack.c.h.b16 %v361
      %v483 = vunpack.c.l.b16 %v362
      %v484 = vunpack.c.h.b16 %v362
      %v485 = vunpack.c.l.b16 %v363
      %v486 = vunpack.c.h.b16 %v363
      %v487 = vunpack.c.l.b16 %v364
      %v488 = vunpack.c.h.b16 %v364
      %v489 = vunpack.c.l.b16 %v365
      %v490 = vunpack.c.h.b16 %v365
      %v491 = vunpack.c.l.b16 %v366
      %v492 = vunpack.c.h.b16 %v366
      %v493 = vunpack.c.l.b16 %v367
      %v494 = vunpack.c.h.b16 %v367
      %v495 = vunpack.c.l.b16 %v368
      %v496 = vunpack.c.h.b16 %v368
      %v497 = vunpack.c.l.b16 %v369
      %v498 = vunpack.c.h.b16 %v369
      %v499 = vunpack.c.l.b16 %v370
      %v500 = vunpack.c.h.b16 %v370
      %v501 = vpack.c.b16 %v441, %v437
      %v502 = vpack.c.b16 %v442, %v438
      %v503 = vpack.c.b16 %v443, %v439
      %v504 = vpack.c.b16 %v444, %v440
      %v505 = vpack.c.b16 %v449, %v445
      %v506 = vpack.c.b16 %v450, %v446
      %v507 = vpack.c.b16 %v451, %v447
      %v508 = vpack.c.b16 %v452, %v448
      %v509 = vpack.c.b16 %v457, %v453
      %v510 = vpack.c.b16 %v458, %v454
      %v511 = vpack.c.b16 %v459, %v455
      %v512 = vpack.c.b16 %v460, %v456
      %v513 = vpack.c.b16 %v465, %v461
      %v514 = vpack.c.b16 %v466, %v462
      %v515 = vpack.c.b16 %v467, %v463
      %v516 = vpack.c.b16 %v468, %v464
      %v517 = vpack.c.b16 %v473, %v469
      %v518 = vpack.c.b16 %v474, %v470
      %v519 = vpack.c.b16 %v475, %v471
      %v520 = vpack.c.b16 %v476, %v472
      %v521 = vpack.c.b16 %v481, %v477
      %v522 = vpack.c.b16 %v482, %v478
      %v523 = vpack.c.b16 %v483, %v479
      %v524 = vpack.c.b16 %v484, %v480
      %v525 = vpack.c.b16 %v489, %v485
      %v526 = vpack.c.b16 %v490, %v486
      %v527 = vpack.c.b16 %v491, %v487
      %v528 = vpack.c.b16 %v492, %v488
      %v529 = vpack.c.b16 %v497, %v493
      %v530 = vpack.c.b16 %v498, %v494
      %v531 = vpack.c.b16 %v499, %v495
      %v532 = vpack.c.b16 %v500, %v496
      %565 = vmatprep.subr.bf16.mxu0 %v530
      %566 = vmatpush1.bf16.msra.mxu0 %v529
      %567 = vmatprep.subr.bf16.mxu0 %v526
      %568 = vmatpush1.bf16.msra.mxu0 %v525
      %569 = vmatprep.subr.bf16.mxu0 %v522
      %570 = vmatpush1.bf16.msra.mxu0 %v521
      %571 = vmatprep.subr.bf16.mxu0 %v518
      %572 = vmatpush1.bf16.msra.mxu0 %v517
      %573 = vmatprep.subr.bf16.mxu0 %v514
      %574 = vmatpush1.bf16.msra.mxu0 %v513
      %575 = vmatprep.subr.bf16.mxu0 %v510
      %576 = vmatpush1.bf16.msra.mxu0 %v509
      %577 = vmatprep.subr.bf16.mxu0 %v506
      %578 = vmatpush1.bf16.msra.mxu0 %v505
      %579 = vmatprep.subr.bf16.mxu0 %v502
      %580 = vmatpush1.bf16.msra.mxu0 %v501
      %581 = vmatprep.subr.bf16.mxu0 0
      %582 = vmatpush2.bf16.msra.mxu0 0
      %583 = vmatprep.subr.bf16.mxu0 0
      %584 = vmatpush2.bf16.msra.mxu0 0
      %585 = vmatprep.subr.bf16.mxu0 0
      %586 = vmatpush2.bf16.msra.mxu0 0
      %587 = vmatprep.subr.bf16.mxu0 0
      %588 = vmatpush2.bf16.msra.mxu0 0
      %589 = vmatprep.subr.bf16.mxu0 0
      %590 = vmatpush2.bf16.msra.mxu0 0
      %591 = vmatprep.subr.bf16.mxu0 0
      %592 = vmatpush2.bf16.msra.mxu0 0
      %593 = vmatprep.subr.bf16.mxu0 0
      %594 = vmatpush2.bf16.msra.mxu0 0
      %595 = vmatprep.subr.bf16.mxu0 0
      %596 = vmatpush2.bf16.msra.mxu0 0
      %597 = vmatprep.mubr.bf16.mxu0 0
      %598 = vmatmul.mubr.bf16.gmra.mxu0 %v401
      %v599 = vpop.f32.mrf.mxu0
      %v600 = vadd.f32 %v376, %v599
      %v601 = vpop.f32.mrf.mxu0
      %v602 = vadd.f32 %v380, %v601
      %v603 = vpop.f32.mrf.mxu0
      %v604 = vadd.f32 %v376, %v603
      %v605 = vpop.f32.mrf.mxu0
      %v606 = vadd.f32 %v380, %v605
      %607 = vmatprep.mubr.bf16.mxu0 0
      %608 = vmatmul.mubr.bf16.gmra.mxu0 %v402
      %v609 = vpop.f32.mrf.mxu0
      %v610 = vadd.f32 %v376, %v609
      %v611 = vpop.f32.mrf.mxu0
      %v612 = vadd.f32 %v380, %v611
      %v613 = vpop.f32.mrf.mxu0
      %v614 = vadd.f32 %v376, %v613
      %v615 = vpop.f32.mrf.mxu0
      %v616 = vadd.f32 %v380, %v615
      %617 = vdwg.mxu0
      %618 = vmatprep.subr.bf16.mxu0 %v532
      %619 = vmatpush1.bf16.msra.mxu0 %v531
      %620 = vmatprep.subr.bf16.mxu0 %v528
      %621 = vmatpush1.bf16.msra.mxu0 %v527
      %622 = vmatprep.subr.bf16.mxu0 %v524
      %623 = vmatpush1.bf16.msra.mxu0 %v523
      %624 = vmatprep.subr.bf16.mxu0 %v520
      %625 = vmatpush1.bf16.msra.mxu0 %v519
      %626 = vmatprep.subr.bf16.mxu0 %v516
      %627 = vmatpush1.bf16.msra.mxu0 %v515
      %628 = vmatprep.subr.bf16.mxu0 %v512
      %629 = vmatpush1.bf16.msra.mxu0 %v511
      %630 = vmatprep.subr.bf16.mxu0 %v508
      %631 = vmatpush1.bf16.msra.mxu0 %v507
      %632 = vmatprep.subr.bf16.mxu0 %v504
      %633 = vmatpush1.bf16.msra.mxu0 %v503
      %634 = vmatprep.subr.bf16.mxu0 0
      %635 = vmatpush2.bf16.msra.mxu0 0
      %636 = vmatprep.subr.bf16.mxu0 0
      %637 = vmatpush2.bf16.msra.mxu0 0
      %638 = vmatprep.subr.bf16.mxu0 0
      %639 = vmatpush2.bf16.msra.mxu0 0
      %640 = vmatprep.subr.bf16.mxu0 0
      %641 = vmatpush2.bf16.msra.mxu0 0
      %642 = vmatprep.subr.bf16.mxu0 0
      %643 = vmatpush2.bf16.msra.mxu0 0
      %644 = vmatprep.subr.bf16.mxu0 0
      %645 = vmatpush2.bf16.msra.mxu0 0
      %646 = vmatprep.subr.bf16.mxu0 0
      %647 = vmatpush2.bf16.msra.mxu0 0
      %648 = vmatprep.subr.bf16.mxu0 0
      %649 = vmatpush2.bf16.msra.mxu0 0
      %650 = vmatprep.mubr.bf16.mxu0 0
      %651 = vmatmul.mubr.bf16.gmra.mxu0 %v401
      %v652 = vpop.f32.mrf.mxu0
      %v653 = vadd.f32 %v384, %v652
      %v654 = vpop.f32.mrf.mxu0
      %v655 = vadd.f32 %v388, %v654
      %v656 = vpop.f32.mrf.mxu0
      %v657 = vadd.f32 %v384, %v656
      %v658 = vpop.f32.mrf.mxu0
      %v659 = vadd.f32 %v388, %v658
      %660 = vmatprep.mubr.bf16.mxu0 0
      %661 = vmatmul.mubr.bf16.gmra.mxu0 %v402
      %v662 = vpop.f32.mrf.mxu0
      %v663 = vadd.f32 %v384, %v662
      %v664 = vpop.f32.mrf.mxu0
      %v665 = vadd.f32 %v388, %v664
      %v666 = vpop.f32.mrf.mxu0
      %v667 = vadd.f32 %v384, %v666
      %v668 = vpop.f32.mrf.mxu0
      %v669 = vadd.f32 %v388, %v668
      %670 = vdwg.mxu0
      %v671 = vld [vmem:[%s310] sm:$0xf]
      %v672 = vld [vmem:[%s310 + $0x4] sm:$0xf]
      %v673 = vld [vmem:[%s310 + $0x8] sm:$0xf]
      %v674 = vld [vmem:[%s310 + $0xc] sm:$0xf]
      %v675 = vld [vmem:[%s2 + $0x10] sm:$0xff]
      %v676 = vld [vmem:[%s2 + $0x18] sm:$0xff]
      %v677 = vld [vmem:[%s2 + $0x30] sm:$0xff]
      %v678 = vld [vmem:[%s2 + $0x38] sm:$0xff]
      %v679 = vld [vmem:[%s2 + $0x50] sm:$0xff]
      %v680 = vld [vmem:[%s2 + $0x58] sm:$0xff]
      %v681 = vld [vmem:[%s2 + $0x70] sm:$0xff]
      %v682 = vld [vmem:[%s2 + $0x78] sm:$0xff]
      %v683 = vld [vmem:[%s2 + $0x90] sm:$0xff]
      %v684 = vld [vmem:[%s2 + $0x98] sm:$0xff]
      %v685 = vld [vmem:[%s2 + $0xb0] sm:$0xff]
      %v686 = vld [vmem:[%s2 + $0xb8] sm:$0xff]
      %v687 = vld [vmem:[%s2 + $0xd0] sm:$0xff]
      %v688 = vld [vmem:[%s2 + $0xd8] sm:$0xff]
      %v689 = vld [vmem:[%s2 + $0xf0] sm:$0xff]
      %v690 = vld [vmem:[%s2 + $0xf8] sm:$0xff]
      %v691 = vld [vmem:[%s2 + $0x110] sm:$0xff]
      %v692 = vld [vmem:[%s2 + $0x118] sm:$0xff]
      %v693 = vld [vmem:[%s2 + $0x130] sm:$0xff]
      %v694 = vld [vmem:[%s2 + $0x138] sm:$0xff]
      %v695 = vld [vmem:[%s2 + $0x150] sm:$0xff]
      %v696 = vld [vmem:[%s2 + $0x158] sm:$0xff]
      %v697 = vld [vmem:[%s2 + $0x170] sm:$0xff]
      %v698 = vld [vmem:[%s2 + $0x178] sm:$0xff]
      %v699 = vld [vmem:[%s2 + $0x190] sm:$0xff]
      %v700 = vld [vmem:[%s2 + $0x198] sm:$0xff]
      %v701 = vld [vmem:[%s2 + $0x1b0] sm:$0xff]
      %v702 = vld [vmem:[%s2 + $0x1b8] sm:$0xff]
      %v703 = vld [vmem:[%s2 + $0x1d0] sm:$0xff]
      %v704 = vld [vmem:[%s2 + $0x1d8] sm:$0xff]
      %v705 = vld [vmem:[%s2 + $0x1f0] sm:$0xff]
      %v706 = vld [vmem:[%s2 + $0x1f8] sm:$0xff]
      %v707 = vld [vmem:[%s4 + $0x4] sm:$0xf]
      %v709 = vlaneseq
      %v710 = vshrl.u32 %v709, 7
      %v711 = vsub.s32 0, %v710
      %v712 = vrot.slane %v707, %v711
      %v713 = vlaneseq
      %v714 = vshrl.u32 %v713, 7
      %v715 = vsub.s32 1, %v714
      %v716 = vrot.slane %v707, %v715
      %v717 = vlaneseq
      %v718 = vshrl.u32 %v717, 7
      %v719 = vsub.s32 2, %v718
      %v720 = vrot.slane %v707, %v719
      %v721 = vlaneseq
      %v722 = vshrl.u32 %v721, 7
      %v723 = vsub.s32 3, %v722
      %v724 = vrot.slane %v707, %v723
      %v733 = vunpack.c.l.b16 %v671
      %v734 = vunpack.c.l.b16 %v672
      %v735 = vunpack.c.l.b16 %v673
      %v736 = vunpack.c.l.b16 %v674
      %v737 = vpack.c.b16 %v734, %v733
      %v738 = vpack.c.b16 %v736, %v735
      %v773 = vunpack.c.l.b16 %v675
      %v774 = vunpack.c.h.b16 %v675
      %v775 = vunpack.c.l.b16 %v676
      %v776 = vunpack.c.h.b16 %v676
      %v777 = vunpack.c.l.b16 %v677
      %v778 = vunpack.c.h.b16 %v677
      %v779 = vunpack.c.l.b16 %v678
      %v780 = vunpack.c.h.b16 %v678
      %v781 = vunpack.c.l.b16 %v679
      %v782 = vunpack.c.h.b16 %v679
      %v783 = vunpack.c.l.b16 %v680
      %v784 = vunpack.c.h.b16 %v680
      %v785 = vunpack.c.l.b16 %v681
      %v786 = vunpack.c.h.b16 %v681
      %v787 = vunpack.c.l.b16 %v682
      %v788 = vunpack.c.h.b16 %v682
      %v789 = vunpack.c.l.b16 %v683
      %v790 = vunpack.c.h.b16 %v683
      %v791 = vunpack.c.l.b16 %v684
      %v792 = vunpack.c.h.b16 %v684
      %v793 = vunpack.c.l.b16 %v685
      %v794 = vunpack.c.h.b16 %v685
      %v795 = vunpack.c.l.b16 %v686
      %v796 = vunpack.c.h.b16 %v686
      %v797 = vunpack.c.l.b16 %v687
      %v798 = vunpack.c.h.b16 %v687
      %v799 = vunpack.c.l.b16 %v688
      %v800 = vunpack.c.h.b16 %v688
      %v801 = vunpack.c.l.b16 %v689
      %v802 = vunpack.c.h.b16 %v689
      %v803 = vunpack.c.l.b16 %v690
      %v804 = vunpack.c.h.b16 %v690
      %v805 = vunpack.c.l.b16 %v691
      %v806 = vunpack.c.h.b16 %v691
      %v807 = vunpack.c.l.b16 %v692
      %v808 = vunpack.c.h.b16 %v692
      %v809 = vunpack.c.l.b16 %v693
      %v810 = vunpack.c.h.b16 %v693
      %v811 = vunpack.c.l.b16 %v694
      %v812 = vunpack.c.h.b16 %v694
      %v813 = vunpack.c.l.b16 %v695
      %v814 = vunpack.c.h.b16 %v695
      %v815 = vunpack.c.l.b16 %v696
      %v816 = vunpack.c.h.b16 %v696
      %v817 = vunpack.c.l.b16 %v697
      %v818 = vunpack.c.h.b16 %v697
      %v819 = vunpack.c.l.b16 %v698
      %v820 = vunpack.c.h.b16 %v698
      %v821 = vunpack.c.l.b16 %v699
      %v822 = vunpack.c.h.b16 %v699
      %v823 = vunpack.c.l.b16 %v700
      %v824 = vunpack.c.h.b16 %v700
      %v825 = vunpack.c.l.b16 %v701
      %v826 = vunpack.c.h.b16 %v701
      %v827 = vunpack.c.l.b16 %v702
      %v828 = vunpack.c.h.b16 %v702
      %v829 = vunpack.c.l.b16 %v703
      %v830 = vunpack.c.h.b16 %v703
      %v831 = vunpack.c.l.b16 %v704
      %v832 = vunpack.c.h.b16 %v704
      %v833 = vunpack.c.l.b16 %v705
      %v834 = vunpack.c.h.b16 %v705
      %v835 = vunpack.c.l.b16 %v706
      %v836 = vunpack.c.h.b16 %v706
      %v837 = vpack.c.b16 %v777, %v773
      %v838 = vpack.c.b16 %v778, %v774
      %v839 = vpack.c.b16 %v779, %v775
      %v840 = vpack.c.b16 %v780, %v776
      %v841 = vpack.c.b16 %v785, %v781
      %v842 = vpack.c.b16 %v786, %v782
      %v843 = vpack.c.b16 %v787, %v783
      %v844 = vpack.c.b16 %v788, %v784
      %v845 = vpack.c.b16 %v793, %v789
      %v846 = vpack.c.b16 %v794, %v790
      %v847 = vpack.c.b16 %v795, %v791
      %v848 = vpack.c.b16 %v796, %v792
      %v849 = vpack.c.b16 %v801, %v797
      %v850 = vpack.c.b16 %v802, %v798
      %v851 = vpack.c.b16 %v803, %v799
      %v852 = vpack.c.b16 %v804, %v800
      %v853 = vpack.c.b16 %v809, %v805
      %v854 = vpack.c.b16 %v810, %v806
      %v855 = vpack.c.b16 %v811, %v807
      %v856 = vpack.c.b16 %v812, %v808
      %v857 = vpack.c.b16 %v817, %v813
      %v858 = vpack.c.b16 %v818, %v814
      %v859 = vpack.c.b16 %v819, %v815
      %v860 = vpack.c.b16 %v820, %v816
      %v861 = vpack.c.b16 %v825, %v821
      %v862 = vpack.c.b16 %v826, %v822
      %v863 = vpack.c.b16 %v827, %v823
      %v864 = vpack.c.b16 %v828, %v824
      %v865 = vpack.c.b16 %v833, %v829
      %v866 = vpack.c.b16 %v834, %v830
      %v867 = vpack.c.b16 %v835, %v831
      %v868 = vpack.c.b16 %v836, %v832
      %901 = vmatprep.subr.bf16.mxu0 %v866
      %902 = vmatpush1.bf16.msra.mxu0 %v865
      %903 = vmatprep.subr.bf16.mxu0 %v862
      %904 = vmatpush1.bf16.msra.mxu0 %v861
      %905 = vmatprep.subr.bf16.mxu0 %v858
      %906 = vmatpush1.bf16.msra.mxu0 %v857
      %907 = vmatprep.subr.bf16.mxu0 %v854
      %908 = vmatpush1.bf16.msra.mxu0 %v853
      %909 = vmatprep.subr.bf16.mxu0 %v850
      %910 = vmatpush1.bf16.msra.mxu0 %v849
      %911 = vmatprep.subr.bf16.mxu0 %v846
      %912 = vmatpush1.bf16.msra.mxu0 %v845
      %913 = vmatprep.subr.bf16.mxu0 %v842
      %914 = vmatpush1.bf16.msra.mxu0 %v841
      %915 = vmatprep.subr.bf16.mxu0 %v838
      %916 = vmatpush1.bf16.msra.mxu0 %v837
      %917 = vmatprep.subr.bf16.mxu0 0
      %918 = vmatpush2.bf16.msra.mxu0 0
      %919 = vmatprep.subr.bf16.mxu0 0
      %920 = vmatpush2.bf16.msra.mxu0 0
      %921 = vmatprep.subr.bf16.mxu0 0
      %922 = vmatpush2.bf16.msra.mxu0 0
      %923 = vmatprep.subr.bf16.mxu0 0
      %924 = vmatpush2.bf16.msra.mxu0 0
      %925 = vmatprep.subr.bf16.mxu0 0
      %926 = vmatpush2.bf16.msra.mxu0 0
      %927 = vmatprep.subr.bf16.mxu0 0
      %928 = vmatpush2.bf16.msra.mxu0 0
      %929 = vmatprep.subr.bf16.mxu0 0
      %930 = vmatpush2.bf16.msra.mxu0 0
      %931 = vmatprep.subr.bf16.mxu0 0
      %932 = vmatpush2.bf16.msra.mxu0 0
      %933 = vmatprep.mubr.bf16.mxu0 0
      %934 = vmatmul.mubr.bf16.gmra.mxu0 %v737
      %v935 = vpop.f32.mrf.mxu0
      %v936 = vadd.f32 %v712, %v935
      %v937 = vpop.f32.mrf.mxu0
      %v938 = vadd.f32 %v716, %v937
      %v939 = vpop.f32.mrf.mxu0
      %v940 = vadd.f32 %v712, %v939
      %v941 = vpop.f32.mrf.mxu0
      %v942 = vadd.f32 %v716, %v941
      %943 = vmatprep.mubr.bf16.mxu0 0
      %944 = vmatmul.mubr.bf16.gmra.mxu0 %v738
      %v945 = vpop.f32.mrf.mxu0
      %v946 = vadd.f32 %v712, %v945
      %v947 = vpop.f32.mrf.mxu0
      %v948 = vadd.f32 %v716, %v947
      %v949 = vpop.f32.mrf.mxu0
      %v950 = vadd.f32 %v712, %v949
      %v951 = vpop.f32.mrf.mxu0
      %v952 = vadd.f32 %v716, %v951
      %953 = vdwg.mxu0
      %954 = vmatprep.subr.bf16.mxu0 %v868
      %955 = vmatpush1.bf16.msra.mxu0 %v867
      %956 = vmatprep.subr.bf16.mxu0 %v864
      %957 = vmatpush1.bf16.msra.mxu0 %v863
      %958 = vmatprep.subr.bf16.mxu0 %v860
      %959 = vmatpush1.bf16.msra.mxu0 %v859
      %960 = vmatprep.subr.bf16.mxu0 %v856
      %961 = vmatpush1.bf16.msra.mxu0 %v855
      %962 = vmatprep.subr.bf16.mxu0 %v852
      %963 = vmatpush1.bf16.msra.mxu0 %v851
      %964 = vmatprep.subr.bf16.mxu0 %v848
      %965 = vmatpush1.bf16.msra.mxu0 %v847
      %966 = vmatprep.subr.bf16.mxu0 %v844
      %967 = vmatpush1.bf16.msra.mxu0 %v843
      %968 = vmatprep.subr.bf16.mxu0 %v840
      %969 = vmatpush1.bf16.msra.mxu0 %v839
      %970 = vmatprep.subr.bf16.mxu0 0
      %971 = vmatpush2.bf16.msra.mxu0 0
      %972 = vmatprep.subr.bf16.mxu0 0
      %973 = vmatpush2.bf16.msra.mxu0 0
      %974 = vmatprep.subr.bf16.mxu0 0
      %975 = vmatpush2.bf16.msra.mxu0 0
      %976 = vmatprep.subr.bf16.mxu0 0
      %977 = vmatpush2.bf16.msra.mxu0 0
      %978 = vmatprep.subr.bf16.mxu0 0
      %979 = vmatpush2.bf16.msra.mxu0 0
      %980 = vmatprep.subr.bf16.mxu0 0
      %981 = vmatpush2.bf16.msra.mxu0 0
      %982 = vmatprep.subr.bf16.mxu0 0
      %983 = vmatpush2.bf16.msra.mxu0 0
      %984 = vmatprep.subr.bf16.mxu0 0
      %985 = vmatpush2.bf16.msra.mxu0 0
      %986 = vmatprep.mubr.bf16.mxu0 0
      %987 = vmatmul.mubr.bf16.gmra.mxu0 %v737
      %v988 = vpop.f32.mrf.mxu0
      %v989 = vadd.f32 %v720, %v988
      %v990 = vpop.f32.mrf.mxu0
      %v991 = vadd.f32 %v724, %v990
      %v992 = vpop.f32.mrf.mxu0
      %v993 = vadd.f32 %v720, %v992
      %v994 = vpop.f32.mrf.mxu0
      %v995 = vadd.f32 %v724, %v994
      %996 = vmatprep.mubr.bf16.mxu0 0
      %997 = vmatmul.mubr.bf16.gmra.mxu0 %v738
      %v998 = vpop.f32.mrf.mxu0
      %v999 = vadd.f32 %v720, %v998
      %v1000 = vpop.f32.mrf.mxu0
      %v1001 = vadd.f32 %v724, %v1000
      %v1002 = vpop.f32.mrf.mxu0
      %v1003 = vadd.f32 %v720, %v1002
      %v1004 = vpop.f32.mrf.mxu0
      %v1005 = vadd.f32 %v724, %v1004
      %1006 = vdwg.mxu0
      %v1007 = vpack.c.bf16 %v604, %v600
      %v1008 = vpack.c.bf16 %v606, %v602
      %v1009 = vpack.c.bf16 %v657, %v653
      %v1010 = vpack.c.bf16 %v659, %v655
      %v1011 = vpack.c.bf16 %v614, %v610
      %v1012 = vpack.c.bf16 %v616, %v612
      %v1013 = vpack.c.bf16 %v667, %v663
      %v1014 = vpack.c.bf16 %v669, %v665
      %v1023 = vunpack.c.l.b16 %v1007
      %v1024 = vunpack.c.l.b16 %v1008
      %v1025 = vunpack.c.l.b16 %v1009
      %v1026 = vunpack.c.l.b16 %v1010
      %v1027 = vunpack.c.h.b16 %v1007
      %v1028 = vunpack.c.h.b16 %v1008
      %v1029 = vunpack.c.h.b16 %v1009
      %v1030 = vunpack.c.h.b16 %v1010
      %v1031 = vunpack.c.l.b16 %v1011
      %v1032 = vunpack.c.l.b16 %v1012
      %v1033 = vunpack.c.l.b16 %v1013
      %v1034 = vunpack.c.l.b16 %v1014
      %v1035 = vunpack.c.h.b16 %v1011
      %v1036 = vunpack.c.h.b16 %v1012
      %v1037 = vunpack.c.h.b16 %v1013
      %v1038 = vunpack.c.h.b16 %v1014
      %v1039 = vpack.c.b16 %v1024, %v1023
      %v1040 = vpack.c.b16 %v1026, %v1025
      %v1041 = vpack.c.b16 %v1028, %v1027
      %v1042 = vpack.c.b16 %v1030, %v1029
      %v1043 = vpack.c.b16 %v1032, %v1031
      %v1044 = vpack.c.b16 %v1034, %v1033
      %v1045 = vpack.c.b16 %v1036, %v1035
      %v1046 = vpack.c.b16 %v1038, %v1037
      %1055 = vst [vmem:[#allocation2] sm:$0xff] %v1039
      %1056 = vst [vmem:[#allocation2 + $0x8] sm:$0xff] %v1040
      %1057 = vst [vmem:[#allocation2 + $0x20] sm:$0xff] %v1041
      %1058 = vst [vmem:[#allocation2 + $0x28] sm:$0xff] %v1042
      %1059 = vst [vmem:[#allocation2 + $0x40] sm:$0xff] %v1043
      %1060 = vst [vmem:[#allocation2 + $0x48] sm:$0xff] %v1044
      %1061 = vst [vmem:[#allocation2 + $0x60] sm:$0xff] %v1045
      %1062 = vst [vmem:[#allocation2 + $0x68] sm:$0xff] %v1046
      %v1063 = vpack.c.bf16 %v940, %v936
      %v1064 = vpack.c.bf16 %v942, %v938
      %v1065 = vpack.c.bf16 %v993, %v989
      %v1066 = vpack.c.bf16 %v995, %v991
      %v1067 = vpack.c.bf16 %v950, %v946
      %v1068 = vpack.c.bf16 %v952, %v948
      %v1069 = vpack.c.bf16 %v1003, %v999
      %v1070 = vpack.c.bf16 %v1005, %v1001
      %v1079 = vunpack.c.l.b16 %v1063
      %v1080 = vunpack.c.l.b16 %v1064
      %v1081 = vunpack.c.l.b16 %v1065
      %v1082 = vunpack.c.l.b16 %v1066
      %v1083 = vunpack.c.h.b16 %v1063
      %v1084 = vunpack.c.h.b16 %v1064
      %v1085 = vunpack.c.h.b16 %v1065
      %v1086 = vunpack.c.h.b16 %v1066
      %v1087 = vunpack.c.l.b16 %v1067
      %v1088 = vunpack.c.l.b16 %v1068
      %v1089 = vunpack.c.l.b16 %v1069
      %v1090 = vunpack.c.l.b16 %v1070
      %v1091 = vunpack.c.h.b16 %v1067
      %v1092 = vunpack.c.h.b16 %v1068
      %v1093 = vunpack.c.h.b16 %v1069
      %v1094 = vunpack.c.h.b16 %v1070
      %v1095 = vpack.c.b16 %v1080, %v1079
      %v1096 = vpack.c.b16 %v1082, %v1081
      %v1097 = vpack.c.b16 %v1084, %v1083
      %v1098 = vpack.c.b16 %v1086, %v1085
      %v1099 = vpack.c.b16 %v1088, %v1087
      %v1100 = vpack.c.b16 %v1090, %v1089
      %v1101 = vpack.c.b16 %v1092, %v1091
      %v1102 = vpack.c.b16 %v1094, %v1093
      %1111 = vst [vmem:[#allocation2 + $0x10] sm:$0xff] %v1095
      %1112 = vst [vmem:[#allocation2 + $0x18] sm:$0xff] %v1096
      %1113 = vst [vmem:[#allocation2 + $0x30] sm:$0xff] %v1097
      %1114 = vst [vmem:[#allocation2 + $0x38] sm:$0xff] %v1098
      %1115 = vst [vmem:[#allocation2 + $0x50] sm:$0xff] %v1099
      %1116 = vst [vmem:[#allocation2 + $0x58] sm:$0xff] %v1100
      %1117 = vst [vmem:[#allocation2 + $0x70] sm:$0xff] %v1101
      %1118 = vst [vmem:[#allocation2 + $0x78] sm:$0xff] %v1102
      %v1119 = vld [vmem:[#allocation3] sm:$0xff]
      %v1120 = vld [vmem:[%s3] sm:$0xff]
      %v1121 = vld [vmem:[%s3 + $0x8] sm:$0xff]
      %v1122 = vld [vmem:[%s3 + $0x10] sm:$0xff]
      %v1123 = vld [vmem:[%s3 + $0x18] sm:$0xff]
      %v1124 = vld [vmem:[%s3 + $0x20] sm:$0xff]
      %v1125 = vld [vmem:[%s3 + $0x28] sm:$0xff]
      %v1126 = vld [vmem:[%s3 + $0x30] sm:$0xff]
      %v1127 = vld [vmem:[%s3 + $0x38] sm:$0xff]
      %v1128 = vld [vmem:[%s3 + $0x40] sm:$0xff]
      %v1129 = vld [vmem:[%s3 + $0x48] sm:$0xff]
      %v1130 = vld [vmem:[%s3 + $0x50] sm:$0xff]
      %v1131 = vld [vmem:[%s3 + $0x58] sm:$0xff]
      %v1132 = vld [vmem:[%s3 + $0x60] sm:$0xff]
      %v1133 = vld [vmem:[%s3 + $0x68] sm:$0xff]
      %v1134 = vld [vmem:[%s3 + $0x70] sm:$0xff]
      %v1135 = vld [vmem:[%s3 + $0x78] sm:$0xff]
      %v1136 = vld [vmem:[%s3 + $0x80] sm:$0xff]
      %v1137 = vld [vmem:[%s3 + $0x88] sm:$0xff]
      %v1138 = vld [vmem:[%s3 + $0x90] sm:$0xff]
      %v1139 = vld [vmem:[%s3 + $0x98] sm:$0xff]
      %v1140 = vld [vmem:[%s3 + $0xa0] sm:$0xff]
      %v1141 = vld [vmem:[%s3 + $0xa8] sm:$0xff]
      %v1142 = vld [vmem:[%s3 + $0xb0] sm:$0xff]
      %v1143 = vld [vmem:[%s3 + $0xb8] sm:$0xff]
      %v1144 = vld [vmem:[%s3 + $0xc0] sm:$0xff]
      %v1145 = vld [vmem:[%s3 + $0xc8] sm:$0xff]
      %v1146 = vld [vmem:[%s3 + $0xd0] sm:$0xff]
      %v1147 = vld [vmem:[%s3 + $0xd8] sm:$0xff]
      %v1148 = vld [vmem:[%s3 + $0xe0] sm:$0xff]
      %v1149 = vld [vmem:[%s3 + $0xe8] sm:$0xff]
      %v1150 = vld [vmem:[%s3 + $0xf0] sm:$0xff]
      %v1151 = vld [vmem:[%s3 + $0xf8] sm:$0xff]
      %v1152 = vld [vmem:[%s3 + $0x100] sm:$0xff]
      %v1153 = vld [vmem:[%s3 + $0x108] sm:$0xff]
      %v1154 = vld [vmem:[%s3 + $0x110] sm:$0xff]
      %v1155 = vld [vmem:[%s3 + $0x118] sm:$0xff]
      %v1156 = vld [vmem:[%s3 + $0x120] sm:$0xff]
      %v1157 = vld [vmem:[%s3 + $0x128] sm:$0xff]
      %v1158 = vld [vmem:[%s3 + $0x130] sm:$0xff]
      %v1159 = vld [vmem:[%s3 + $0x138] sm:$0xff]
      %v1160 = vld [vmem:[%s3 + $0x140] sm:$0xff]
      %v1161 = vld [vmem:[%s3 + $0x148] sm:$0xff]
      %v1162 = vld [vmem:[%s3 + $0x150] sm:$0xff]
      %v1163 = vld [vmem:[%s3 + $0x158] sm:$0xff]
      %v1164 = vld [vmem:[%s3 + $0x160] sm:$0xff]
      %v1165 = vld [vmem:[%s3 + $0x168] sm:$0xff]
      %v1166 = vld [vmem:[%s3 + $0x170] sm:$0xff]
      %v1167 = vld [vmem:[%s3 + $0x178] sm:$0xff]
      %v1168 = vld [vmem:[%s3 + $0x180] sm:$0xff]
      %v1169 = vld [vmem:[%s3 + $0x188] sm:$0xff]
      %v1170 = vld [vmem:[%s3 + $0x190] sm:$0xff]
      %v1171 = vld [vmem:[%s3 + $0x198] sm:$0xff]
      %v1172 = vld [vmem:[%s3 + $0x1a0] sm:$0xff]
      %v1173 = vld [vmem:[%s3 + $0x1a8] sm:$0xff]
      %v1174 = vld [vmem:[%s3 + $0x1b0] sm:$0xff]
      %v1175 = vld [vmem:[%s3 + $0x1b8] sm:$0xff]
      %v1176 = vld [vmem:[%s3 + $0x1c0] sm:$0xff]
      %v1177 = vld [vmem:[%s3 + $0x1c8] sm:$0xff]
      %v1178 = vld [vmem:[%s3 + $0x1d0] sm:$0xff]
      %v1179 = vld [vmem:[%s3 + $0x1d8] sm:$0xff]
      %v1180 = vld [vmem:[%s3 + $0x1e0] sm:$0xff]
      %v1181 = vld [vmem:[%s3 + $0x1e8] sm:$0xff]
      %v1182 = vld [vmem:[%s3 + $0x1f0] sm:$0xff]
      %v1183 = vld [vmem:[%s3 + $0x1f8] sm:$0xff]
      %v1184 = vld [vmem:[%s3 + $0x200] sm:$0xff]
      %v1185 = vld [vmem:[%s3 + $0x208] sm:$0xff]
      %v1186 = vld [vmem:[%s3 + $0x210] sm:$0xff]
      %v1187 = vld [vmem:[%s3 + $0x218] sm:$0xff]
      %v1188 = vld [vmem:[%s3 + $0x220] sm:$0xff]
      %v1189 = vld [vmem:[%s3 + $0x228] sm:$0xff]
      %v1190 = vld [vmem:[%s3 + $0x230] sm:$0xff]
      %v1191 = vld [vmem:[%s3 + $0x238] sm:$0xff]
      %v1192 = vld [vmem:[%s3 + $0x240] sm:$0xff]
      %v1193 = vld [vmem:[%s3 + $0x248] sm:$0xff]
      %v1194 = vld [vmem:[%s3 + $0x250] sm:$0xff]
      %v1195 = vld [vmem:[%s3 + $0x258] sm:$0xff]
      %v1196 = vld [vmem:[%s3 + $0x260] sm:$0xff]
      %v1197 = vld [vmem:[%s3 + $0x268] sm:$0xff]
      %v1198 = vld [vmem:[%s3 + $0x270] sm:$0xff]
      %v1199 = vld [vmem:[%s3 + $0x278] sm:$0xff]
      %v1200 = vld [vmem:[%s3 + $0x280] sm:$0xff]
      %v1201 = vld [vmem:[%s3 + $0x288] sm:$0xff]
      %v1202 = vld [vmem:[%s3 + $0x290] sm:$0xff]
      %v1203 = vld [vmem:[%s3 + $0x298] sm:$0xff]
      %v1204 = vld [vmem:[%s3 + $0x2a0] sm:$0xff]
      %v1205 = vld [vmem:[%s3 + $0x2a8] sm:$0xff]
      %v1206 = vld [vmem:[%s3 + $0x2b0] sm:$0xff]
      %v1207 = vld [vmem:[%s3 + $0x2b8] sm:$0xff]
      %v1208 = vld [vmem:[%s3 + $0x2c0] sm:$0xff]
      %v1209 = vld [vmem:[%s3 + $0x2c8] sm:$0xff]
      %v1210 = vld [vmem:[%s3 + $0x2d0] sm:$0xff]
      %v1211 = vld [vmem:[%s3 + $0x2d8] sm:$0xff]
      %v1212 = vld [vmem:[%s3 + $0x2e0] sm:$0xff]
      %v1213 = vld [vmem:[%s3 + $0x2e8] sm:$0xff]
      %v1214 = vld [vmem:[%s3 + $0x2f0] sm:$0xff]
      %v1215 = vld [vmem:[%s3 + $0x2f8] sm:$0xff]
      %v1216 = vld [vmem:[%s3 + $0x300] sm:$0xff]
      %v1217 = vld [vmem:[%s3 + $0x308] sm:$0xff]
      %v1218 = vld [vmem:[%s3 + $0x310] sm:$0xff]
      %v1219 = vld [vmem:[%s3 + $0x318] sm:$0xff]
      %v1220 = vld [vmem:[%s3 + $0x320] sm:$0xff]
      %v1221 = vld [vmem:[%s3 + $0x328] sm:$0xff]
      %v1222 = vld [vmem:[%s3 + $0x330] sm:$0xff]
      %v1223 = vld [vmem:[%s3 + $0x338] sm:$0xff]
      %v1224 = vld [vmem:[%s3 + $0x340] sm:$0xff]
      %v1225 = vld [vmem:[%s3 + $0x348] sm:$0xff]
      %v1226 = vld [vmem:[%s3 + $0x350] sm:$0xff]
      %v1227 = vld [vmem:[%s3 + $0x358] sm:$0xff]
      %v1228 = vld [vmem:[%s3 + $0x360] sm:$0xff]
      %v1229 = vld [vmem:[%s3 + $0x368] sm:$0xff]
      %v1230 = vld [vmem:[%s3 + $0x370] sm:$0xff]
      %v1231 = vld [vmem:[%s3 + $0x378] sm:$0xff]
      %v1232 = vld [vmem:[%s3 + $0x380] sm:$0xff]
      %v1233 = vld [vmem:[%s3 + $0x388] sm:$0xff]
      %v1234 = vld [vmem:[%s3 + $0x390] sm:$0xff]
      %v1235 = vld [vmem:[%s3 + $0x398] sm:$0xff]
      %v1236 = vld [vmem:[%s3 + $0x3a0] sm:$0xff]
      %v1237 = vld [vmem:[%s3 + $0x3a8] sm:$0xff]
      %v1238 = vld [vmem:[%s3 + $0x3b0] sm:$0xff]
      %v1239 = vld [vmem:[%s3 + $0x3b8] sm:$0xff]
      %v1240 = vld [vmem:[%s3 + $0x3c0] sm:$0xff]
      %v1241 = vld [vmem:[%s3 + $0x3c8] sm:$0xff]
      %v1242 = vld [vmem:[%s3 + $0x3d0] sm:$0xff]
      %v1243 = vld [vmem:[%s3 + $0x3d8] sm:$0xff]
      %v1244 = vld [vmem:[%s3 + $0x3e0] sm:$0xff]
      %v1245 = vld [vmem:[%s3 + $0x3e8] sm:$0xff]
      %v1246 = vld [vmem:[%s3 + $0x3f0] sm:$0xff]
      %v1247 = vld [vmem:[%s3 + $0x3f8] sm:$0xff]
      %v1249 = vunpack.c.l.b16 %v1119
      %v1250 = vunpack.c.h.b16 %v1119
      %v1251 = vpack.c.b16 %v1249, %v1249
      %v1252 = vpack.c.b16 %v1250, %v1250
      %v1383 = vunpack.c.l.b16 %v1120
      %v1384 = vunpack.c.h.b16 %v1120
      %v1385 = vunpack.c.l.b16 %v1121
      %v1386 = vunpack.c.h.b16 %v1121
      %v1387 = vunpack.c.l.b16 %v1122
      %v1388 = vunpack.c.h.b16 %v1122
      %v1389 = vunpack.c.l.b16 %v1123
      %v1390 = vunpack.c.h.b16 %v1123
      %v1391 = vunpack.c.l.b16 %v1124
      %v1392 = vunpack.c.h.b16 %v1124
      %v1393 = vunpack.c.l.b16 %v1125
      %v1394 = vunpack.c.h.b16 %v1125
      %v1395 = vunpack.c.l.b16 %v1126
      %v1396 = vunpack.c.h.b16 %v1126
      %v1397 = vunpack.c.l.b16 %v1127
      %v1398 = vunpack.c.h.b16 %v1127
      %v1399 = vunpack.c.l.b16 %v1128
      %v1400 = vunpack.c.h.b16 %v1128
      %v1401 = vunpack.c.l.b16 %v1129
      %v1402 = vunpack.c.h.b16 %v1129
      %v1403 = vunpack.c.l.b16 %v1130
      %v1404 = vunpack.c.h.b16 %v1130
      %v1405 = vunpack.c.l.b16 %v1131
      %v1406 = vunpack.c.h.b16 %v1131
      %v1407 = vunpack.c.l.b16 %v1132
      %v1408 = vunpack.c.h.b16 %v1132
      %v1409 = vunpack.c.l.b16 %v1133
      %v1410 = vunpack.c.h.b16 %v1133
      %v1411 = vunpack.c.l.b16 %v1134
      %v1412 = vunpack.c.h.b16 %v1134
      %v1413 = vunpack.c.l.b16 %v1135
      %v1414 = vunpack.c.h.b16 %v1135
      %v1415 = vunpack.c.l.b16 %v1136
      %v1416 = vunpack.c.h.b16 %v1136
      %v1417 = vunpack.c.l.b16 %v1137
      %v1418 = vunpack.c.h.b16 %v1137
      %v1419 = vunpack.c.l.b16 %v1138
      %v1420 = vunpack.c.h.b16 %v1138
      %v1421 = vunpack.c.l.b16 %v1139
      %v1422 = vunpack.c.h.b16 %v1139
      %v1423 = vunpack.c.l.b16 %v1140
      %v1424 = vunpack.c.h.b16 %v1140
      %v1425 = vunpack.c.l.b16 %v1141
      %v1426 = vunpack.c.h.b16 %v1141
      %v1427 = vunpack.c.l.b16 %v1142
      %v1428 = vunpack.c.h.b16 %v1142
      %v1429 = vunpack.c.l.b16 %v1143
      %v1430 = vunpack.c.h.b16 %v1143
      %v1431 = vunpack.c.l.b16 %v1144
      %v1432 = vunpack.c.h.b16 %v1144
      %v1433 = vunpack.c.l.b16 %v1145
      %v1434 = vunpack.c.h.b16 %v1145
      %v1435 = vunpack.c.l.b16 %v1146
      %v1436 = vunpack.c.h.b16 %v1146
      %v1437 = vunpack.c.l.b16 %v1147
      %v1438 = vunpack.c.h.b16 %v1147
      %v1439 = vunpack.c.l.b16 %v1148
      %v1440 = vunpack.c.h.b16 %v1148
      %v1441 = vunpack.c.l.b16 %v1149
      %v1442 = vunpack.c.h.b16 %v1149
      %v1443 = vunpack.c.l.b16 %v1150
      %v1444 = vunpack.c.h.b16 %v1150
      %v1445 = vunpack.c.l.b16 %v1151
      %v1446 = vunpack.c.h.b16 %v1151
      %v1447 = vunpack.c.l.b16 %v1152
      %v1448 = vunpack.c.h.b16 %v1152
      %v1449 = vunpack.c.l.b16 %v1153
      %v1450 = vunpack.c.h.b16 %v1153
      %v1451 = vunpack.c.l.b16 %v1154
      %v1452 = vunpack.c.h.b16 %v1154
      %v1453 = vunpack.c.l.b16 %v1155
      %v1454 = vunpack.c.h.b16 %v1155
      %v1455 = vunpack.c.l.b16 %v1156
      %v1456 = vunpack.c.h.b16 %v1156
      %v1457 = vunpack.c.l.b16 %v1157
      %v1458 = vunpack.c.h.b16 %v1157
      %v1459 = vunpack.c.l.b16 %v1158
      %v1460 = vunpack.c.h.b16 %v1158
      %v1461 = vunpack.c.l.b16 %v1159
      %v1462 = vunpack.c.h.b16 %v1159
      %v1463 = vunpack.c.l.b16 %v1160
      %v1464 = vunpack.c.h.b16 %v1160
      %v1465 = vunpack.c.l.b16 %v1161
      %v1466 = vunpack.c.h.b16 %v1161
      %v1467 = vunpack.c.l.b16 %v1162
      %v1468 = vunpack.c.h.b16 %v1162
      %v1469 = vunpack.c.l.b16 %v1163
      %v1470 = vunpack.c.h.b16 %v1163
      %v1471 = vunpack.c.l.b16 %v1164
      %v1472 = vunpack.c.h.b16 %v1164
      %v1473 = vunpack.c.l.b16 %v1165
      %v1474 = vunpack.c.h.b16 %v1165
      %v1475 = vunpack.c.l.b16 %v1166
      %v1476 = vunpack.c.h.b16 %v1166
      %v1477 = vunpack.c.l.b16 %v1167
      %v1478 = vunpack.c.h.b16 %v1167
      %v1479 = vunpack.c.l.b16 %v1168
      %v1480 = vunpack.c.h.b16 %v1168
      %v1481 = vunpack.c.l.b16 %v1169
      %v1482 = vunpack.c.h.b16 %v1169
      %v1483 = vunpack.c.l.b16 %v1170
      %v1484 = vunpack.c.h.b16 %v1170
      %v1485 = vunpack.c.l.b16 %v1171
      %v1486 = vunpack.c.h.b16 %v1171
      %v1487 = vunpack.c.l.b16 %v1172
      %v1488 = vunpack.c.h.b16 %v1172
      %v1489 = vunpack.c.l.b16 %v1173
      %v1490 = vunpack.c.h.b16 %v1173
      %v1491 = vunpack.c.l.b16 %v1174
      %v1492 = vunpack.c.h.b16 %v1174
      %v1493 = vunpack.c.l.b16 %v1175
      %v1494 = vunpack.c.h.b16 %v1175
      %v1495 = vunpack.c.l.b16 %v1176
      %v1496 = vunpack.c.h.b16 %v1176
      %v1497 = vunpack.c.l.b16 %v1177
      %v1498 = vunpack.c.h.b16 %v1177
      %v1499 = vunpack.c.l.b16 %v1178
      %v1500 = vunpack.c.h.b16 %v1178
      %v1501 = vunpack.c.l.b16 %v1179
      %v1502 = vunpack.c.h.b16 %v1179
      %v1503 = vunpack.c.l.b16 %v1180
      %v1504 = vunpack.c.h.b16 %v1180
      %v1505 = vunpack.c.l.b16 %v1181
      %v1506 = vunpack.c.h.b16 %v1181
      %v1507 = vunpack.c.l.b16 %v1182
      %v1508 = vunpack.c.h.b16 %v1182
      %v1509 = vunpack.c.l.b16 %v1183
      %v1510 = vunpack.c.h.b16 %v1183
      %v1511 = vunpack.c.l.b16 %v1184
      %v1512 = vunpack.c.h.b16 %v1184
      %v1513 = vunpack.c.l.b16 %v1185
      %v1514 = vunpack.c.h.b16 %v1185
      %v1515 = vunpack.c.l.b16 %v1186
      %v1516 = vunpack.c.h.b16 %v1186
      %v1517 = vunpack.c.l.b16 %v1187
      %v1518 = vunpack.c.h.b16 %v1187
      %v1519 = vunpack.c.l.b16 %v1188
      %v1520 = vunpack.c.h.b16 %v1188
      %v1521 = vunpack.c.l.b16 %v1189
      %v1522 = vunpack.c.h.b16 %v1189
      %v1523 = vunpack.c.l.b16 %v1190
      %v1524 = vunpack.c.h.b16 %v1190
      %v1525 = vunpack.c.l.b16 %v1191
      %v1526 = vunpack.c.h.b16 %v1191
      %v1527 = vunpack.c.l.b16 %v1192
      %v1528 = vunpack.c.h.b16 %v1192
      %v1529 = vunpack.c.l.b16 %v1193
      %v1530 = vunpack.c.h.b16 %v1193
      %v1531 = vunpack.c.l.b16 %v1194
      %v1532 = vunpack.c.h.b16 %v1194
      %v1533 = vunpack.c.l.b16 %v1195
      %v1534 = vunpack.c.h.b16 %v1195
      %v1535 = vunpack.c.l.b16 %v1196
      %v1536 = vunpack.c.h.b16 %v1196
      %v1537 = vunpack.c.l.b16 %v1197
      %v1538 = vunpack.c.h.b16 %v1197
      %v1539 = vunpack.c.l.b16 %v1198
      %v1540 = vunpack.c.h.b16 %v1198
      %v1541 = vunpack.c.l.b16 %v1199
      %v1542 = vunpack.c.h.b16 %v1199
      %v1543 = vunpack.c.l.b16 %v1200
      %v1544 = vunpack.c.h.b16 %v1200
      %v1545 = vunpack.c.l.b16 %v1201
      %v1546 = vunpack.c.h.b16 %v1201
      %v1547 = vunpack.c.l.b16 %v1202
      %v1548 = vunpack.c.h.b16 %v1202
      %v1549 = vunpack.c.l.b16 %v1203
      %v1550 = vunpack.c.h.b16 %v1203
      %v1551 = vunpack.c.l.b16 %v1204
      %v1552 = vunpack.c.h.b16 %v1204
      %v1553 = vunpack.c.l.b16 %v1205
      %v1554 = vunpack.c.h.b16 %v1205
      %v1555 = vunpack.c.l.b16 %v1206
      %v1556 = vunpack.c.h.b16 %v1206
      %v1557 = vunpack.c.l.b16 %v1207
      %v1558 = vunpack.c.h.b16 %v1207
      %v1559 = vunpack.c.l.b16 %v1208
      %v1560 = vunpack.c.h.b16 %v1208
      %v1561 = vunpack.c.l.b16 %v1209
      %v1562 = vunpack.c.h.b16 %v1209
      %v1563 = vunpack.c.l.b16 %v1210
      %v1564 = vunpack.c.h.b16 %v1210
      %v1565 = vunpack.c.l.b16 %v1211
      %v1566 = vunpack.c.h.b16 %v1211
      %v1567 = vunpack.c.l.b16 %v1212
      %v1568 = vunpack.c.h.b16 %v1212
      %v1569 = vunpack.c.l.b16 %v1213
      %v1570 = vunpack.c.h.b16 %v1213
      %v1571 = vunpack.c.l.b16 %v1214
      %v1572 = vunpack.c.h.b16 %v1214
      %v1573 = vunpack.c.l.b16 %v1215
      %v1574 = vunpack.c.h.b16 %v1215
      %v1575 = vunpack.c.l.b16 %v1216
      %v1576 = vunpack.c.h.b16 %v1216
      %v1577 = vunpack.c.l.b16 %v1217
      %v1578 = vunpack.c.h.b16 %v1217
      %v1579 = vunpack.c.l.b16 %v1218
      %v1580 = vunpack.c.h.b16 %v1218
      %v1581 = vunpack.c.l.b16 %v1219
      %v1582 = vunpack.c.h.b16 %v1219
      %v1583 = vunpack.c.l.b16 %v1220
      %v1584 = vunpack.c.h.b16 %v1220
      %v1585 = vunpack.c.l.b16 %v1221
      %v1586 = vunpack.c.h.b16 %v1221
      %v1587 = vunpack.c.l.b16 %v1222
      %v1588 = vunpack.c.h.b16 %v1222
      %v1589 = vunpack.c.l.b16 %v1223
      %v1590 = vunpack.c.h.b16 %v1223
      %v1591 = vunpack.c.l.b16 %v1224
      %v1592 = vunpack.c.h.b16 %v1224
      %v1593 = vunpack.c.l.b16 %v1225
      %v1594 = vunpack.c.h.b16 %v1225
      %v1595 = vunpack.c.l.b16 %v1226
      %v1596 = vunpack.c.h.b16 %v1226
      %v1597 = vunpack.c.l.b16 %v1227
      %v1598 = vunpack.c.h.b16 %v1227
      %v1599 = vunpack.c.l.b16 %v1228
      %v1600 = vunpack.c.h.b16 %v1228
      %v1601 = vunpack.c.l.b16 %v1229
      %v1602 = vunpack.c.h.b16 %v1229
      %v1603 = vunpack.c.l.b16 %v1230
      %v1604 = vunpack.c.h.b16 %v1230
      %v1605 = vunpack.c.l.b16 %v1231
      %v1606 = vunpack.c.h.b16 %v1231
      %v1607 = vunpack.c.l.b16 %v1232
      %v1608 = vunpack.c.h.b16 %v1232
      %v1609 = vunpack.c.l.b16 %v1233
      %v1610 = vunpack.c.h.b16 %v1233
      %v1611 = vunpack.c.l.b16 %v1234
      %v1612 = vunpack.c.h.b16 %v1234
      %v1613 = vunpack.c.l.b16 %v1235
      %v1614 = vunpack.c.h.b16 %v1235
      %v1615 = vunpack.c.l.b16 %v1236
      %v1616 = vunpack.c.h.b16 %v1236
      %v1617 = vunpack.c.l.b16 %v1237
      %v1618 = vunpack.c.h.b16 %v1237
      %v1619 = vunpack.c.l.b16 %v1238
      %v1620 = vunpack.c.h.b16 %v1238
      %v1621 = vunpack.c.l.b16 %v1239
      %v1622 = vunpack.c.h.b16 %v1239
      %v1623 = vunpack.c.l.b16 %v1240
      %v1624 = vunpack.c.h.b16 %v1240
      %v1625 = vunpack.c.l.b16 %v1241
      %v1626 = vunpack.c.h.b16 %v1241
      %v1627 = vunpack.c.l.b16 %v1242
      %v1628 = vunpack.c.h.b16 %v1242
      %v1629 = vunpack.c.l.b16 %v1243
      %v1630 = vunpack.c.h.b16 %v1243
      %v1631 = vunpack.c.l.b16 %v1244
      %v1632 = vunpack.c.h.b16 %v1244
      %v1633 = vunpack.c.l.b16 %v1245
      %v1634 = vunpack.c.h.b16 %v1245
      %v1635 = vunpack.c.l.b16 %v1246
      %v1636 = vunpack.c.h.b16 %v1246
      %v1637 = vunpack.c.l.b16 %v1247
      %v1638 = vunpack.c.h.b16 %v1247
      %v1639 = vpack.c.b16 %v1391, %v1383
      %v1640 = vpack.c.b16 %v1392, %v1384
      %v1641 = vpack.c.b16 %v1393, %v1385
      %v1642 = vpack.c.b16 %v1394, %v1386
      %v1643 = vpack.c.b16 %v1395, %v1387
      %v1644 = vpack.c.b16 %v1396, %v1388
      %v1645 = vpack.c.b16 %v1397, %v1389
      %v1646 = vpack.c.b16 %v1398, %v1390
      %v1647 = vpack.c.b16 %v1407, %v1399
      %v1648 = vpack.c.b16 %v1408, %v1400
      %v1649 = vpack.c.b16 %v1409, %v1401
      %v1650 = vpack.c.b16 %v1410, %v1402
      %v1651 = vpack.c.b16 %v1411, %v1403
      %v1652 = vpack.c.b16 %v1412, %v1404
      %v1653 = vpack.c.b16 %v1413, %v1405
      %v1654 = vpack.c.b16 %v1414, %v1406
      %v1655 = vpack.c.b16 %v1423, %v1415
      %v1656 = vpack.c.b16 %v1424, %v1416
      %v1657 = vpack.c.b16 %v1425, %v1417
      %v1658 = vpack.c.b16 %v1426, %v1418
      %v1659 = vpack.c.b16 %v1427, %v1419
      %v1660 = vpack.c.b16 %v1428, %v1420
      %v1661 = vpack.c.b16 %v1429, %v1421
      %v1662 = vpack.c.b16 %v1430, %v1422
      %v1663 = vpack.c.b16 %v1439, %v1431
      %v1664 = vpack.c.b16 %v1440, %v1432
      %v1665 = vpack.c.b16 %v1441, %v1433
      %v1666 = vpack.c.b16 %v1442, %v1434
      %v1667 = vpack.c.b16 %v1443, %v1435
      %v1668 = vpack.c.b16 %v1444, %v1436
      %v1669 = vpack.c.b16 %v1445, %v1437
      %v1670 = vpack.c.b16 %v1446, %v1438
      %v1671 = vpack.c.b16 %v1455, %v1447
      %v1672 = vpack.c.b16 %v1456, %v1448
      %v1673 = vpack.c.b16 %v1457, %v1449
      %v1674 = vpack.c.b16 %v1458, %v1450
      %v1675 = vpack.c.b16 %v1459, %v1451
      %v1676 = vpack.c.b16 %v1460, %v1452
      %v1677 = vpack.c.b16 %v1461, %v1453
      %v1678 = vpack.c.b16 %v1462, %v1454
      %v1679 = vpack.c.b16 %v1471, %v1463
      %v1680 = vpack.c.b16 %v1472, %v1464
      %v1681 = vpack.c.b16 %v1473, %v1465
      %v1682 = vpack.c.b16 %v1474, %v1466
      %v1683 = vpack.c.b16 %v1475, %v1467
      %v1684 = vpack.c.b16 %v1476, %v1468
      %v1685 = vpack.c.b16 %v1477, %v1469
      %v1686 = vpack.c.b16 %v1478, %v1470
      %v1687 = vpack.c.b16 %v1487, %v1479
      %v1688 = vpack.c.b16 %v1488, %v1480
      %v1689 = vpack.c.b16 %v1489, %v1481
      %v1690 = vpack.c.b16 %v1490, %v1482
      %v1691 = vpack.c.b16 %v1491, %v1483
      %v1692 = vpack.c.b16 %v1492, %v1484
      %v1693 = vpack.c.b16 %v1493, %v1485
      %v1694 = vpack.c.b16 %v1494, %v1486
      %v1695 = vpack.c.b16 %v1503, %v1495
      %v1696 = vpack.c.b16 %v1504, %v1496
      %v1697 = vpack.c.b16 %v1505, %v1497
      %v1698 = vpack.c.b16 %v1506, %v1498
      %v1699 = vpack.c.b16 %v1507, %v1499
      %v1700 = vpack.c.b16 %v1508, %v1500
      %v1701 = vpack.c.b16 %v1509, %v1501
      %v1702 = vpack.c.b16 %v1510, %v1502
      %v1703 = vpack.c.b16 %v1519, %v1511
      %v1704 = vpack.c.b16 %v1520, %v1512
      %v1705 = vpack.c.b16 %v1521, %v1513
      %v1706 = vpack.c.b16 %v1522, %v1514
      %v1707 = vpack.c.b16 %v1523, %v1515
      %v1708 = vpack.c.b16 %v1524, %v1516
      %v1709 = vpack.c.b16 %v1525, %v1517
      %v1710 = vpack.c.b16 %v1526, %v1518
      %v1711 = vpack.c.b16 %v1535, %v1527
      %v1712 = vpack.c.b16 %v1536, %v1528
      %v1713 = vpack.c.b16 %v1537, %v1529
      %v1714 = vpack.c.b16 %v1538, %v1530
      %v1715 = vpack.c.b16 %v1539, %v1531
      %v1716 = vpack.c.b16 %v1540, %v1532
      %v1717 = vpack.c.b16 %v1541, %v1533
      %v1718 = vpack.c.b16 %v1542, %v1534
      %v1719 = vpack.c.b16 %v1551, %v1543
      %v1720 = vpack.c.b16 %v1552, %v1544
      %v1721 = vpack.c.b16 %v1553, %v1545
      %v1722 = vpack.c.b16 %v1554, %v1546
      %v1723 = vpack.c.b16 %v1555, %v1547
      %v1724 = vpack.c.b16 %v1556, %v1548
      %v1725 = vpack.c.b16 %v1557, %v1549
      %v1726 = vpack.c.b16 %v1558, %v1550
      %v1727 = vpack.c.b16 %v1567, %v1559
      %v1728 = vpack.c.b16 %v1568, %v1560
      %v1729 = vpack.c.b16 %v1569, %v1561
      %v1730 = vpack.c.b16 %v1570, %v1562
      %v1731 = vpack.c.b16 %v1571, %v1563
      %v1732 = vpack.c.b16 %v1572, %v1564
      %v1733 = vpack.c.b16 %v1573, %v1565
      %v1734 = vpack.c.b16 %v1574, %v1566
      %v1735 = vpack.c.b16 %v1583, %v1575
      %v1736 = vpack.c.b16 %v1584, %v1576
      %v1737 = vpack.c.b16 %v1585, %v1577
      %v1738 = vpack.c.b16 %v1586, %v1578
      %v1739 = vpack.c.b16 %v1587, %v1579
      %v1740 = vpack.c.b16 %v1588, %v1580
      %v1741 = vpack.c.b16 %v1589, %v1581
      %v1742 = vpack.c.b16 %v1590, %v1582
      %v1743 = vpack.c.b16 %v1599, %v1591
      %v1744 = vpack.c.b16 %v1600, %v1592
      %v1745 = vpack.c.b16 %v1601, %v1593
      %v1746 = vpack.c.b16 %v1602, %v1594
      %v1747 = vpack.c.b16 %v1603, %v1595
      %v1748 = vpack.c.b16 %v1604, %v1596
      %v1749 = vpack.c.b16 %v1605, %v1597
      %v1750 = vpack.c.b16 %v1606, %v1598
      %v1751 = vpack.c.b16 %v1615, %v1607
      %v1752 = vpack.c.b16 %v1616, %v1608
      %v1753 = vpack.c.b16 %v1617, %v1609
      %v1754 = vpack.c.b16 %v1618, %v1610
      %v1755 = vpack.c.b16 %v1619, %v1611
      %v1756 = vpack.c.b16 %v1620, %v1612
      %v1757 = vpack.c.b16 %v1621, %v1613
      %v1758 = vpack.c.b16 %v1622, %v1614
      %v1759 = vpack.c.b16 %v1631, %v1623
      %v1760 = vpack.c.b16 %v1632, %v1624
      %v1761 = vpack.c.b16 %v1633, %v1625
      %v1762 = vpack.c.b16 %v1634, %v1626
      %v1763 = vpack.c.b16 %v1635, %v1627
      %v1764 = vpack.c.b16 %v1636, %v1628
      %v1765 = vpack.c.b16 %v1637, %v1629
      %v1766 = vpack.c.b16 %v1638, %v1630
      %1895 = vmatprep.subr.bf16.mxu0 %v1696
      %1896 = vmatpush1.bf16.msra.mxu0 %v1695
      %1897 = vmatprep.subr.bf16.mxu0 %v1688
      %1898 = vmatpush1.bf16.msra.mxu0 %v1687
      %1899 = vmatprep.subr.bf16.mxu0 %v1680
      %1900 = vmatpush1.bf16.msra.mxu0 %v1679
      %1901 = vmatprep.subr.bf16.mxu0 %v1672
      %1902 = vmatpush1.bf16.msra.mxu0 %v1671
      %1903 = vmatprep.subr.bf16.mxu0 %v1664
      %1904 = vmatpush1.bf16.msra.mxu0 %v1663
      %1905 = vmatprep.subr.bf16.mxu0 %v1656
      %1906 = vmatpush1.bf16.msra.mxu0 %v1655
      %1907 = vmatprep.subr.bf16.mxu0 %v1648
      %1908 = vmatpush1.bf16.msra.mxu0 %v1647
      %1909 = vmatprep.subr.bf16.mxu0 %v1640
      %1910 = vmatpush1.bf16.msra.mxu0 %v1639
      %1911 = vmatprep.subr.bf16.mxu0 %v1760
      %1912 = vmatpush2.bf16.msra.mxu0 %v1759
      %1913 = vmatprep.subr.bf16.mxu0 %v1752
      %1914 = vmatpush2.bf16.msra.mxu0 %v1751
      %1915 = vmatprep.subr.bf16.mxu0 %v1744
      %1916 = vmatpush2.bf16.msra.mxu0 %v1743
      %1917 = vmatprep.subr.bf16.mxu0 %v1736
      %1918 = vmatpush2.bf16.msra.mxu0 %v1735
      %1919 = vmatprep.subr.bf16.mxu0 %v1728
      %1920 = vmatpush2.bf16.msra.mxu0 %v1727
      %1921 = vmatprep.subr.bf16.mxu0 %v1720
      %1922 = vmatpush2.bf16.msra.mxu0 %v1719
      %1923 = vmatprep.subr.bf16.mxu0 %v1712
      %1924 = vmatpush2.bf16.msra.mxu0 %v1711
      %1925 = vmatprep.subr.bf16.mxu0 %v1704
      %1926 = vmatpush2.bf16.msra.mxu0 %v1703
      %1927 = vmatprep.mubr.bf16.mxu0 %v1252
      %1928 = vmatmul.mubr.bf16.gmra.mxu0 %v1251
      %v1929 = vpop.f32.mrf.mxu0
      %v1930 = vadd.f32 0.0, %v1929
      %v1931 = vpop.f32.mrf.mxu0
      %v1932 = vadd.f32 0.0, %v1931
      %v1933 = vpop.f32.mrf.mxu0
      %v1934 = vpop.f32.mrf.mxu0
      %1935 = vdwg.mxu0
      %1936 = vmatprep.subr.bf16.mxu0 %v1698
      %1937 = vmatpush1.bf16.msra.mxu0 %v1697
      %1938 = vmatprep.subr.bf16.mxu0 %v1690
      %1939 = vmatpush1.bf16.msra.mxu0 %v1689
      %1940 = vmatprep.subr.bf16.mxu0 %v1682
      %1941 = vmatpush1.bf16.msra.mxu0 %v1681
      %1942 = vmatprep.subr.bf16.mxu0 %v1674
      %1943 = vmatpush1.bf16.msra.mxu0 %v1673
      %1944 = vmatprep.subr.bf16.mxu0 %v1666
      %1945 = vmatpush1.bf16.msra.mxu0 %v1665
      %1946 = vmatprep.subr.bf16.mxu0 %v1658
      %1947 = vmatpush1.bf16.msra.mxu0 %v1657
      %1948 = vmatprep.subr.bf16.mxu0 %v1650
      %1949 = vmatpush1.bf16.msra.mxu0 %v1649
      %1950 = vmatprep.subr.bf16.mxu0 %v1642
      %1951 = vmatpush1.bf16.msra.mxu0 %v1641
      %1952 = vmatprep.subr.bf16.mxu0 %v1762
      %1953 = vmatpush2.bf16.msra.mxu0 %v1761
      %1954 = vmatprep.subr.bf16.mxu0 %v1754
      %1955 = vmatpush2.bf16.msra.mxu0 %v1753
      %1956 = vmatprep.subr.bf16.mxu0 %v1746
      %1957 = vmatpush2.bf16.msra.mxu0 %v1745
      %1958 = vmatprep.subr.bf16.mxu0 %v1738
      %1959 = vmatpush2.bf16.msra.mxu0 %v1737
      %1960 = vmatprep.subr.bf16.mxu0 %v1730
      %1961 = vmatpush2.bf16.msra.mxu0 %v1729
      %1962 = vmatprep.subr.bf16.mxu0 %v1722
      %1963 = vmatpush2.bf16.msra.mxu0 %v1721
      %1964 = vmatprep.subr.bf16.mxu0 %v1714
      %1965 = vmatpush2.bf16.msra.mxu0 %v1713
      %1966 = vmatprep.subr.bf16.mxu0 %v1706
      %1967 = vmatpush2.bf16.msra.mxu0 %v1705
      %1968 = vmatprep.mubr.bf16.mxu0 %v1252
      %1969 = vmatmul.mubr.bf16.gmra.mxu0 %v1251
      %v1970 = vpop.f32.mrf.mxu0
      %v1971 = vadd.f32 0.0, %v1970
      %v1972 = vpop.f32.mrf.mxu0
      %v1973 = vadd.f32 0.0, %v1972
      %v1974 = vpop.f32.mrf.mxu0
      %v1975 = vpop.f32.mrf.mxu0
      %1976 = vdwg.mxu0
      %1977 = vmatprep.subr.bf16.mxu0 %v1700
      %1978 = vmatpush1.bf16.msra.mxu0 %v1699
      %1979 = vmatprep.subr.bf16.mxu0 %v1692
      %1980 = vmatpush1.bf16.msra.mxu0 %v1691
      %1981 = vmatprep.subr.bf16.mxu0 %v1684
      %1982 = vmatpush1.bf16.msra.mxu0 %v1683
      %1983 = vmatprep.subr.bf16.mxu0 %v1676
      %1984 = vmatpush1.bf16.msra.mxu0 %v1675
      %1985 = vmatprep.subr.bf16.mxu0 %v1668
      %1986 = vmatpush1.bf16.msra.mxu0 %v1667
      %1987 = vmatprep.subr.bf16.mxu0 %v1660
      %1988 = vmatpush1.bf16.msra.mxu0 %v1659
      %1989 = vmatprep.subr.bf16.mxu0 %v1652
      %1990 = vmatpush1.bf16.msra.mxu0 %v1651
      %1991 = vmatprep.subr.bf16.mxu0 %v1644
      %1992 = vmatpush1.bf16.msra.mxu0 %v1643
      %1993 = vmatprep.subr.bf16.mxu0 %v1764
      %1994 = vmatpush2.bf16.msra.mxu0 %v1763
      %1995 = vmatprep.subr.bf16.mxu0 %v1756
      %1996 = vmatpush2.bf16.msra.mxu0 %v1755
      %1997 = vmatprep.subr.bf16.mxu0 %v1748
      %1998 = vmatpush2.bf16.msra.mxu0 %v1747
      %1999 = vmatprep.subr.bf16.mxu0 %v1740
      %2000 = vmatpush2.bf16.msra.mxu0 %v1739
      %2001 = vmatprep.subr.bf16.mxu0 %v1732
      %2002 = vmatpush2.bf16.msra.mxu0 %v1731
      %2003 = vmatprep.subr.bf16.mxu0 %v1724
      %2004 = vmatpush2.bf16.msra.mxu0 %v1723
      %2005 = vmatprep.subr.bf16.mxu0 %v1716
      %2006 = vmatpush2.bf16.msra.mxu0 %v1715
      %2007 = vmatprep.subr.bf16.mxu0 %v1708
      %2008 = vmatpush2.bf16.msra.mxu0 %v1707
      %2009 = vmatprep.mubr.bf16.mxu0 %v1252
      %2010 = vmatmul.mubr.bf16.gmra.mxu0 %v1251
      %v2011 = vpop.f32.mrf.mxu0
      %v2012 = vadd.f32 0.0, %v2011
      %v2013 = vpop.f32.mrf.mxu0
      %v2014 = vadd.f32 0.0, %v2013
      %v2015 = vpop.f32.mrf.mxu0
      %v2016 = vpop.f32.mrf.mxu0
      %2017 = vdwg.mxu0
      %2018 = vmatprep.subr.bf16.mxu0 %v1702
      %2019 = vmatpush1.bf16.msra.mxu0 %v1701
      %2020 = vmatprep.subr.bf16.mxu0 %v1694
      %2021 = vmatpush1.bf16.msra.mxu0 %v1693
      %2022 = vmatprep.subr.bf16.mxu0 %v1686
      %2023 = vmatpush1.bf16.msra.mxu0 %v1685
      %2024 = vmatprep.subr.bf16.mxu0 %v1678
      %2025 = vmatpush1.bf16.msra.mxu0 %v1677
      %2026 = vmatprep.subr.bf16.mxu0 %v1670
      %2027 = vmatpush1.bf16.msra.mxu0 %v1669
      %2028 = vmatprep.subr.bf16.mxu0 %v1662
      %2029 = vmatpush1.bf16.msra.mxu0 %v1661
      %2030 = vmatprep.subr.bf16.mxu0 %v1654
      %2031 = vmatpush1.bf16.msra.mxu0 %v1653
      %2032 = vmatprep.subr.bf16.mxu0 %v1646
      %2033 = vmatpush1.bf16.msra.mxu0 %v1645
      %2034 = vmatprep.subr.bf16.mxu0 %v1766
      %2035 = vmatpush2.bf16.msra.mxu0 %v1765
      %2036 = vmatprep.subr.bf16.mxu0 %v1758
      %2037 = vmatpush2.bf16.msra.mxu0 %v1757
      %2038 = vmatprep.subr.bf16.mxu0 %v1750
      %2039 = vmatpush2.bf16.msra.mxu0 %v1749
      %2040 = vmatprep.subr.bf16.mxu0 %v1742
      %2041 = vmatpush2.bf16.msra.mxu0 %v1741
      %2042 = vmatprep.subr.bf16.mxu0 %v1734
      %2043 = vmatpush2.bf16.msra.mxu0 %v1733
      %2044 = vmatprep.subr.bf16.mxu0 %v1726
      %2045 = vmatpush2.bf16.msra.mxu0 %v1725
      %2046 = vmatprep.subr.bf16.mxu0 %v1718
      %2047 = vmatpush2.bf16.msra.mxu0 %v1717
      %2048 = vmatprep.subr.bf16.mxu0 %v1710
      %2049 = vmatpush2.bf16.msra.mxu0 %v1709
      %2050 = vmatprep.mubr.bf16.mxu0 %v1252
      %2051 = vmatmul.mubr.bf16.gmra.mxu0 %v1251
      %v2052 = vpop.f32.mrf.mxu0
      %v2053 = vadd.f32 0.0, %v2052
      %v2054 = vpop.f32.mrf.mxu0
      %v2055 = vadd.f32 0.0, %v2054
      %v2056 = vpop.f32.mrf.mxu0
      %v2057 = vpop.f32.mrf.mxu0
      %2058 = vdwg.mxu0
      %s2059 = smul.u32 0, 8
      %s2060 = smul.addr %s2059, 4
      %s2061 = scalar_lea.vmem [#allocation2], %s2060
      %v2062 = vld [vmem:[%s2061] sm:$0xff]
      %v2063 = vld [vmem:[%s2061 + $0x8] sm:$0xff]
      %v2064 = vunpack.c.l.bf16 %v2062
      %v2065 = vunpack.c.h.bf16 %v2062
      %v2066 = vunpack.c.l.bf16 %v2063
      %v2067 = vunpack.c.h.bf16 %v2063
      %v2068 = vadd.f32 %v2064, %v1930
      %v2069 = vadd.f32 %v2065, %v1932
      %v2070 = vadd.f32 %v2066, %v1971
      %v2071 = vadd.f32 %v2067, %v1973
      %s2072 = smul.u32 3, 8
      %s2073 = smul.addr %s2072, 4
      %s2074 = scalar_lea.vmem [#allocation2], %s2073
      %v2075 = vld [vmem:[%s2074 + $0x10] sm:$0xff]
      %v2076 = vld [vmem:[%s2074 + $0x18] sm:$0xff]
      %v2077 = vunpack.c.l.bf16 %v2075
      %v2078 = vunpack.c.h.bf16 %v2075
      %v2079 = vunpack.c.l.bf16 %v2076
      %v2080 = vunpack.c.h.bf16 %v2076
      %v2081 = vadd.f32 %v2077, %v2012
      %v2082 = vadd.f32 %v2078, %v2014
      %v2083 = vadd.f32 %v2079, %v2053
      %v2084 = vadd.f32 %v2080, %v2055
      %v2085 = vld [vmem:[#allocation4] sm:$0xff]
      %v2086 = vmul.f32 %v2068, 0.5
      %v2087 = vtanh.pop %v2086
      %v2088 = vmul.f32 %v2087, 0.5
      %v2089 = vadd.f32 %v2088, 0.5
      %v2090 = vmul.f32 %v2069, 0.5
      %v2091 = vtanh.pop %v2090
      %v2092 = vmul.f32 %v2091, 0.5
      %v2093 = vadd.f32 %v2092, 0.5
      %v2094 = vtanh.pop %v2070
      %v2095 = vmul.f32 %v2071, 0.5
      %v2096 = vtanh.pop %v2095
      %v2097 = vmul.f32 %v2096, 0.5
      %v2098 = vadd.f32 %v2097, 0.5
      %v2099 = vmul.f32 %v2093, %v2085
      %v2100 = vmul.f32 %v2089, %v2094
      %v2101 = vadd.f32 %v2099, %v2100
      %v2102 = vtanh.pop %v2101
      %v2103 = vmul.f32 %v2098, %v2102
      %v2104 = vld [vmem:[#allocation4 + $0x8] sm:$0xff]
      %v2105 = vmul.f32 %v2081, 0.5
      %v2106 = vtanh.pop %v2105
      %v2107 = vmul.f32 %v2106, 0.5
      %v2108 = vadd.f32 %v2107, 0.5
      %v2109 = vmul.f32 %v2082, 0.5
      %v2110 = vtanh.pop %v2109
      %v2111 = vmul.f32 %v2110, 0.5
      %v2112 = vadd.f32 %v2111, 0.5
      %v2113 = vtanh.pop %v2083
      %v2114 = vmul.f32 %v2084, 0.5
      %v2115 = vtanh.pop %v2114
      %v2116 = vmul.f32 %v2115, 0.5
      %v2117 = vadd.f32 %v2116, 0.5
      %v2118 = vmul.f32 %v2112, %v2104
      %v2119 = vmul.f32 %v2108, %v2113
      %v2120 = vadd.f32 %v2118, %v2119
      %v2121 = vtanh.pop %v2120
      %v2122 = vmul.f32 %v2117, %v2121
      %v2123 = vpack.c.bf16 %v2103, %v2103
      %v2124 = vpack.c.bf16 %v2122, %v2122
      %2125 = vst [vmem:[#allocation3] sm:$0xf] %v2123
      %2126 = vst [vmem:[#allocation3 + $0x4] sm:$0xf] %v2124
      %2127 = vst [vmem:[#allocation4] sm:$0xff] %v2101
      %2128 = vst [vmem:[#allocation4 + $0x8] sm:$0xff] %v2120
      %2129 = vst [vmem:[%s317] sm:$0xf] %v2123
      %s2130 = scalar_lea.vmem %s324, 12
      %2131 = vst [vmem:[%s2130] sm:$0xf] %v2124
      %v2132 = vld [vmem:[#allocation3] sm:$0xff]
      %v2133 = vld [vmem:[%s3] sm:$0xff]
      %v2134 = vld [vmem:[%s3 + $0x8] sm:$0xff]
      %v2135 = vld [vmem:[%s3 + $0x10] sm:$0xff]
      %v2136 = vld [vmem:[%s3 + $0x18] sm:$0xff]
      %v2137 = vld [vmem:[%s3 + $0x20] sm:$0xff]
      %v2138 = vld [vmem:[%s3 + $0x28] sm:$0xff]
      %v2139 = vld [vmem:[%s3 + $0x30] sm:$0xff]
      %v2140 = vld [vmem:[%s3 + $0x38] sm:$0xff]
      %v2141 = vld [vmem:[%s3 + $0x40] sm:$0xff]
      %v2142 = vld [vmem:[%s3 + $0x48] sm:$0xff]
      %v2143 = vld [vmem:[%s3 + $0x50] sm:$0xff]
      %v2144 = vld [vmem:[%s3 + $0x58] sm:$0xff]
      %v2145 = vld [vmem:[%s3 + $0x60] sm:$0xff]
      %v2146 = vld [vmem:[%s3 + $0x68] sm:$0xff]
      %v2147 = vld [vmem:[%s3 + $0x70] sm:$0xff]
      %v2148 = vld [vmem:[%s3 + $0x78] sm:$0xff]
      %v2149 = vld [vmem:[%s3 + $0x80] sm:$0xff]
      %v2150 = vld [vmem:[%s3 + $0x88] sm:$0xff]
      %v2151 = vld [vmem:[%s3 + $0x90] sm:$0xff]
      %v2152 = vld [vmem:[%s3 + $0x98] sm:$0xff]
      %v2153 = vld [vmem:[%s3 + $0xa0] sm:$0xff]
      %v2154 = vld [vmem:[%s3 + $0xa8] sm:$0xff]
      %v2155 = vld [vmem:[%s3 + $0xb0] sm:$0xff]
      %v2156 = vld [vmem:[%s3 + $0xb8] sm:$0xff]
      %v2157 = vld [vmem:[%s3 + $0xc0] sm:$0xff]
      %v2158 = vld [vmem:[%s3 + $0xc8] sm:$0xff]
      %v2159 = vld [vmem:[%s3 + $0xd0] sm:$0xff]
      %v2160 = vld [vmem:[%s3 + $0xd8] sm:$0xff]
      %v2161 = vld [vmem:[%s3 + $0xe0] sm:$0xff]
      %v2162 = vld [vmem:[%s3 + $0xe8] sm:$0xff]
      %v2163 = vld [vmem:[%s3 + $0xf0] sm:$0xff]
      %v2164 = vld [vmem:[%s3 + $0xf8] sm:$0xff]
      %v2165 = vld [vmem:[%s3 + $0x100] sm:$0xff]
      %v2166 = vld [vmem:[%s3 + $0x108] sm:$0xff]
      %v2167 = vld [vmem:[%s3 + $0x110] sm:$0xff]
      %v2168 = vld [vmem:[%s3 + $0x118] sm:$0xff]
      %v2169 = vld [vmem:[%s3 + $0x120] sm:$0xff]
      %v2170 = vld [vmem:[%s3 + $0x128] sm:$0xff]
      %v2171 = vld [vmem:[%s3 + $0x130] sm:$0xff]
      %v2172 = vld [vmem:[%s3 + $0x138] sm:$0xff]
      %v2173 = vld [vmem:[%s3 + $0x140] sm:$0xff]
      %v2174 = vld [vmem:[%s3 + $0x148] sm:$0xff]
      %v2175 = vld [vmem:[%s3 + $0x150] sm:$0xff]
      %v2176 = vld [vmem:[%s3 + $0x158] sm:$0xff]
      %v2177 = vld [vmem:[%s3 + $0x160] sm:$0xff]
      %v2178 = vld [vmem:[%s3 + $0x168] sm:$0xff]
      %v2179 = vld [vmem:[%s3 + $0x170] sm:$0xff]
      %v2180 = vld [vmem:[%s3 + $0x178] sm:$0xff]
      %v2181 = vld [vmem:[%s3 + $0x180] sm:$0xff]
      %v2182 = vld [vmem:[%s3 + $0x188] sm:$0xff]
      %v2183 = vld [vmem:[%s3 + $0x190] sm:$0xff]
      %v2184 = vld [vmem:[%s3 + $0x198] sm:$0xff]
      %v2185 = vld [vmem:[%s3 + $0x1a0] sm:$0xff]
      %v2186 = vld [vmem:[%s3 + $0x1a8] sm:$0xff]
      %v2187 = vld [vmem:[%s3 + $0x1b0] sm:$0xff]
      %v2188 = vld [vmem:[%s3 + $0x1b8] sm:$0xff]
      %v2189 = vld [vmem:[%s3 + $0x1c0] sm:$0xff]
      %v2190 = vld [vmem:[%s3 + $0x1c8] sm:$0xff]
      %v2191 = vld [vmem:[%s3 + $0x1d0] sm:$0xff]
      %v2192 = vld [vmem:[%s3 + $0x1d8] sm:$0xff]
      %v2193 = vld [vmem:[%s3 + $0x1e0] sm:$0xff]
      %v2194 = vld [vmem:[%s3 + $0x1e8] sm:$0xff]
      %v2195 = vld [vmem:[%s3 + $0x1f0] sm:$0xff]
      %v2196 = vld [vmem:[%s3 + $0x1f8] sm:$0xff]
      %v2197 = vld [vmem:[%s3 + $0x200] sm:$0xff]
      %v2198 = vld [vmem:[%s3 + $0x208] sm:$0xff]
      %v2199 = vld [vmem:[%s3 + $0x210] sm:$0xff]
      %v2200 = vld [vmem:[%s3 + $0x218] sm:$0xff]
      %v2201 = vld [vmem:[%s3 + $0x220] sm:$0xff]
      %v2202 = vld [vmem:[%s3 + $0x228] sm:$0xff]
      %v2203 = vld [vmem:[%s3 + $0x230] sm:$0xff]
      %v2204 = vld [vmem:[%s3 + $0x238] sm:$0xff]
      %v2205 = vld [vmem:[%s3 + $0x240] sm:$0xff]
      %v2206 = vld [vmem:[%s3 + $0x248] sm:$0xff]
      %v2207 = vld [vmem:[%s3 + $0x250] sm:$0xff]
      %v2208 = vld [vmem:[%s3 + $0x258] sm:$0xff]
      %v2209 = vld [vmem:[%s3 + $0x260] sm:$0xff]
      %v2210 = vld [vmem:[%s3 + $0x268] sm:$0xff]
      %v2211 = vld [vmem:[%s3 + $0x270] sm:$0xff]
      %v2212 = vld [vmem:[%s3 + $0x278] sm:$0xff]
      %v2213 = vld [vmem:[%s3 + $0x280] sm:$0xff]
      %v2214 = vld [vmem:[%s3 + $0x288] sm:$0xff]
      %v2215 = vld [vmem:[%s3 + $0x290] sm:$0xff]
      %v2216 = vld [vmem:[%s3 + $0x298] sm:$0xff]
      %v2217 = vld [vmem:[%s3 + $0x2a0] sm:$0xff]
      %v2218 = vld [vmem:[%s3 + $0x2a8] sm:$0xff]
      %v2219 = vld [vmem:[%s3 + $0x2b0] sm:$0xff]
      %v2220 = vld [vmem:[%s3 + $0x2b8] sm:$0xff]
      %v2221 = vld [vmem:[%s3 + $0x2c0] sm:$0xff]
      %v2222 = vld [vmem:[%s3 + $0x2c8] sm:$0xff]
      %v2223 = vld [vmem:[%s3 + $0x2d0] sm:$0xff]
      %v2224 = vld [vmem:[%s3 + $0x2d8] sm:$0xff]
      %v2225 = vld [vmem:[%s3 + $0x2e0] sm:$0xff]
      %v2226 = vld [vmem:[%s3 + $0x2e8] sm:$0xff]
      %v2227 = vld [vmem:[%s3 + $0x2f0] sm:$0xff]
      %v2228 = vld [vmem:[%s3 + $0x2f8] sm:$0xff]
      %v2229 = vld [vmem:[%s3 + $0x300] sm:$0xff]
      %v2230 = vld [vmem:[%s3 + $0x308] sm:$0xff]
      %v2231 = vld [vmem:[%s3 + $0x310] sm:$0xff]
      %v2232 = vld [vmem:[%s3 + $0x318] sm:$0xff]
      %v2233 = vld [vmem:[%s3 + $0x320] sm:$0xff]
      %v2234 = vld [vmem:[%s3 + $0x328] sm:$0xff]
      %v2235 = vld [vmem:[%s3 + $0x330] sm:$0xff]
      %v2236 = vld [vmem:[%s3 + $0x338] sm:$0xff]
      %v2237 = vld [vmem:[%s3 + $0x340] sm:$0xff]
      %v2238 = vld [vmem:[%s3 + $0x348] sm:$0xff]
      %v2239 = vld [vmem:[%s3 + $0x350] sm:$0xff]
      %v2240 = vld [vmem:[%s3 + $0x358] sm:$0xff]
      %v2241 = vld [vmem:[%s3 + $0x360] sm:$0xff]
      %v2242 = vld [vmem:[%s3 + $0x368] sm:$0xff]
      %v2243 = vld [vmem:[%s3 + $0x370] sm:$0xff]
      %v2244 = vld [vmem:[%s3 + $0x378] sm:$0xff]
      %v2245 = vld [vmem:[%s3 + $0x380] sm:$0xff]
      %v2246 = vld [vmem:[%s3 + $0x388] sm:$0xff]
      %v2247 = vld [vmem:[%s3 + $0x390] sm:$0xff]
      %v2248 = vld [vmem:[%s3 + $0x398] sm:$0xff]
      %v2249 = vld [vmem:[%s3 + $0x3a0] sm:$0xff]
      %v2250 = vld [vmem:[%s3 + $0x3a8] sm:$0xff]
      %v2251 = vld [vmem:[%s3 + $0x3b0] sm:$0xff]
      %v2252 = vld [vmem:[%s3 + $0x3b8] sm:$0xff]
      %v2253 = vld [vmem:[%s3 + $0x3c0] sm:$0xff]
      %v2254 = vld [vmem:[%s3 + $0x3c8] sm:$0xff]
      %v2255 = vld [vmem:[%s3 + $0x3d0] sm:$0xff]
      %v2256 = vld [vmem:[%s3 + $0x3d8] sm:$0xff]
      %v2257 = vld [vmem:[%s3 + $0x3e0] sm:$0xff]
      %v2258 = vld [vmem:[%s3 + $0x3e8] sm:$0xff]
      %v2259 = vld [vmem:[%s3 + $0x3f0] sm:$0xff]
      %v2260 = vld [vmem:[%s3 + $0x3f8] sm:$0xff]
      %v2262 = vunpack.c.l.b16 %v2132
      %v2263 = vunpack.c.h.b16 %v2132
      %v2264 = vpack.c.b16 %v2262, %v2262
      %v2265 = vpack.c.b16 %v2263, %v2263
      %v2396 = vunpack.c.l.b16 %v2133
      %v2397 = vunpack.c.h.b16 %v2133
      %v2398 = vunpack.c.l.b16 %v2134
      %v2399 = vunpack.c.h.b16 %v2134
      %v2400 = vunpack.c.l.b16 %v2135
      %v2401 = vunpack.c.h.b16 %v2135
      %v2402 = vunpack.c.l.b16 %v2136
      %v2403 = vunpack.c.h.b16 %v2136
      %v2404 = vunpack.c.l.b16 %v2137
      %v2405 = vunpack.c.h.b16 %v2137
      %v2406 = vunpack.c.l.b16 %v2138
      %v2407 = vunpack.c.h.b16 %v2138
      %v2408 = vunpack.c.l.b16 %v2139
      %v2409 = vunpack.c.h.b16 %v2139
      %v2410 = vunpack.c.l.b16 %v2140
      %v2411 = vunpack.c.h.b16 %v2140
      %v2412 = vunpack.c.l.b16 %v2141
      %v2413 = vunpack.c.h.b16 %v2141
      %v2414 = vunpack.c.l.b16 %v2142
      %v2415 = vunpack.c.h.b16 %v2142
      %v2416 = vunpack.c.l.b16 %v2143
      %v2417 = vunpack.c.h.b16 %v2143
      %v2418 = vunpack.c.l.b16 %v2144
      %v2419 = vunpack.c.h.b16 %v2144
      %v2420 = vunpack.c.l.b16 %v2145
      %v2421 = vunpack.c.h.b16 %v2145
      %v2422 = vunpack.c.l.b16 %v2146
      %v2423 = vunpack.c.h.b16 %v2146
      %v2424 = vunpack.c.l.b16 %v2147
      %v2425 = vunpack.c.h.b16 %v2147
      %v2426 = vunpack.c.l.b16 %v2148
      %v2427 = vunpack.c.h.b16 %v2148
      %v2428 = vunpack.c.l.b16 %v2149
      %v2429 = vunpack.c.h.b16 %v2149
      %v2430 = vunpack.c.l.b16 %v2150
      %v2431 = vunpack.c.h.b16 %v2150
      %v2432 = vunpack.c.l.b16 %v2151
      %v2433 = vunpack.c.h.b16 %v2151
      %v2434 = vunpack.c.l.b16 %v2152
      %v2435 = vunpack.c.h.b16 %v2152
      %v2436 = vunpack.c.l.b16 %v2153
      %v2437 = vunpack.c.h.b16 %v2153
      %v2438 = vunpack.c.l.b16 %v2154
      %v2439 = vunpack.c.h.b16 %v2154
      %v2440 = vunpack.c.l.b16 %v2155
      %v2441 = vunpack.c.h.b16 %v2155
      %v2442 = vunpack.c.l.b16 %v2156
      %v2443 = vunpack.c.h.b16 %v2156
      %v2444 = vunpack.c.l.b16 %v2157
      %v2445 = vunpack.c.h.b16 %v2157
      %v2446 = vunpack.c.l.b16 %v2158
      %v2447 = vunpack.c.h.b16 %v2158
      %v2448 = vunpack.c.l.b16 %v2159
      %v2449 = vunpack.c.h.b16 %v2159
      %v2450 = vunpack.c.l.b16 %v2160
      %v2451 = vunpack.c.h.b16 %v2160
      %v2452 = vunpack.c.l.b16 %v2161
      %v2453 = vunpack.c.h.b16 %v2161
      %v2454 = vunpack.c.l.b16 %v2162
      %v2455 = vunpack.c.h.b16 %v2162
      %v2456 = vunpack.c.l.b16 %v2163
      %v2457 = vunpack.c.h.b16 %v2163
      %v2458 = vunpack.c.l.b16 %v2164
      %v2459 = vunpack.c.h.b16 %v2164
      %v2460 = vunpack.c.l.b16 %v2165
      %v2461 = vunpack.c.h.b16 %v2165
      %v2462 = vunpack.c.l.b16 %v2166
      %v2463 = vunpack.c.h.b16 %v2166
      %v2464 = vunpack.c.l.b16 %v2167
      %v2465 = vunpack.c.h.b16 %v2167
      %v2466 = vunpack.c.l.b16 %v2168
      %v2467 = vunpack.c.h.b16 %v2168
      %v2468 = vunpack.c.l.b16 %v2169
      %v2469 = vunpack.c.h.b16 %v2169
      %v2470 = vunpack.c.l.b16 %v2170
      %v2471 = vunpack.c.h.b16 %v2170
      %v2472 = vunpack.c.l.b16 %v2171
      %v2473 = vunpack.c.h.b16 %v2171
      %v2474 = vunpack.c.l.b16 %v2172
      %v2475 = vunpack.c.h.b16 %v2172
      %v2476 = vunpack.c.l.b16 %v2173
      %v2477 = vunpack.c.h.b16 %v2173
      %v2478 = vunpack.c.l.b16 %v2174
      %v2479 = vunpack.c.h.b16 %v2174
      %v2480 = vunpack.c.l.b16 %v2175
      %v2481 = vunpack.c.h.b16 %v2175
      %v2482 = vunpack.c.l.b16 %v2176
      %v2483 = vunpack.c.h.b16 %v2176
      %v2484 = vunpack.c.l.b16 %v2177
      %v2485 = vunpack.c.h.b16 %v2177
      %v2486 = vunpack.c.l.b16 %v2178
      %v2487 = vunpack.c.h.b16 %v2178
      %v2488 = vunpack.c.l.b16 %v2179
      %v2489 = vunpack.c.h.b16 %v2179
      %v2490 = vunpack.c.l.b16 %v2180
      %v2491 = vunpack.c.h.b16 %v2180
      %v2492 = vunpack.c.l.b16 %v2181
      %v2493 = vunpack.c.h.b16 %v2181
      %v2494 = vunpack.c.l.b16 %v2182
      %v2495 = vunpack.c.h.b16 %v2182
      %v2496 = vunpack.c.l.b16 %v2183
      %v2497 = vunpack.c.h.b16 %v2183
      %v2498 = vunpack.c.l.b16 %v2184
      %v2499 = vunpack.c.h.b16 %v2184
      %v2500 = vunpack.c.l.b16 %v2185
      %v2501 = vunpack.c.h.b16 %v2185
      %v2502 = vunpack.c.l.b16 %v2186
      %v2503 = vunpack.c.h.b16 %v2186
      %v2504 = vunpack.c.l.b16 %v2187
      %v2505 = vunpack.c.h.b16 %v2187
      %v2506 = vunpack.c.l.b16 %v2188
      %v2507 = vunpack.c.h.b16 %v2188
      %v2508 = vunpack.c.l.b16 %v2189
      %v2509 = vunpack.c.h.b16 %v2189
      %v2510 = vunpack.c.l.b16 %v2190
      %v2511 = vunpack.c.h.b16 %v2190
      %v2512 = vunpack.c.l.b16 %v2191
      %v2513 = vunpack.c.h.b16 %v2191
      %v2514 = vunpack.c.l.b16 %v2192
      %v2515 = vunpack.c.h.b16 %v2192
      %v2516 = vunpack.c.l.b16 %v2193
      %v2517 = vunpack.c.h.b16 %v2193
      %v2518 = vunpack.c.l.b16 %v2194
      %v2519 = vunpack.c.h.b16 %v2194
      %v2520 = vunpack.c.l.b16 %v2195
      %v2521 = vunpack.c.h.b16 %v2195
      %v2522 = vunpack.c.l.b16 %v2196
      %v2523 = vunpack.c.h.b16 %v2196
      %v2524 = vunpack.c.l.b16 %v2197
      %v2525 = vunpack.c.h.b16 %v2197
      %v2526 = vunpack.c.l.b16 %v2198
      %v2527 = vunpack.c.h.b16 %v2198
      %v2528 = vunpack.c.l.b16 %v2199
      %v2529 = vunpack.c.h.b16 %v2199
      %v2530 = vunpack.c.l.b16 %v2200
      %v2531 = vunpack.c.h.b16 %v2200
      %v2532 = vunpack.c.l.b16 %v2201
      %v2533 = vunpack.c.h.b16 %v2201
      %v2534 = vunpack.c.l.b16 %v2202
      %v2535 = vunpack.c.h.b16 %v2202
      %v2536 = vunpack.c.l.b16 %v2203
      %v2537 = vunpack.c.h.b16 %v2203
      %v2538 = vunpack.c.l.b16 %v2204
      %v2539 = vunpack.c.h.b16 %v2204
      %v2540 = vunpack.c.l.b16 %v2205
      %v2541 = vunpack.c.h.b16 %v2205
      %v2542 = vunpack.c.l.b16 %v2206
      %v2543 = vunpack.c.h.b16 %v2206
      %v2544 = vunpack.c.l.b16 %v2207
      %v2545 = vunpack.c.h.b16 %v2207
      %v2546 = vunpack.c.l.b16 %v2208
      %v2547 = vunpack.c.h.b16 %v2208
      %v2548 = vunpack.c.l.b16 %v2209
      %v2549 = vunpack.c.h.b16 %v2209
      %v2550 = vunpack.c.l.b16 %v2210
      %v2551 = vunpack.c.h.b16 %v2210
      %v2552 = vunpack.c.l.b16 %v2211
      %v2553 = vunpack.c.h.b16 %v2211
      %v2554 = vunpack.c.l.b16 %v2212
      %v2555 = vunpack.c.h.b16 %v2212
      %v2556 = vunpack.c.l.b16 %v2213
      %v2557 = vunpack.c.h.b16 %v2213
      %v2558 = vunpack.c.l.b16 %v2214
      %v2559 = vunpack.c.h.b16 %v2214
      %v2560 = vunpack.c.l.b16 %v2215
      %v2561 = vunpack.c.h.b16 %v2215
      %v2562 = vunpack.c.l.b16 %v2216
      %v2563 = vunpack.c.h.b16 %v2216
      %v2564 = vunpack.c.l.b16 %v2217
      %v2565 = vunpack.c.h.b16 %v2217
      %v2566 = vunpack.c.l.b16 %v2218
      %v2567 = vunpack.c.h.b16 %v2218
      %v2568 = vunpack.c.l.b16 %v2219
      %v2569 = vunpack.c.h.b16 %v2219
      %v2570 = vunpack.c.l.b16 %v2220
      %v2571 = vunpack.c.h.b16 %v2220
      %v2572 = vunpack.c.l.b16 %v2221
      %v2573 = vunpack.c.h.b16 %v2221
      %v2574 = vunpack.c.l.b16 %v2222
      %v2575 = vunpack.c.h.b16 %v2222
      %v2576 = vunpack.c.l.b16 %v2223
      %v2577 = vunpack.c.h.b16 %v2223
      %v2578 = vunpack.c.l.b16 %v2224
      %v2579 = vunpack.c.h.b16 %v2224
      %v2580 = vunpack.c.l.b16 %v2225
      %v2581 = vunpack.c.h.b16 %v2225
      %v2582 = vunpack.c.l.b16 %v2226
      %v2583 = vunpack.c.h.b16 %v2226
      %v2584 = vunpack.c.l.b16 %v2227
      %v2585 = vunpack.c.h.b16 %v2227
      %v2586 = vunpack.c.l.b16 %v2228
      %v2587 = vunpack.c.h.b16 %v2228
      %v2588 = vunpack.c.l.b16 %v2229
      %v2589 = vunpack.c.h.b16 %v2229
      %v2590 = vunpack.c.l.b16 %v2230
      %v2591 = vunpack.c.h.b16 %v2230
      %v2592 = vunpack.c.l.b16 %v2231
      %v2593 = vunpack.c.h.b16 %v2231
      %v2594 = vunpack.c.l.b16 %v2232
      %v2595 = vunpack.c.h.b16 %v2232
      %v2596 = vunpack.c.l.b16 %v2233
      %v2597 = vunpack.c.h.b16 %v2233
      %v2598 = vunpack.c.l.b16 %v2234
      %v2599 = vunpack.c.h.b16 %v2234
      %v2600 = vunpack.c.l.b16 %v2235
      %v2601 = vunpack.c.h.b16 %v2235
      %v2602 = vunpack.c.l.b16 %v2236
      %v2603 = vunpack.c.h.b16 %v2236
      %v2604 = vunpack.c.l.b16 %v2237
      %v2605 = vunpack.c.h.b16 %v2237
      %v2606 = vunpack.c.l.b16 %v2238
      %v2607 = vunpack.c.h.b16 %v2238
      %v2608 = vunpack.c.l.b16 %v2239
      %v2609 = vunpack.c.h.b16 %v2239
      %v2610 = vunpack.c.l.b16 %v2240
      %v2611 = vunpack.c.h.b16 %v2240
      %v2612 = vunpack.c.l.b16 %v2241
      %v2613 = vunpack.c.h.b16 %v2241
      %v2614 = vunpack.c.l.b16 %v2242
      %v2615 = vunpack.c.h.b16 %v2242
      %v2616 = vunpack.c.l.b16 %v2243
      %v2617 = vunpack.c.h.b16 %v2243
      %v2618 = vunpack.c.l.b16 %v2244
      %v2619 = vunpack.c.h.b16 %v2244
      %v2620 = vunpack.c.l.b16 %v2245
      %v2621 = vunpack.c.h.b16 %v2245
      %v2622 = vunpack.c.l.b16 %v2246
      %v2623 = vunpack.c.h.b16 %v2246
      %v2624 = vunpack.c.l.b16 %v2247
      %v2625 = vunpack.c.h.b16 %v2247
      %v2626 = vunpack.c.l.b16 %v2248
      %v2627 = vunpack.c.h.b16 %v2248
      %v2628 = vunpack.c.l.b16 %v2249
      %v2629 = vunpack.c.h.b16 %v2249
      %v2630 = vunpack.c.l.b16 %v2250
      %v2631 = vunpack.c.h.b16 %v2250
      %v2632 = vunpack.c.l.b16 %v2251
      %v2633 = vunpack.c.h.b16 %v2251
      %v2634 = vunpack.c.l.b16 %v2252
      %v2635 = vunpack.c.h.b16 %v2252
      %v2636 = vunpack.c.l.b16 %v2253
      %v2637 = vunpack.c.h.b16 %v2253
      %v2638 = vunpack.c.l.b16 %v2254
      %v2639 = vunpack.c.h.b16 %v2254
      %v2640 = vunpack.c.l.b16 %v2255
      %v2641 = vunpack.c.h.b16 %v2255
      %v2642 = vunpack.c.l.b16 %v2256
      %v2643 = vunpack.c.h.b16 %v2256
      %v2644 = vunpack.c.l.b16 %v2257
      %v2645 = vunpack.c.h.b16 %v2257
      %v2646 = vunpack.c.l.b16 %v2258
      %v2647 = vunpack.c.h.b16 %v2258
      %v2648 = vunpack.c.l.b16 %v2259
      %v2649 = vunpack.c.h.b16 %v2259
      %v2650 = vunpack.c.l.b16 %v2260
      %v2651 = vunpack.c.h.b16 %v2260
      %v2652 = vpack.c.b16 %v2404, %v2396
      %v2653 = vpack.c.b16 %v2405, %v2397
      %v2654 = vpack.c.b16 %v2406, %v2398
      %v2655 = vpack.c.b16 %v2407, %v2399
      %v2656 = vpack.c.b16 %v2408, %v2400
      %v2657 = vpack.c.b16 %v2409, %v2401
      %v2658 = vpack.c.b16 %v2410, %v2402
      %v2659 = vpack.c.b16 %v2411, %v2403
      %v2660 = vpack.c.b16 %v2420, %v2412
      %v2661 = vpack.c.b16 %v2421, %v2413
      %v2662 = vpack.c.b16 %v2422, %v2414
      %v2663 = vpack.c.b16 %v2423, %v2415
      %v2664 = vpack.c.b16 %v2424, %v2416
      %v2665 = vpack.c.b16 %v2425, %v2417
      %v2666 = vpack.c.b16 %v2426, %v2418
      %v2667 = vpack.c.b16 %v2427, %v2419
      %v2668 = vpack.c.b16 %v2436, %v2428
      %v2669 = vpack.c.b16 %v2437, %v2429
      %v2670 = vpack.c.b16 %v2438, %v2430
      %v2671 = vpack.c.b16 %v2439, %v2431
      %v2672 = vpack.c.b16 %v2440, %v2432
      %v2673 = vpack.c.b16 %v2441, %v2433
      %v2674 = vpack.c.b16 %v2442, %v2434
      %v2675 = vpack.c.b16 %v2443, %v2435
      %v2676 = vpack.c.b16 %v2452, %v2444
      %v2677 = vpack.c.b16 %v2453, %v2445
      %v2678 = vpack.c.b16 %v2454, %v2446
      %v2679 = vpack.c.b16 %v2455, %v2447
      %v2680 = vpack.c.b16 %v2456, %v2448
      %v2681 = vpack.c.b16 %v2457, %v2449
      %v2682 = vpack.c.b16 %v2458, %v2450
      %v2683 = vpack.c.b16 %v2459, %v2451
      %v2684 = vpack.c.b16 %v2468, %v2460
      %v2685 = vpack.c.b16 %v2469, %v2461
      %v2686 = vpack.c.b16 %v2470, %v2462
      %v2687 = vpack.c.b16 %v2471, %v2463
      %v2688 = vpack.c.b16 %v2472, %v2464
      %v2689 = vpack.c.b16 %v2473, %v2465
      %v2690 = vpack.c.b16 %v2474, %v2466
      %v2691 = vpack.c.b16 %v2475, %v2467
      %v2692 = vpack.c.b16 %v2484, %v2476
      %v2693 = vpack.c.b16 %v2485, %v2477
      %v2694 = vpack.c.b16 %v2486, %v2478
      %v2695 = vpack.c.b16 %v2487, %v2479
      %v2696 = vpack.c.b16 %v2488, %v2480
      %v2697 = vpack.c.b16 %v2489, %v2481
      %v2698 = vpack.c.b16 %v2490, %v2482
      %v2699 = vpack.c.b16 %v2491, %v2483
      %v2700 = vpack.c.b16 %v2500, %v2492
      %v2701 = vpack.c.b16 %v2501, %v2493
      %v2702 = vpack.c.b16 %v2502, %v2494
      %v2703 = vpack.c.b16 %v2503, %v2495
      %v2704 = vpack.c.b16 %v2504, %v2496
      %v2705 = vpack.c.b16 %v2505, %v2497
      %v2706 = vpack.c.b16 %v2506, %v2498
      %v2707 = vpack.c.b16 %v2507, %v2499
      %v2708 = vpack.c.b16 %v2516, %v2508
      %v2709 = vpack.c.b16 %v2517, %v2509
      %v2710 = vpack.c.b16 %v2518, %v2510
      %v2711 = vpack.c.b16 %v2519, %v2511
      %v2712 = vpack.c.b16 %v2520, %v2512
      %v2713 = vpack.c.b16 %v2521, %v2513
      %v2714 = vpack.c.b16 %v2522, %v2514
      %v2715 = vpack.c.b16 %v2523, %v2515
      %v2716 = vpack.c.b16 %v2532, %v2524
      %v2717 = vpack.c.b16 %v2533, %v2525
      %v2718 = vpack.c.b16 %v2534, %v2526
      %v2719 = vpack.c.b16 %v2535, %v2527
      %v2720 = vpack.c.b16 %v2536, %v2528
      %v2721 = vpack.c.b16 %v2537, %v2529
      %v2722 = vpack.c.b16 %v2538, %v2530
      %v2723 = vpack.c.b16 %v2539, %v2531
      %v2724 = vpack.c.b16 %v2548, %v2540
      %v2725 = vpack.c.b16 %v2549, %v2541
      %v2726 = vpack.c.b16 %v2550, %v2542
      %v2727 = vpack.c.b16 %v2551, %v2543
      %v2728 = vpack.c.b16 %v2552, %v2544
      %v2729 = vpack.c.b16 %v2553, %v2545
      %v2730 = vpack.c.b16 %v2554, %v2546
      %v2731 = vpack.c.b16 %v2555, %v2547
      %v2732 = vpack.c.b16 %v2564, %v2556
      %v2733 = vpack.c.b16 %v2565, %v2557
      %v2734 = vpack.c.b16 %v2566, %v2558
      %v2735 = vpack.c.b16 %v2567, %v2559
      %v2736 = vpack.c.b16 %v2568, %v2560
      %v2737 = vpack.c.b16 %v2569, %v2561
      %v2738 = vpack.c.b16 %v2570, %v2562
      %v2739 = vpack.c.b16 %v2571, %v2563
      %v2740 = vpack.c.b16 %v2580, %v2572
      %v2741 = vpack.c.b16 %v2581, %v2573
      %v2742 = vpack.c.b16 %v2582, %v2574
      %v2743 = vpack.c.b16 %v2583, %v2575
      %v2744 = vpack.c.b16 %v2584, %v2576
      %v2745 = vpack.c.b16 %v2585, %v2577
      %v2746 = vpack.c.b16 %v2586, %v2578
      %v2747 = vpack.c.b16 %v2587, %v2579
      %v2748 = vpack.c.b16 %v2596, %v2588
      %v2749 = vpack.c.b16 %v2597, %v2589
      %v2750 = vpack.c.b16 %v2598, %v2590
      %v2751 = vpack.c.b16 %v2599, %v2591
      %v2752 = vpack.c.b16 %v2600, %v2592
      %v2753 = vpack.c.b16 %v2601, %v2593
      %v2754 = vpack.c.b16 %v2602, %v2594
      %v2755 = vpack.c.b16 %v2603, %v2595
      %v2756 = vpack.c.b16 %v2612, %v2604
      %v2757 = vpack.c.b16 %v2613, %v2605
      %v2758 = vpack.c.b16 %v2614, %v2606
      %v2759 = vpack.c.b16 %v2615, %v2607
      %v2760 = vpack.c.b16 %v2616, %v2608
      %v2761 = vpack.c.b16 %v2617, %v2609
      %v2762 = vpack.c.b16 %v2618, %v2610
      %v2763 = vpack.c.b16 %v2619, %v2611
      %v2764 = vpack.c.b16 %v2628, %v2620
      %v2765 = vpack.c.b16 %v2629, %v2621
      %v2766 = vpack.c.b16 %v2630, %v2622
      %v2767 = vpack.c.b16 %v2631, %v2623
      %v2768 = vpack.c.b16 %v2632, %v2624
      %v2769 = vpack.c.b16 %v2633, %v2625
      %v2770 = vpack.c.b16 %v2634, %v2626
      %v2771 = vpack.c.b16 %v2635, %v2627
      %v2772 = vpack.c.b16 %v2644, %v2636
      %v2773 = vpack.c.b16 %v2645, %v2637
      %v2774 = vpack.c.b16 %v2646, %v2638
      %v2775 = vpack.c.b16 %v2647, %v2639
      %v2776 = vpack.c.b16 %v2648, %v2640
      %v2777 = vpack.c.b16 %v2649, %v2641
      %v2778 = vpack.c.b16 %v2650, %v2642
      %v2779 = vpack.c.b16 %v2651, %v2643
      %2908 = vmatprep.subr.bf16.mxu0 %v2709
      %2909 = vmatpush1.bf16.msra.mxu0 %v2708
      %2910 = vmatprep.subr.bf16.mxu0 %v2701
      %2911 = vmatpush1.bf16.msra.mxu0 %v2700
      %2912 = vmatprep.subr.bf16.mxu0 %v2693
      %2913 = vmatpush1.bf16.msra.mxu0 %v2692
      %2914 = vmatprep.subr.bf16.mxu0 %v2685
      %2915 = vmatpush1.bf16.msra.mxu0 %v2684
      %2916 = vmatprep.subr.bf16.mxu0 %v2677
      %2917 = vmatpush1.bf16.msra.mxu0 %v2676
      %2918 = vmatprep.subr.bf16.mxu0 %v2669
      %2919 = vmatpush1.bf16.msra.mxu0 %v2668
      %2920 = vmatprep.subr.bf16.mxu0 %v2661
      %2921 = vmatpush1.bf16.msra.mxu0 %v2660
      %2922 = vmatprep.subr.bf16.mxu0 %v2653
      %2923 = vmatpush1.bf16.msra.mxu0 %v2652
      %2924 = vmatprep.subr.bf16.mxu0 %v2773
      %2925 = vmatpush2.bf16.msra.mxu0 %v2772
      %2926 = vmatprep.subr.bf16.mxu0 %v2765
      %2927 = vmatpush2.bf16.msra.mxu0 %v2764
      %2928 = vmatprep.subr.bf16.mxu0 %v2757
      %2929 = vmatpush2.bf16.msra.mxu0 %v2756
      %2930 = vmatprep.subr.bf16.mxu0 %v2749
      %2931 = vmatpush2.bf16.msra.mxu0 %v2748
      %2932 = vmatprep.subr.bf16.mxu0 %v2741
      %2933 = vmatpush2.bf16.msra.mxu0 %v2740
      %2934 = vmatprep.subr.bf16.mxu0 %v2733
      %2935 = vmatpush2.bf16.msra.mxu0 %v2732
      %2936 = vmatprep.subr.bf16.mxu0 %v2725
      %2937 = vmatpush2.bf16.msra.mxu0 %v2724
      %2938 = vmatprep.subr.bf16.mxu0 %v2717
      %2939 = vmatpush2.bf16.msra.mxu0 %v2716
      %2940 = vmatprep.mubr.bf16.mxu0 %v2265
      %2941 = vmatmul.mubr.bf16.gmra.mxu0 %v2264
      %v2942 = vpop.f32.mrf.mxu0
      %v2943 = vadd.f32 0.0, %v2942
      %v2944 = vpop.f32.mrf.mxu0
      %v2945 = vadd.f32 0.0, %v2944
      %v2946 = vpop.f32.mrf.mxu0
      %v2947 = vpop.f32.mrf.mxu0
      %2948 = vdwg.mxu0
      %2949 = vmatprep.subr.bf16.mxu0 %v2711
      %2950 = vmatpush1.bf16.msra.mxu0 %v2710
      %2951 = vmatprep.subr.bf16.mxu0 %v2703
      %2952 = vmatpush1.bf16.msra.mxu0 %v2702
      %2953 = vmatprep.subr.bf16.mxu0 %v2695
      %2954 = vmatpush1.bf16.msra.mxu0 %v2694
      %2955 = vmatprep.subr.bf16.mxu0 %v2687
      %2956 = vmatpush1.bf16.msra.mxu0 %v2686
      %2957 = vmatprep.subr.bf16.mxu0 %v2679
      %2958 = vmatpush1.bf16.msra.mxu0 %v2678
      %2959 = vmatprep.subr.bf16.mxu0 %v2671
      %2960 = vmatpush1.bf16.msra.mxu0 %v2670
      %2961 = vmatprep.subr.bf16.mxu0 %v2663
      %2962 = vmatpush1.bf16.msra.mxu0 %v2662
      %2963 = vmatprep.subr.bf16.mxu0 %v2655
      %2964 = vmatpush1.bf16.msra.mxu0 %v2654
      %2965 = vmatprep.subr.bf16.mxu0 %v2775
      %2966 = vmatpush2.bf16.msra.mxu0 %v2774
      %2967 = vmatprep.subr.bf16.mxu0 %v2767
      %2968 = vmatpush2.bf16.msra.mxu0 %v2766
      %2969 = vmatprep.subr.bf16.mxu0 %v2759
      %2970 = vmatpush2.bf16.msra.mxu0 %v2758
      %2971 = vmatprep.subr.bf16.mxu0 %v2751
      %2972 = vmatpush2.bf16.msra.mxu0 %v2750
      %2973 = vmatprep.subr.bf16.mxu0 %v2743
      %2974 = vmatpush2.bf16.msra.mxu0 %v2742
      %2975 = vmatprep.subr.bf16.mxu0 %v2735
      %2976 = vmatpush2.bf16.msra.mxu0 %v2734
      %2977 = vmatprep.subr.bf16.mxu0 %v2727
      %2978 = vmatpush2.bf16.msra.mxu0 %v2726
      %2979 = vmatprep.subr.bf16.mxu0 %v2719
      %2980 = vmatpush2.bf16.msra.mxu0 %v2718
      %2981 = vmatprep.mubr.bf16.mxu0 %v2265
      %2982 = vmatmul.mubr.bf16.gmra.mxu0 %v2264
      %v2983 = vpop.f32.mrf.mxu0
      %v2984 = vadd.f32 0.0, %v2983
      %v2985 = vpop.f32.mrf.mxu0
      %v2986 = vadd.f32 0.0, %v2985
      %v2987 = vpop.f32.mrf.mxu0
      %v2988 = vpop.f32.mrf.mxu0
      %2989 = vdwg.mxu0
      %2990 = vmatprep.subr.bf16.mxu0 %v2713
      %2991 = vmatpush1.bf16.msra.mxu0 %v2712
      %2992 = vmatprep.subr.bf16.mxu0 %v2705
      %2993 = vmatpush1.bf16.msra.mxu0 %v2704
      %2994 = vmatprep.subr.bf16.mxu0 %v2697
      %2995 = vmatpush1.bf16.msra.mxu0 %v2696
      %2996 = vmatprep.subr.bf16.mxu0 %v2689
      %2997 = vmatpush1.bf16.msra.mxu0 %v2688
      %2998 = vmatprep.subr.bf16.mxu0 %v2681
      %2999 = vmatpush1.bf16.msra.mxu0 %v2680
      %3000 = vmatprep.subr.bf16.mxu0 %v2673
      %3001 = vmatpush1.bf16.msra.mxu0 %v2672
      %3002 = vmatprep.subr.bf16.mxu0 %v2665
      %3003 = vmatpush1.bf16.msra.mxu0 %v2664
      %3004 = vmatprep.subr.bf16.mxu0 %v2657
      %3005 = vmatpush1.bf16.msra.mxu0 %v2656
      %3006 = vmatprep.subr.bf16.mxu0 %v2777
      %3007 = vmatpush2.bf16.msra.mxu0 %v2776
      %3008 = vmatprep.subr.bf16.mxu0 %v2769
      %3009 = vmatpush2.bf16.msra.mxu0 %v2768
      %3010 = vmatprep.subr.bf16.mxu0 %v2761
      %3011 = vmatpush2.bf16.msra.mxu0 %v2760
      %3012 = vmatprep.subr.bf16.mxu0 %v2753
      %3013 = vmatpush2.bf16.msra.mxu0 %v2752
      %3014 = vmatprep.subr.bf16.mxu0 %v2745
      %3015 = vmatpush2.bf16.msra.mxu0 %v2744
      %3016 = vmatprep.subr.bf16.mxu0 %v2737
      %3017 = vmatpush2.bf16.msra.mxu0 %v2736
      %3018 = vmatprep.subr.bf16.mxu0 %v2729
      %3019 = vmatpush2.bf16.msra.mxu0 %v2728
      %3020 = vmatprep.subr.bf16.mxu0 %v2721
      %3021 = vmatpush2.bf16.msra.mxu0 %v2720
      %3022 = vmatprep.mubr.bf16.mxu0 %v2265
      %3023 = vmatmul.mubr.bf16.gmra.mxu0 %v2264
      %v3024 = vpop.f32.mrf.mxu0
      %v3025 = vadd.f32 0.0, %v3024
      %v3026 = vpop.f32.mrf.mxu0
      %v3027 = vadd.f32 0.0, %v3026
      %v3028 = vpop.f32.mrf.mxu0
      %v3029 = vpop.f32.mrf.mxu0
      %3030 = vdwg.mxu0
      %3031 = vmatprep.subr.bf16.mxu0 %v2715
      %3032 = vmatpush1.bf16.msra.mxu0 %v2714
      %3033 = vmatprep.subr.bf16.mxu0 %v2707
      %3034 = vmatpush1.bf16.msra.mxu0 %v2706
      %3035 = vmatprep.subr.bf16.mxu0 %v2699
      %3036 = vmatpush1.bf16.msra.mxu0 %v2698
      %3037 = vmatprep.subr.bf16.mxu0 %v2691
      %3038 = vmatpush1.bf16.msra.mxu0 %v2690
      %3039 = vmatprep.subr.bf16.mxu0 %v2683
      %3040 = vmatpush1.bf16.msra.mxu0 %v2682
      %3041 = vmatprep.subr.bf16.mxu0 %v2675
      %3042 = vmatpush1.bf16.msra.mxu0 %v2674
      %3043 = vmatprep.subr.bf16.mxu0 %v2667
      %3044 = vmatpush1.bf16.msra.mxu0 %v2666
      %3045 = vmatprep.subr.bf16.mxu0 %v2659
      %3046 = vmatpush1.bf16.msra.mxu0 %v2658
      %3047 = vmatprep.subr.bf16.mxu0 %v2779
      %3048 = vmatpush2.bf16.msra.mxu0 %v2778
      %3049 = vmatprep.subr.bf16.mxu0 %v2771
      %3050 = vmatpush2.bf16.msra.mxu0 %v2770
      %3051 = vmatprep.subr.bf16.mxu0 %v2763
      %3052 = vmatpush2.bf16.msra.mxu0 %v2762
      %3053 = vmatprep.subr.bf16.mxu0 %v2755
      %3054 = vmatpush2.bf16.msra.mxu0 %v2754
      %3055 = vmatprep.subr.bf16.mxu0 %v2747
      %3056 = vmatpush2.bf16.msra.mxu0 %v2746
      %3057 = vmatprep.subr.bf16.mxu0 %v2739
      %3058 = vmatpush2.bf16.msra.mxu0 %v2738
      %3059 = vmatprep.subr.bf16.mxu0 %v2731
      %3060 = vmatpush2.bf16.msra.mxu0 %v2730
      %3061 = vmatprep.subr.bf16.mxu0 %v2723
      %3062 = vmatpush2.bf16.msra.mxu0 %v2722
      %3063 = vmatprep.mubr.bf16.mxu0 %v2265
      %3064 = vmatmul.mubr.bf16.gmra.mxu0 %v2264
      %v3065 = vpop.f32.mrf.mxu0
      %v3066 = vadd.f32 0.0, %v3065
      %v3067 = vpop.f32.mrf.mxu0
      %v3068 = vadd.f32 0.0, %v3067
      %v3069 = vpop.f32.mrf.mxu0
      %v3070 = vpop.f32.mrf.mxu0
      %3071 = vdwg.mxu0
      %s3072 = smul.u32 1, 8
      %s3073 = smul.addr %s3072, 4
      %s3074 = scalar_lea.vmem [#allocation2], %s3073
      %v3075 = vld [vmem:[%s3074] sm:$0xff]
      %v3076 = vld [vmem:[%s3074 + $0x8] sm:$0xff]
      %v3077 = vunpack.c.l.bf16 %v3075
      %v3078 = vunpack.c.h.bf16 %v3075
      %v3079 = vunpack.c.l.bf16 %v3076
      %v3080 = vunpack.c.h.bf16 %v3076
      %v3081 = vadd.f32 %v3077, %v2943
      %v3082 = vadd.f32 %v3078, %v2945
      %v3083 = vadd.f32 %v3079, %v2984
      %v3084 = vadd.f32 %v3080, %v2986
      %s3085 = smul.u32 2, 8
      %s3086 = smul.addr %s3085, 4
      %s3087 = scalar_lea.vmem [#allocation2], %s3086
      %v3088 = vld [vmem:[%s3087 + $0x10] sm:$0xff]
      %v3089 = vld [vmem:[%s3087 + $0x18] sm:$0xff]
      %v3090 = vunpack.c.l.bf16 %v3088
      %v3091 = vunpack.c.h.bf16 %v3088
      %v3092 = vunpack.c.l.bf16 %v3089
      %v3093 = vunpack.c.h.bf16 %v3089
      %v3094 = vadd.f32 %v3090, %v3025
      %v3095 = vadd.f32 %v3091, %v3027
      %v3096 = vadd.f32 %v3092, %v3066
      %v3097 = vadd.f32 %v3093, %v3068
      %v3098 = vld [vmem:[#allocation4] sm:$0xff]
      %v3099 = vmul.f32 %v3081, 0.5
      %v3100 = vtanh.pop %v3099
      %v3101 = vmul.f32 %v3100, 0.5
      %v3102 = vadd.f32 %v3101, 0.5
      %v3103 = vmul.f32 %v3082, 0.5
      %v3104 = vtanh.pop %v3103
      %v3105 = vmul.f32 %v3104, 0.5
      %v3106 = vadd.f32 %v3105, 0.5
      %v3107 = vtanh.pop %v3083
      %v3108 = vmul.f32 %v3084, 0.5
      %v3109 = vtanh.pop %v3108
      %v3110 = vmul.f32 %v3109, 0.5
      %v3111 = vadd.f32 %v3110, 0.5
      %v3112 = vmul.f32 %v3106, %v3098
      %v3113 = vmul.f32 %v3102, %v3107
      %v3114 = vadd.f32 %v3112, %v3113
      %v3115 = vtanh.pop %v3114
      %v3116 = vmul.f32 %v3111, %v3115
      %v3117 = vld [vmem:[#allocation4 + $0x8] sm:$0xff]
      %v3118 = vmul.f32 %v3094, 0.5
      %v3119 = vtanh.pop %v3118
      %v3120 = vmul.f32 %v3119, 0.5
      %v3121 = vadd.f32 %v3120, 0.5
      %v3122 = vmul.f32 %v3095, 0.5
      %v3123 = vtanh.pop %v3122
      %v3124 = vmul.f32 %v3123, 0.5
      %v3125 = vadd.f32 %v3124, 0.5
      %v3126 = vtanh.pop %v3096
      %v3127 = vmul.f32 %v3097, 0.5
      %v3128 = vtanh.pop %v3127
      %v3129 = vmul.f32 %v3128, 0.5
      %v3130 = vadd.f32 %v3129, 0.5
      %v3131 = vmul.f32 %v3125, %v3117
      %v3132 = vmul.f32 %v3121, %v3126
      %v3133 = vadd.f32 %v3131, %v3132
      %v3134 = vtanh.pop %v3133
      %v3135 = vmul.f32 %v3130, %v3134
      %v3136 = vpack.c.bf16 %v3116, %v3116
      %v3137 = vpack.c.bf16 %v3135, %v3135
      %3138 = vst [vmem:[#allocation3] sm:$0xf] %v3136
      %3139 = vst [vmem:[#allocation3 + $0x4] sm:$0xf] %v3137
      %3140 = vst [vmem:[#allocation4] sm:$0xff] %v3114
      %3141 = vst [vmem:[#allocation4 + $0x8] sm:$0xff] %v3133
      %s3142 = scalar_lea.vmem %s317, 4
      %3143 = vst [vmem:[%s3142] sm:$0xf] %v3136
      %s3144 = scalar_lea.vmem %s324, 8
      %3145 = vst [vmem:[%s3144] sm:$0xf] %v3137
      %v3146 = vld [vmem:[#allocation3] sm:$0xff]
      %v3147 = vld [vmem:[%s3] sm:$0xff]
      %v3148 = vld [vmem:[%s3 + $0x8] sm:$0xff]
      %v3149 = vld [vmem:[%s3 + $0x10] sm:$0xff]
      %v3150 = vld [vmem:[%s3 + $0x18] sm:$0xff]
      %v3151 = vld [vmem:[%s3 + $0x20] sm:$0xff]
      %v3152 = vld [vmem:[%s3 + $0x28] sm:$0xff]
      %v3153 = vld [vmem:[%s3 + $0x30] sm:$0xff]
      %v3154 = vld [vmem:[%s3 + $0x38] sm:$0xff]
      %v3155 = vld [vmem:[%s3 + $0x40] sm:$0xff]
      %v3156 = vld [vmem:[%s3 + $0x48] sm:$0xff]
      %v3157 = vld [vmem:[%s3 + $0x50] sm:$0xff]
      %v3158 = vld [vmem:[%s3 + $0x58] sm:$0xff]
      %v3159 = vld [vmem:[%s3 + $0x60] sm:$0xff]
      %v3160 = vld [vmem:[%s3 + $0x68] sm:$0xff]
      %v3161 = vld [vmem:[%s3 + $0x70] sm:$0xff]
      %v3162 = vld [vmem:[%s3 + $0x78] sm:$0xff]
      %v3163 = vld [vmem:[%s3 + $0x80] sm:$0xff]
      %v3164 = vld [vmem:[%s3 + $0x88] sm:$0xff]
      %v3165 = vld [vmem:[%s3 + $0x90] sm:$0xff]
      %v3166 = vld [vmem:[%s3 + $0x98] sm:$0xff]
      %v3167 = vld [vmem:[%s3 + $0xa0] sm:$0xff]
      %v3168 = vld [vmem:[%s3 + $0xa8] sm:$0xff]
      %v3169 = vld [vmem:[%s3 + $0xb0] sm:$0xff]
      %v3170 = vld [vmem:[%s3 + $0xb8] sm:$0xff]
      %v3171 = vld [vmem:[%s3 + $0xc0] sm:$0xff]
      %v3172 = vld [vmem:[%s3 + $0xc8] sm:$0xff]
      %v3173 = vld [vmem:[%s3 + $0xd0] sm:$0xff]
      %v3174 = vld [vmem:[%s3 + $0xd8] sm:$0xff]
      %v3175 = vld [vmem:[%s3 + $0xe0] sm:$0xff]
      %v3176 = vld [vmem:[%s3 + $0xe8] sm:$0xff]
      %v3177 = vld [vmem:[%s3 + $0xf0] sm:$0xff]
      %v3178 = vld [vmem:[%s3 + $0xf8] sm:$0xff]
      %v3179 = vld [vmem:[%s3 + $0x100] sm:$0xff]
      %v3180 = vld [vmem:[%s3 + $0x108] sm:$0xff]
      %v3181 = vld [vmem:[%s3 + $0x110] sm:$0xff]
      %v3182 = vld [vmem:[%s3 + $0x118] sm:$0xff]
      %v3183 = vld [vmem:[%s3 + $0x120] sm:$0xff]
      %v3184 = vld [vmem:[%s3 + $0x128] sm:$0xff]
      %v3185 = vld [vmem:[%s3 + $0x130] sm:$0xff]
      %v3186 = vld [vmem:[%s3 + $0x138] sm:$0xff]
      %v3187 = vld [vmem:[%s3 + $0x140] sm:$0xff]
      %v3188 = vld [vmem:[%s3 + $0x148] sm:$0xff]
      %v3189 = vld [vmem:[%s3 + $0x150] sm:$0xff]
      %v3190 = vld [vmem:[%s3 + $0x158] sm:$0xff]
      %v3191 = vld [vmem:[%s3 + $0x160] sm:$0xff]
      %v3192 = vld [vmem:[%s3 + $0x168] sm:$0xff]
      %v3193 = vld [vmem:[%s3 + $0x170] sm:$0xff]
      %v3194 = vld [vmem:[%s3 + $0x178] sm:$0xff]
      %v3195 = vld [vmem:[%s3 + $0x180] sm:$0xff]
      %v3196 = vld [vmem:[%s3 + $0x188] sm:$0xff]
      %v3197 = vld [vmem:[%s3 + $0x190] sm:$0xff]
      %v3198 = vld [vmem:[%s3 + $0x198] sm:$0xff]
      %v3199 = vld [vmem:[%s3 + $0x1a0] sm:$0xff]
      %v3200 = vld [vmem:[%s3 + $0x1a8] sm:$0xff]
      %v3201 = vld [vmem:[%s3 + $0x1b0] sm:$0xff]
      %v3202 = vld [vmem:[%s3 + $0x1b8] sm:$0xff]
      %v3203 = vld [vmem:[%s3 + $0x1c0] sm:$0xff]
      %v3204 = vld [vmem:[%s3 + $0x1c8] sm:$0xff]
      %v3205 = vld [vmem:[%s3 + $0x1d0] sm:$0xff]
      %v3206 = vld [vmem:[%s3 + $0x1d8] sm:$0xff]
      %v3207 = vld [vmem:[%s3 + $0x1e0] sm:$0xff]
      %v3208 = vld [vmem:[%s3 + $0x1e8] sm:$0xff]
      %v3209 = vld [vmem:[%s3 + $0x1f0] sm:$0xff]
      %v3210 = vld [vmem:[%s3 + $0x1f8] sm:$0xff]
      %v3211 = vld [vmem:[%s3 + $0x200] sm:$0xff]
      %v3212 = vld [vmem:[%s3 + $0x208] sm:$0xff]
      %v3213 = vld [vmem:[%s3 + $0x210] sm:$0xff]
      %v3214 = vld [vmem:[%s3 + $0x218] sm:$0xff]
      %v3215 = vld [vmem:[%s3 + $0x220] sm:$0xff]
      %v3216 = vld [vmem:[%s3 + $0x228] sm:$0xff]
      %v3217 = vld [vmem:[%s3 + $0x230] sm:$0xff]
      %v3218 = vld [vmem:[%s3 + $0x238] sm:$0xff]
      %v3219 = vld [vmem:[%s3 + $0x240] sm:$0xff]
      %v3220 = vld [vmem:[%s3 + $0x248] sm:$0xff]
      %v3221 = vld [vmem:[%s3 + $0x250] sm:$0xff]
      %v3222 = vld [vmem:[%s3 + $0x258] sm:$0xff]
      %v3223 = vld [vmem:[%s3 + $0x260] sm:$0xff]
      %v3224 = vld [vmem:[%s3 + $0x268] sm:$0xff]
      %v3225 = vld [vmem:[%s3 + $0x270] sm:$0xff]
      %v3226 = vld [vmem:[%s3 + $0x278] sm:$0xff]
      %v3227 = vld [vmem:[%s3 + $0x280] sm:$0xff]
      %v3228 = vld [vmem:[%s3 + $0x288] sm:$0xff]
      %v3229 = vld [vmem:[%s3 + $0x290] sm:$0xff]
      %v3230 = vld [vmem:[%s3 + $0x298] sm:$0xff]
      %v3231 = vld [vmem:[%s3 + $0x2a0] sm:$0xff]
      %v3232 = vld [vmem:[%s3 + $0x2a8] sm:$0xff]
      %v3233 = vld [vmem:[%s3 + $0x2b0] sm:$0xff]
      %v3234 = vld [vmem:[%s3 + $0x2b8] sm:$0xff]
      %v3235 = vld [vmem:[%s3 + $0x2c0] sm:$0xff]
      %v3236 = vld [vmem:[%s3 + $0x2c8] sm:$0xff]
      %v3237 = vld [vmem:[%s3 + $0x2d0] sm:$0xff]
      %v3238 = vld [vmem:[%s3 + $0x2d8] sm:$0xff]
      %v3239 = vld [vmem:[%s3 + $0x2e0] sm:$0xff]
      %v3240 = vld [vmem:[%s3 + $0x2e8] sm:$0xff]
      %v3241 = vld [vmem:[%s3 + $0x2f0] sm:$0xff]
      %v3242 = vld [vmem:[%s3 + $0x2f8] sm:$0xff]
      %v3243 = vld [vmem:[%s3 + $0x300] sm:$0xff]
      %v3244 = vld [vmem:[%s3 + $0x308] sm:$0xff]
      %v3245 = vld [vmem:[%s3 + $0x310] sm:$0xff]
      %v3246 = vld [vmem:[%s3 + $0x318] sm:$0xff]
      %v3247 = vld [vmem:[%s3 + $0x320] sm:$0xff]
      %v3248 = vld [vmem:[%s3 + $0x328] sm:$0xff]
      %v3249 = vld [vmem:[%s3 + $0x330] sm:$0xff]
      %v3250 = vld [vmem:[%s3 + $0x338] sm:$0xff]
      %v3251 = vld [vmem:[%s3 + $0x340] sm:$0xff]
      %v3252 = vld [vmem:[%s3 + $0x348] sm:$0xff]
      %v3253 = vld [vmem:[%s3 + $0x350] sm:$0xff]
      %v3254 = vld [vmem:[%s3 + $0x358] sm:$0xff]
      %v3255 = vld [vmem:[%s3 + $0x360] sm:$0xff]
      %v3256 = vld [vmem:[%s3 + $0x368] sm:$0xff]
      %v3257 = vld [vmem:[%s3 + $0x370] sm:$0xff]
      %v3258 = vld [vmem:[%s3 + $0x378] sm:$0xff]
      %v3259 = vld [vmem:[%s3 + $0x380] sm:$0xff]
      %v3260 = vld [vmem:[%s3 + $0x388] sm:$0xff]
      %v3261 = vld [vmem:[%s3 + $0x390] sm:$0xff]
      %v3262 = vld [vmem:[%s3 + $0x398] sm:$0xff]
      %v3263 = vld [vmem:[%s3 + $0x3a0] sm:$0xff]
      %v3264 = vld [vmem:[%s3 + $0x3a8] sm:$0xff]
      %v3265 = vld [vmem:[%s3 + $0x3b0] sm:$0xff]
      %v3266 = vld [vmem:[%s3 + $0x3b8] sm:$0xff]
      %v3267 = vld [vmem:[%s3 + $0x3c0] sm:$0xff]
      %v3268 = vld [vmem:[%s3 + $0x3c8] sm:$0xff]
      %v3269 = vld [vmem:[%s3 + $0x3d0] sm:$0xff]
      %v3270 = vld [vmem:[%s3 + $0x3d8] sm:$0xff]
      %v3271 = vld [vmem:[%s3 + $0x3e0] sm:$0xff]
      %v3272 = vld [vmem:[%s3 + $0x3e8] sm:$0xff]
      %v3273 = vld [vmem:[%s3 + $0x3f0] sm:$0xff]
      %v3274 = vld [vmem:[%s3 + $0x3f8] sm:$0xff]
      %v3276 = vunpack.c.l.b16 %v3146
      %v3277 = vunpack.c.h.b16 %v3146
      %v3278 = vpack.c.b16 %v3276, %v3276
      %v3279 = vpack.c.b16 %v3277, %v3277
      %v3410 = vunpack.c.l.b16 %v3147
      %v3411 = vunpack.c.h.b16 %v3147
      %v3412 = vunpack.c.l.b16 %v3148
      %v3413 = vunpack.c.h.b16 %v3148
      %v3414 = vunpack.c.l.b16 %v3149
      %v3415 = vunpack.c.h.b16 %v3149
      %v3416 = vunpack.c.l.b16 %v3150
      %v3417 = vunpack.c.h.b16 %v3150
      %v3418 = vunpack.c.l.b16 %v3151
      %v3419 = vunpack.c.h.b16 %v3151
      %v3420 = vunpack.c.l.b16 %v3152
      %v3421 = vunpack.c.h.b16 %v3152
      %v3422 = vunpack.c.l.b16 %v3153
      %v3423 = vunpack.c.h.b16 %v3153
      %v3424 = vunpack.c.l.b16 %v3154
      %v3425 = vunpack.c.h.b16 %v3154
      %v3426 = vunpack.c.l.b16 %v3155
      %v3427 = vunpack.c.h.b16 %v3155
      %v3428 = vunpack.c.l.b16 %v3156
      %v3429 = vunpack.c.h.b16 %v3156
      %v3430 = vunpack.c.l.b16 %v3157
      %v3431 = vunpack.c.h.b16 %v3157
      %v3432 = vunpack.c.l.b16 %v3158
      %v3433 = vunpack.c.h.b16 %v3158
      %v3434 = vunpack.c.l.b16 %v3159
      %v3435 = vunpack.c.h.b16 %v3159
      %v3436 = vunpack.c.l.b16 %v3160
      %v3437 = vunpack.c.h.b16 %v3160
      %v3438 = vunpack.c.l.b16 %v3161
      %v3439 = vunpack.c.h.b16 %v3161
      %v3440 = vunpack.c.l.b16 %v3162
      %v3441 = vunpack.c.h.b16 %v3162
      %v3442 = vunpack.c.l.b16 %v3163
      %v3443 = vunpack.c.h.b16 %v3163
      %v3444 = vunpack.c.l.b16 %v3164
      %v3445 = vunpack.c.h.b16 %v3164
      %v3446 = vunpack.c.l.b16 %v3165
      %v3447 = vunpack.c.h.b16 %v3165
      %v3448 = vunpack.c.l.b16 %v3166
      %v3449 = vunpack.c.h.b16 %v3166
      %v3450 = vunpack.c.l.b16 %v3167
      %v3451 = vunpack.c.h.b16 %v3167
      %v3452 = vunpack.c.l.b16 %v3168
      %v3453 = vunpack.c.h.b16 %v3168
      %v3454 = vunpack.c.l.b16 %v3169
      %v3455 = vunpack.c.h.b16 %v3169
      %v3456 = vunpack.c.l.b16 %v3170
      %v3457 = vunpack.c.h.b16 %v3170
      %v3458 = vunpack.c.l.b16 %v3171
      %v3459 = vunpack.c.h.b16 %v3171
      %v3460 = vunpack.c.l.b16 %v3172
      %v3461 = vunpack.c.h.b16 %v3172
      %v3462 = vunpack.c.l.b16 %v3173
      %v3463 = vunpack.c.h.b16 %v3173
      %v3464 = vunpack.c.l.b16 %v3174
      %v3465 = vunpack.c.h.b16 %v3174
      %v3466 = vunpack.c.l.b16 %v3175
      %v3467 = vunpack.c.h.b16 %v3175
      %v3468 = vunpack.c.l.b16 %v3176
      %v3469 = vunpack.c.h.b16 %v3176
      %v3470 = vunpack.c.l.b16 %v3177
      %v3471 = vunpack.c.h.b16 %v3177
      %v3472 = vunpack.c.l.b16 %v3178
      %v3473 = vunpack.c.h.b16 %v3178
      %v3474 = vunpack.c.l.b16 %v3179
      %v3475 = vunpack.c.h.b16 %v3179
      %v3476 = vunpack.c.l.b16 %v3180
      %v3477 = vunpack.c.h.b16 %v3180
      %v3478 = vunpack.c.l.b16 %v3181
      %v3479 = vunpack.c.h.b16 %v3181
      %v3480 = vunpack.c.l.b16 %v3182
      %v3481 = vunpack.c.h.b16 %v3182
      %v3482 = vunpack.c.l.b16 %v3183
      %v3483 = vunpack.c.h.b16 %v3183
      %v3484 = vunpack.c.l.b16 %v3184
      %v3485 = vunpack.c.h.b16 %v3184
      %v3486 = vunpack.c.l.b16 %v3185
      %v3487 = vunpack.c.h.b16 %v3185
      %v3488 = vunpack.c.l.b16 %v3186
      %v3489 = vunpack.c.h.b16 %v3186
      %v3490 = vunpack.c.l.b16 %v3187
      %v3491 = vunpack.c.h.b16 %v3187
      %v3492 = vunpack.c.l.b16 %v3188
      %v3493 = vunpack.c.h.b16 %v3188
      %v3494 = vunpack.c.l.b16 %v3189
      %v3495 = vunpack.c.h.b16 %v3189
      %v3496 = vunpack.c.l.b16 %v3190
      %v3497 = vunpack.c.h.b16 %v3190
      %v3498 = vunpack.c.l.b16 %v3191
      %v3499 = vunpack.c.h.b16 %v3191
      %v3500 = vunpack.c.l.b16 %v3192
      %v3501 = vunpack.c.h.b16 %v3192
      %v3502 = vunpack.c.l.b16 %v3193
      %v3503 = vunpack.c.h.b16 %v3193
      %v3504 = vunpack.c.l.b16 %v3194
      %v3505 = vunpack.c.h.b16 %v3194
      %v3506 = vunpack.c.l.b16 %v3195
      %v3507 = vunpack.c.h.b16 %v3195
      %v3508 = vunpack.c.l.b16 %v3196
      %v3509 = vunpack.c.h.b16 %v3196
      %v3510 = vunpack.c.l.b16 %v3197
      %v3511 = vunpack.c.h.b16 %v3197
      %v3512 = vunpack.c.l.b16 %v3198
      %v3513 = vunpack.c.h.b16 %v3198
      %v3514 = vunpack.c.l.b16 %v3199
      %v3515 = vunpack.c.h.b16 %v3199
      %v3516 = vunpack.c.l.b16 %v3200
      %v3517 = vunpack.c.h.b16 %v3200
      %v3518 = vunpack.c.l.b16 %v3201
      %v3519 = vunpack.c.h.b16 %v3201
      %v3520 = vunpack.c.l.b16 %v3202
      %v3521 = vunpack.c.h.b16 %v3202
      %v3522 = vunpack.c.l.b16 %v3203
      %v3523 = vunpack.c.h.b16 %v3203
      %v3524 = vunpack.c.l.b16 %v3204
      %v3525 = vunpack.c.h.b16 %v3204
      %v3526 = vunpack.c.l.b16 %v3205
      %v3527 = vunpack.c.h.b16 %v3205
      %v3528 = vunpack.c.l.b16 %v3206
      %v3529 = vunpack.c.h.b16 %v3206
      %v3530 = vunpack.c.l.b16 %v3207
      %v3531 = vunpack.c.h.b16 %v3207
      %v3532 = vunpack.c.l.b16 %v3208
      %v3533 = vunpack.c.h.b16 %v3208
      %v3534 = vunpack.c.l.b16 %v3209
      %v3535 = vunpack.c.h.b16 %v3209
      %v3536 = vunpack.c.l.b16 %v3210
      %v3537 = vunpack.c.h.b16 %v3210
      %v3538 = vunpack.c.l.b16 %v3211
      %v3539 = vunpack.c.h.b16 %v3211
      %v3540 = vunpack.c.l.b16 %v3212
      %v3541 = vunpack.c.h.b16 %v3212
      %v3542 = vunpack.c.l.b16 %v3213
      %v3543 = vunpack.c.h.b16 %v3213
      %v3544 = vunpack.c.l.b16 %v3214
      %v3545 = vunpack.c.h.b16 %v3214
      %v3546 = vunpack.c.l.b16 %v3215
      %v3547 = vunpack.c.h.b16 %v3215
      %v3548 = vunpack.c.l.b16 %v3216
      %v3549 = vunpack.c.h.b16 %v3216
      %v3550 = vunpack.c.l.b16 %v3217
      %v3551 = vunpack.c.h.b16 %v3217
      %v3552 = vunpack.c.l.b16 %v3218
      %v3553 = vunpack.c.h.b16 %v3218
      %v3554 = vunpack.c.l.b16 %v3219
      %v3555 = vunpack.c.h.b16 %v3219
      %v3556 = vunpack.c.l.b16 %v3220
      %v3557 = vunpack.c.h.b16 %v3220
      %v3558 = vunpack.c.l.b16 %v3221
      %v3559 = vunpack.c.h.b16 %v3221
      %v3560 = vunpack.c.l.b16 %v3222
      %v3561 = vunpack.c.h.b16 %v3222
      %v3562 = vunpack.c.l.b16 %v3223
      %v3563 = vunpack.c.h.b16 %v3223
      %v3564 = vunpack.c.l.b16 %v3224
      %v3565 = vunpack.c.h.b16 %v3224
      %v3566 = vunpack.c.l.b16 %v3225
      %v3567 = vunpack.c.h.b16 %v3225
      %v3568 = vunpack.c.l.b16 %v3226
      %v3569 = vunpack.c.h.b16 %v3226
      %v3570 = vunpack.c.l.b16 %v3227
      %v3571 = vunpack.c.h.b16 %v3227
      %v3572 = vunpack.c.l.b16 %v3228
      %v3573 = vunpack.c.h.b16 %v3228
      %v3574 = vunpack.c.l.b16 %v3229
      %v3575 = vunpack.c.h.b16 %v3229
      %v3576 = vunpack.c.l.b16 %v3230
      %v3577 = vunpack.c.h.b16 %v3230
      %v3578 = vunpack.c.l.b16 %v3231
      %v3579 = vunpack.c.h.b16 %v3231
      %v3580 = vunpack.c.l.b16 %v3232
      %v3581 = vunpack.c.h.b16 %v3232
      %v3582 = vunpack.c.l.b16 %v3233
      %v3583 = vunpack.c.h.b16 %v3233
      %v3584 = vunpack.c.l.b16 %v3234
      %v3585 = vunpack.c.h.b16 %v3234
      %v3586 = vunpack.c.l.b16 %v3235
      %v3587 = vunpack.c.h.b16 %v3235
      %v3588 = vunpack.c.l.b16 %v3236
      %v3589 = vunpack.c.h.b16 %v3236
      %v3590 = vunpack.c.l.b16 %v3237
      %v3591 = vunpack.c.h.b16 %v3237
      %v3592 = vunpack.c.l.b16 %v3238
      %v3593 = vunpack.c.h.b16 %v3238
      %v3594 = vunpack.c.l.b16 %v3239
      %v3595 = vunpack.c.h.b16 %v3239
      %v3596 = vunpack.c.l.b16 %v3240
      %v3597 = vunpack.c.h.b16 %v3240
      %v3598 = vunpack.c.l.b16 %v3241
      %v3599 = vunpack.c.h.b16 %v3241
      %v3600 = vunpack.c.l.b16 %v3242
      %v3601 = vunpack.c.h.b16 %v3242
      %v3602 = vunpack.c.l.b16 %v3243
      %v3603 = vunpack.c.h.b16 %v3243
      %v3604 = vunpack.c.l.b16 %v3244
      %v3605 = vunpack.c.h.b16 %v3244
      %v3606 = vunpack.c.l.b16 %v3245
      %v3607 = vunpack.c.h.b16 %v3245
      %v3608 = vunpack.c.l.b16 %v3246
      %v3609 = vunpack.c.h.b16 %v3246
      %v3610 = vunpack.c.l.b16 %v3247
      %v3611 = vunpack.c.h.b16 %v3247
      %v3612 = vunpack.c.l.b16 %v3248
      %v3613 = vunpack.c.h.b16 %v3248
      %v3614 = vunpack.c.l.b16 %v3249
      %v3615 = vunpack.c.h.b16 %v3249
      %v3616 = vunpack.c.l.b16 %v3250
      %v3617 = vunpack.c.h.b16 %v3250
      %v3618 = vunpack.c.l.b16 %v3251
      %v3619 = vunpack.c.h.b16 %v3251
      %v3620 = vunpack.c.l.b16 %v3252
      %v3621 = vunpack.c.h.b16 %v3252
      %v3622 = vunpack.c.l.b16 %v3253
      %v3623 = vunpack.c.h.b16 %v3253
      %v3624 = vunpack.c.l.b16 %v3254
      %v3625 = vunpack.c.h.b16 %v3254
      %v3626 = vunpack.c.l.b16 %v3255
      %v3627 = vunpack.c.h.b16 %v3255
      %v3628 = vunpack.c.l.b16 %v3256
      %v3629 = vunpack.c.h.b16 %v3256
      %v3630 = vunpack.c.l.b16 %v3257
      %v3631 = vunpack.c.h.b16 %v3257
      %v3632 = vunpack.c.l.b16 %v3258
      %v3633 = vunpack.c.h.b16 %v3258
      %v3634 = vunpack.c.l.b16 %v3259
      %v3635 = vunpack.c.h.b16 %v3259
      %v3636 = vunpack.c.l.b16 %v3260
      %v3637 = vunpack.c.h.b16 %v3260
      %v3638 = vunpack.c.l.b16 %v3261
      %v3639 = vunpack.c.h.b16 %v3261
      %v3640 = vunpack.c.l.b16 %v3262
      %v3641 = vunpack.c.h.b16 %v3262
      %v3642 = vunpack.c.l.b16 %v3263
      %v3643 = vunpack.c.h.b16 %v3263
      %v3644 = vunpack.c.l.b16 %v3264
      %v3645 = vunpack.c.h.b16 %v3264
      %v3646 = vunpack.c.l.b16 %v3265
      %v3647 = vunpack.c.h.b16 %v3265
      %v3648 = vunpack.c.l.b16 %v3266
      %v3649 = vunpack.c.h.b16 %v3266
      %v3650 = vunpack.c.l.b16 %v3267
      %v3651 = vunpack.c.h.b16 %v3267
      %v3652 = vunpack.c.l.b16 %v3268
      %v3653 = vunpack.c.h.b16 %v3268
      %v3654 = vunpack.c.l.b16 %v3269
      %v3655 = vunpack.c.h.b16 %v3269
      %v3656 = vunpack.c.l.b16 %v3270
      %v3657 = vunpack.c.h.b16 %v3270
      %v3658 = vunpack.c.l.b16 %v3271
      %v3659 = vunpack.c.h.b16 %v3271
      %v3660 = vunpack.c.l.b16 %v3272
      %v3661 = vunpack.c.h.b16 %v3272
      %v3662 = vunpack.c.l.b16 %v3273
      %v3663 = vunpack.c.h.b16 %v3273
      %v3664 = vunpack.c.l.b16 %v3274
      %v3665 = vunpack.c.h.b16 %v3274
      %v3666 = vpack.c.b16 %v3418, %v3410
      %v3667 = vpack.c.b16 %v3419, %v3411
      %v3668 = vpack.c.b16 %v3420, %v3412
      %v3669 = vpack.c.b16 %v3421, %v3413
      %v3670 = vpack.c.b16 %v3422, %v3414
      %v3671 = vpack.c.b16 %v3423, %v3415
      %v3672 = vpack.c.b16 %v3424, %v3416
      %v3673 = vpack.c.b16 %v3425, %v3417
      %v3674 = vpack.c.b16 %v3434, %v3426
      %v3675 = vpack.c.b16 %v3435, %v3427
      %v3676 = vpack.c.b16 %v3436, %v3428
      %v3677 = vpack.c.b16 %v3437, %v3429
      %v3678 = vpack.c.b16 %v3438, %v3430
      %v3679 = vpack.c.b16 %v3439, %v3431
      %v3680 = vpack.c.b16 %v3440, %v3432
      %v3681 = vpack.c.b16 %v3441, %v3433
      %v3682 = vpack.c.b16 %v3450, %v3442
      %v3683 = vpack.c.b16 %v3451, %v3443
      %v3684 = vpack.c.b16 %v3452, %v3444
      %v3685 = vpack.c.b16 %v3453, %v3445
      %v3686 = vpack.c.b16 %v3454, %v3446
      %v3687 = vpack.c.b16 %v3455, %v3447
      %v3688 = vpack.c.b16 %v3456, %v3448
      %v3689 = vpack.c.b16 %v3457, %v3449
      %v3690 = vpack.c.b16 %v3466, %v3458
      %v3691 = vpack.c.b16 %v3467, %v3459
      %v3692 = vpack.c.b16 %v3468, %v3460
      %v3693 = vpack.c.b16 %v3469, %v3461
      %v3694 = vpack.c.b16 %v3470, %v3462
      %v3695 = vpack.c.b16 %v3471, %v3463
      %v3696 = vpack.c.b16 %v3472, %v3464
      %v3697 = vpack.c.b16 %v3473, %v3465
      %v3698 = vpack.c.b16 %v3482, %v3474
      %v3699 = vpack.c.b16 %v3483, %v3475
      %v3700 = vpack.c.b16 %v3484, %v3476
      %v3701 = vpack.c.b16 %v3485, %v3477
      %v3702 = vpack.c.b16 %v3486, %v3478
      %v3703 = vpack.c.b16 %v3487, %v3479
      %v3704 = vpack.c.b16 %v3488, %v3480
      %v3705 = vpack.c.b16 %v3489, %v3481
      %v3706 = vpack.c.b16 %v3498, %v3490
      %v3707 = vpack.c.b16 %v3499, %v3491
      %v3708 = vpack.c.b16 %v3500, %v3492
      %v3709 = vpack.c.b16 %v3501, %v3493
      %v3710 = vpack.c.b16 %v3502, %v3494
      %v3711 = vpack.c.b16 %v3503, %v3495
      %v3712 = vpack.c.b16 %v3504, %v3496
      %v3713 = vpack.c.b16 %v3505, %v3497
      %v3714 = vpack.c.b16 %v3514, %v3506
      %v3715 = vpack.c.b16 %v3515, %v3507
      %v3716 = vpack.c.b16 %v3516, %v3508
      %v3717 = vpack.c.b16 %v3517, %v3509
      %v3718 = vpack.c.b16 %v3518, %v3510
      %v3719 = vpack.c.b16 %v3519, %v3511
      %v3720 = vpack.c.b16 %v3520, %v3512
      %v3721 = vpack.c.b16 %v3521, %v3513
      %v3722 = vpack.c.b16 %v3530, %v3522
      %v3723 = vpack.c.b16 %v3531, %v3523
      %v3724 = vpack.c.b16 %v3532, %v3524
      %v3725 = vpack.c.b16 %v3533, %v3525
      %v3726 = vpack.c.b16 %v3534, %v3526
      %v3727 = vpack.c.b16 %v3535, %v3527
      %v3728 = vpack.c.b16 %v3536, %v3528
      %v3729 = vpack.c.b16 %v3537, %v3529
      %v3730 = vpack.c.b16 %v3546, %v3538
      %v3731 = vpack.c.b16 %v3547, %v3539
      %v3732 = vpack.c.b16 %v3548, %v3540
      %v3733 = vpack.c.b16 %v3549, %v3541
      %v3734 = vpack.c.b16 %v3550, %v3542
      %v3735 = vpack.c.b16 %v3551, %v3543
      %v3736 = vpack.c.b16 %v3552, %v3544
      %v3737 = vpack.c.b16 %v3553, %v3545
      %v3738 = vpack.c.b16 %v3562, %v3554
      %v3739 = vpack.c.b16 %v3563, %v3555
      %v3740 = vpack.c.b16 %v3564, %v3556
      %v3741 = vpack.c.b16 %v3565, %v3557
      %v3742 = vpack.c.b16 %v3566, %v3558
      %v3743 = vpack.c.b16 %v3567, %v3559
      %v3744 = vpack.c.b16 %v3568, %v3560
      %v3745 = vpack.c.b16 %v3569, %v3561
      %v3746 = vpack.c.b16 %v3578, %v3570
      %v3747 = vpack.c.b16 %v3579, %v3571
      %v3748 = vpack.c.b16 %v3580, %v3572
      %v3749 = vpack.c.b16 %v3581, %v3573
      %v3750 = vpack.c.b16 %v3582, %v3574
      %v3751 = vpack.c.b16 %v3583, %v3575
      %v3752 = vpack.c.b16 %v3584, %v3576
      %v3753 = vpack.c.b16 %v3585, %v3577
      %v3754 = vpack.c.b16 %v3594, %v3586
      %v3755 = vpack.c.b16 %v3595, %v3587
      %v3756 = vpack.c.b16 %v3596, %v3588
      %v3757 = vpack.c.b16 %v3597, %v3589
      %v3758 = vpack.c.b16 %v3598, %v3590
      %v3759 = vpack.c.b16 %v3599, %v3591
      %v3760 = vpack.c.b16 %v3600, %v3592
      %v3761 = vpack.c.b16 %v3601, %v3593
      %v3762 = vpack.c.b16 %v3610, %v3602
      %v3763 = vpack.c.b16 %v3611, %v3603
      %v3764 = vpack.c.b16 %v3612, %v3604
      %v3765 = vpack.c.b16 %v3613, %v3605
      %v3766 = vpack.c.b16 %v3614, %v3606
      %v3767 = vpack.c.b16 %v3615, %v3607
      %v3768 = vpack.c.b16 %v3616, %v3608
      %v3769 = vpack.c.b16 %v3617, %v3609
      %v3770 = vpack.c.b16 %v3626, %v3618
      %v3771 = vpack.c.b16 %v3627, %v3619
      %v3772 = vpack.c.b16 %v3628, %v3620
      %v3773 = vpack.c.b16 %v3629, %v3621
      %v3774 = vpack.c.b16 %v3630, %v3622
      %v3775 = vpack.c.b16 %v3631, %v3623
      %v3776 = vpack.c.b16 %v3632, %v3624
      %v3777 = vpack.c.b16 %v3633, %v3625
      %v3778 = vpack.c.b16 %v3642, %v3634
      %v3779 = vpack.c.b16 %v3643, %v3635
      %v3780 = vpack.c.b16 %v3644, %v3636
      %v3781 = vpack.c.b16 %v3645, %v3637
      %v3782 = vpack.c.b16 %v3646, %v3638
      %v3783 = vpack.c.b16 %v3647, %v3639
      %v3784 = vpack.c.b16 %v3648, %v3640
      %v3785 = vpack.c.b16 %v3649, %v3641
      %v3786 = vpack.c.b16 %v3658, %v3650
      %v3787 = vpack.c.b16 %v3659, %v3651
      %v3788 = vpack.c.b16 %v3660, %v3652
      %v3789 = vpack.c.b16 %v3661, %v3653
      %v3790 = vpack.c.b16 %v3662, %v3654
      %v3791 = vpack.c.b16 %v3663, %v3655
      %v3792 = vpack.c.b16 %v3664, %v3656
      %v3793 = vpack.c.b16 %v3665, %v3657
      %3922 = vmatprep.subr.bf16.mxu0 %v3723
      %3923 = vmatpush1.bf16.msra.mxu0 %v3722
      %3924 = vmatprep.subr.bf16.mxu0 %v3715
      %3925 = vmatpush1.bf16.msra.mxu0 %v3714
      %3926 = vmatprep.subr.bf16.mxu0 %v3707
      %3927 = vmatpush1.bf16.msra.mxu0 %v3706
      %3928 = vmatprep.subr.bf16.mxu0 %v3699
      %3929 = vmatpush1.bf16.msra.mxu0 %v3698
      %3930 = vmatprep.subr.bf16.mxu0 %v3691
      %3931 = vmatpush1.bf16.msra.mxu0 %v3690
      %3932 = vmatprep.subr.bf16.mxu0 %v3683
      %3933 = vmatpush1.bf16.msra.mxu0 %v3682
      %3934 = vmatprep.subr.bf16.mxu0 %v3675
      %3935 = vmatpush1.bf16.msra.mxu0 %v3674
      %3936 = vmatprep.subr.bf16.mxu0 %v3667
      %3937 = vmatpush1.bf16.msra.mxu0 %v3666
      %3938 = vmatprep.subr.bf16.mxu0 %v3787
      %3939 = vmatpush2.bf16.msra.mxu0 %v3786
      %3940 = vmatprep.subr.bf16.mxu0 %v3779
      %3941 = vmatpush2.bf16.msra.mxu0 %v3778
      %3942 = vmatprep.subr.bf16.mxu0 %v3771
      %3943 = vmatpush2.bf16.msra.mxu0 %v3770
      %3944 = vmatprep.subr.bf16.mxu0 %v3763
      %3945 = vmatpush2.bf16.msra.mxu0 %v3762
      %3946 = vmatprep.subr.bf16.mxu0 %v3755
      %3947 = vmatpush2.bf16.msra.mxu0 %v3754
      %3948 = vmatprep.subr.bf16.mxu0 %v3747
      %3949 = vmatpush2.bf16.msra.mxu0 %v3746
      %3950 = vmatprep.subr.bf16.mxu0 %v3739
      %3951 = vmatpush2.bf16.msra.mxu0 %v3738
      %3952 = vmatprep.subr.bf16.mxu0 %v3731
      %3953 = vmatpush2.bf16.msra.mxu0 %v3730
      %3954 = vmatprep.mubr.bf16.mxu0 %v3279
      %3955 = vmatmul.mubr.bf16.gmra.mxu0 %v3278
      %v3956 = vpop.f32.mrf.mxu0
      %v3957 = vadd.f32 0.0, %v3956
      %v3958 = vpop.f32.mrf.mxu0
      %v3959 = vadd.f32 0.0, %v3958
      %v3960 = vpop.f32.mrf.mxu0
      %v3961 = vpop.f32.mrf.mxu0
      %3962 = vdwg.mxu0
      %3963 = vmatprep.subr.bf16.mxu0 %v3725
      %3964 = vmatpush1.bf16.msra.mxu0 %v3724
      %3965 = vmatprep.subr.bf16.mxu0 %v3717
      %3966 = vmatpush1.bf16.msra.mxu0 %v3716
      %3967 = vmatprep.subr.bf16.mxu0 %v3709
      %3968 = vmatpush1.bf16.msra.mxu0 %v3708
      %3969 = vmatprep.subr.bf16.mxu0 %v3701
      %3970 = vmatpush1.bf16.msra.mxu0 %v3700
      %3971 = vmatprep.subr.bf16.mxu0 %v3693
      %3972 = vmatpush1.bf16.msra.mxu0 %v3692
      %3973 = vmatprep.subr.bf16.mxu0 %v3685
      %3974 = vmatpush1.bf16.msra.mxu0 %v3684
      %3975 = vmatprep.subr.bf16.mxu0 %v3677
      %3976 = vmatpush1.bf16.msra.mxu0 %v3676
      %3977 = vmatprep.subr.bf16.mxu0 %v3669
      %3978 = vmatpush1.bf16.msra.mxu0 %v3668
      %3979 = vmatprep.subr.bf16.mxu0 %v3789
      %3980 = vmatpush2.bf16.msra.mxu0 %v3788
      %3981 = vmatprep.subr.bf16.mxu0 %v3781
      %3982 = vmatpush2.bf16.msra.mxu0 %v3780
      %3983 = vmatprep.subr.bf16.mxu0 %v3773
      %3984 = vmatpush2.bf16.msra.mxu0 %v3772
      %3985 = vmatprep.subr.bf16.mxu0 %v3765
      %3986 = vmatpush2.bf16.msra.mxu0 %v3764
      %3987 = vmatprep.subr.bf16.mxu0 %v3757
      %3988 = vmatpush2.bf16.msra.mxu0 %v3756
      %3989 = vmatprep.subr.bf16.mxu0 %v3749
      %3990 = vmatpush2.bf16.msra.mxu0 %v3748
      %3991 = vmatprep.subr.bf16.mxu0 %v3741
      %3992 = vmatpush2.bf16.msra.mxu0 %v3740
      %3993 = vmatprep.subr.bf16.mxu0 %v3733
      %3994 = vmatpush2.bf16.msra.mxu0 %v3732
      %3995 = vmatprep.mubr.bf16.mxu0 %v3279
      %3996 = vmatmul.mubr.bf16.gmra.mxu0 %v3278
      %v3997 = vpop.f32.mrf.mxu0
      %v3998 = vadd.f32 0.0, %v3997
      %v3999 = vpop.f32.mrf.mxu0
      %v4000 = vadd.f32 0.0, %v3999
      %v4001 = vpop.f32.mrf.mxu0
      %v4002 = vpop.f32.mrf.mxu0
      %4003 = vdwg.mxu0
      %4004 = vmatprep.subr.bf16.mxu0 %v3727
      %4005 = vmatpush1.bf16.msra.mxu0 %v3726
      %4006 = vmatprep.subr.bf16.mxu0 %v3719
      %4007 = vmatpush1.bf16.msra.mxu0 %v3718
      %4008 = vmatprep.subr.bf16.mxu0 %v3711
      %4009 = vmatpush1.bf16.msra.mxu0 %v3710
      %4010 = vmatprep.subr.bf16.mxu0 %v3703
      %4011 = vmatpush1.bf16.msra.mxu0 %v3702
      %4012 = vmatprep.subr.bf16.mxu0 %v3695
      %4013 = vmatpush1.bf16.msra.mxu0 %v3694
      %4014 = vmatprep.subr.bf16.mxu0 %v3687
      %4015 = vmatpush1.bf16.msra.mxu0 %v3686
      %4016 = vmatprep.subr.bf16.mxu0 %v3679
      %4017 = vmatpush1.bf16.msra.mxu0 %v3678
      %4018 = vmatprep.subr.bf16.mxu0 %v3671
      %4019 = vmatpush1.bf16.msra.mxu0 %v3670
      %4020 = vmatprep.subr.bf16.mxu0 %v3791
      %4021 = vmatpush2.bf16.msra.mxu0 %v3790
      %4022 = vmatprep.subr.bf16.mxu0 %v3783
      %4023 = vmatpush2.bf16.msra.mxu0 %v3782
      %4024 = vmatprep.subr.bf16.mxu0 %v3775
      %4025 = vmatpush2.bf16.msra.mxu0 %v3774
      %4026 = vmatprep.subr.bf16.mxu0 %v3767
      %4027 = vmatpush2.bf16.msra.mxu0 %v3766
      %4028 = vmatprep.subr.bf16.mxu0 %v3759
      %4029 = vmatpush2.bf16.msra.mxu0 %v3758
      %4030 = vmatprep.subr.bf16.mxu0 %v3751
      %4031 = vmatpush2.bf16.msra.mxu0 %v3750
      %4032 = vmatprep.subr.bf16.mxu0 %v3743
      %4033 = vmatpush2.bf16.msra.mxu0 %v3742
      %4034 = vmatprep.subr.bf16.mxu0 %v3735
      %4035 = vmatpush2.bf16.msra.mxu0 %v3734
      %4036 = vmatprep.mubr.bf16.mxu0 %v3279
      %4037 = vmatmul.mubr.bf16.gmra.mxu0 %v3278
      %v4038 = vpop.f32.mrf.mxu0
      %v4039 = vadd.f32 0.0, %v4038
      %v4040 = vpop.f32.mrf.mxu0
      %v4041 = vadd.f32 0.0, %v4040
      %v4042 = vpop.f32.mrf.mxu0
      %v4043 = vpop.f32.mrf.mxu0
      %4044 = vdwg.mxu0
      %4045 = vmatprep.subr.bf16.mxu0 %v3729
      %4046 = vmatpush1.bf16.msra.mxu0 %v3728
      %4047 = vmatprep.subr.bf16.mxu0 %v3721
      %4048 = vmatpush1.bf16.msra.mxu0 %v3720
      %4049 = vmatprep.subr.bf16.mxu0 %v3713
      %4050 = vmatpush1.bf16.msra.mxu0 %v3712
      %4051 = vmatprep.subr.bf16.mxu0 %v3705
      %4052 = vmatpush1.bf16.msra.mxu0 %v3704
      %4053 = vmatprep.subr.bf16.mxu0 %v3697
      %4054 = vmatpush1.bf16.msra.mxu0 %v3696
      %4055 = vmatprep.subr.bf16.mxu0 %v3689
      %4056 = vmatpush1.bf16.msra.mxu0 %v3688
      %4057 = vmatprep.subr.bf16.mxu0 %v3681
      %4058 = vmatpush1.bf16.msra.mxu0 %v3680
      %4059 = vmatprep.subr.bf16.mxu0 %v3673
      %4060 = vmatpush1.bf16.msra.mxu0 %v3672
      %4061 = vmatprep.subr.bf16.mxu0 %v3793
      %4062 = vmatpush2.bf16.msra.mxu0 %v3792
      %4063 = vmatprep.subr.bf16.mxu0 %v3785
      %4064 = vmatpush2.bf16.msra.mxu0 %v3784
      %4065 = vmatprep.subr.bf16.mxu0 %v3777
      %4066 = vmatpush2.bf16.msra.mxu0 %v3776
      %4067 = vmatprep.subr.bf16.mxu0 %v3769
      %4068 = vmatpush2.bf16.msra.mxu0 %v3768
      %4069 = vmatprep.subr.bf16.mxu0 %v3761
      %4070 = vmatpush2.bf16.msra.mxu0 %v3760
      %4071 = vmatprep.subr.bf16.mxu0 %v3753
      %4072 = vmatpush2.bf16.msra.mxu0 %v3752
      %4073 = vmatprep.subr.bf16.mxu0 %v3745
      %4074 = vmatpush2.bf16.msra.mxu0 %v3744
      %4075 = vmatprep.subr.bf16.mxu0 %v3737
      %4076 = vmatpush2.bf16.msra.mxu0 %v3736
      %4077 = vmatprep.mubr.bf16.mxu0 %v3279
      %4078 = vmatmul.mubr.bf16.gmra.mxu0 %v3278
      %v4079 = vpop.f32.mrf.mxu0
      %v4080 = vadd.f32 0.0, %v4079
      %v4081 = vpop.f32.mrf.mxu0
      %v4082 = vadd.f32 0.0, %v4081
      %v4083 = vpop.f32.mrf.mxu0
      %v4084 = vpop.f32.mrf.mxu0
      %4085 = vdwg.mxu0
      %v4086 = vld [vmem:[%s3087] sm:$0xff]
      %v4087 = vld [vmem:[%s3087 + $0x8] sm:$0xff]
      %v4088 = vunpack.c.l.bf16 %v4086
      %v4089 = vunpack.c.h.bf16 %v4086
      %v4090 = vunpack.c.l.bf16 %v4087
      %v4091 = vunpack.c.h.bf16 %v4087
      %v4092 = vadd.f32 %v4088, %v3957
      %v4093 = vadd.f32 %v4089, %v3959
      %v4094 = vadd.f32 %v4090, %v3998
      %v4095 = vadd.f32 %v4091, %v4000
      %v4096 = vld [vmem:[%s3074 + $0x10] sm:$0xff]
      %v4097 = vld [vmem:[%s3074 + $0x18] sm:$0xff]
      %v4098 = vunpack.c.l.bf16 %v4096
      %v4099 = vunpack.c.h.bf16 %v4096
      %v4100 = vunpack.c.l.bf16 %v4097
      %v4101 = vunpack.c.h.bf16 %v4097
      %v4102 = vadd.f32 %v4098, %v4039
      %v4103 = vadd.f32 %v4099, %v4041
      %v4104 = vadd.f32 %v4100, %v4080
      %v4105 = vadd.f32 %v4101, %v4082
      %v4106 = vld [vmem:[#allocation4] sm:$0xff]
      %v4107 = vmul.f32 %v4092, 0.5
      %v4108 = vtanh.pop %v4107
      %v4109 = vmul.f32 %v4108, 0.5
      %v4110 = vadd.f32 %v4109, 0.5
      %v4111 = vmul.f32 %v4093, 0.5
      %v4112 = vtanh.pop %v4111
      %v4113 = vmul.f32 %v4112, 0.5
      %v4114 = vadd.f32 %v4113, 0.5
      %v4115 = vtanh.pop %v4094
      %v4116 = vmul.f32 %v4095, 0.5
      %v4117 = vtanh.pop %v4116
      %v4118 = vmul.f32 %v4117, 0.5
      %v4119 = vadd.f32 %v4118, 0.5
      %v4120 = vmul.f32 %v4114, %v4106
      %v4121 = vmul.f32 %v4110, %v4115
      %v4122 = vadd.f32 %v4120, %v4121
      %v4123 = vtanh.pop %v4122
      %v4124 = vmul.f32 %v4119, %v4123
      %v4125 = vld [vmem:[#allocation4 + $0x8] sm:$0xff]
      %v4126 = vmul.f32 %v4102, 0.5
      %v4127 = vtanh.pop %v4126
      %v4128 = vmul.f32 %v4127, 0.5
      %v4129 = vadd.f32 %v4128, 0.5
      %v4130 = vmul.f32 %v4103, 0.5
      %v4131 = vtanh.pop %v4130
      %v4132 = vmul.f32 %v4131, 0.5
      %v4133 = vadd.f32 %v4132, 0.5
      %v4134 = vtanh.pop %v4104
      %v4135 = vmul.f32 %v4105, 0.5
      %v4136 = vtanh.pop %v4135
      %v4137 = vmul.f32 %v4136, 0.5
      %v4138 = vadd.f32 %v4137, 0.5
      %v4139 = vmul.f32 %v4133, %v4125
      %v4140 = vmul.f32 %v4129, %v4134
      %v4141 = vadd.f32 %v4139, %v4140
      %v4142 = vtanh.pop %v4141
      %v4143 = vmul.f32 %v4138, %v4142
      %v4144 = vpack.c.bf16 %v4124, %v4124
      %v4145 = vpack.c.bf16 %v4143, %v4143
      %4146 = vst [vmem:[#allocation3] sm:$0xf] %v4144
      %4147 = vst [vmem:[#allocation3 + $0x4] sm:$0xf] %v4145
      %4148 = vst [vmem:[#allocation4] sm:$0xff] %v4122
      %4149 = vst [vmem:[#allocation4 + $0x8] sm:$0xff] %v4141
      %s4150 = scalar_lea.vmem %s317, 8
      %4151 = vst [vmem:[%s4150] sm:$0xf] %v4144
      %s4152 = scalar_lea.vmem %s324, 4
      %4153 = vst [vmem:[%s4152] sm:$0xf] %v4145
      %v4154 = vld [vmem:[#allocation3] sm:$0xff]
      %v4155 = vld [vmem:[%s3] sm:$0xff]
      %v4156 = vld [vmem:[%s3 + $0x8] sm:$0xff]
      %v4157 = vld [vmem:[%s3 + $0x10] sm:$0xff]
      %v4158 = vld [vmem:[%s3 + $0x18] sm:$0xff]
      %v4159 = vld [vmem:[%s3 + $0x20] sm:$0xff]
      %v4160 = vld [vmem:[%s3 + $0x28] sm:$0xff]
      %v4161 = vld [vmem:[%s3 + $0x30] sm:$0xff]
      %v4162 = vld [vmem:[%s3 + $0x38] sm:$0xff]
      %v4163 = vld [vmem:[%s3 + $0x40] sm:$0xff]
      %v4164 = vld [vmem:[%s3 + $0x48] sm:$0xff]
      %v4165 = vld [vmem:[%s3 + $0x50] sm:$0xff]
      %v4166 = vld [vmem:[%s3 + $0x58] sm:$0xff]
      %v4167 = vld [vmem:[%s3 + $0x60] sm:$0xff]
      %v4168 = vld [vmem:[%s3 + $0x68] sm:$0xff]
      %v4169 = vld [vmem:[%s3 + $0x70] sm:$0xff]
      %v4170 = vld [vmem:[%s3 + $0x78] sm:$0xff]
      %v4171 = vld [vmem:[%s3 + $0x80] sm:$0xff]
      %v4172 = vld [vmem:[%s3 + $0x88] sm:$0xff]
      %v4173 = vld [vmem:[%s3 + $0x90] sm:$0xff]
      %v4174 = vld [vmem:[%s3 + $0x98] sm:$0xff]
      %v4175 = vld [vmem:[%s3 + $0xa0] sm:$0xff]
      %v4176 = vld [vmem:[%s3 + $0xa8] sm:$0xff]
      %v4177 = vld [vmem:[%s3 + $0xb0] sm:$0xff]
      %v4178 = vld [vmem:[%s3 + $0xb8] sm:$0xff]
      %v4179 = vld [vmem:[%s3 + $0xc0] sm:$0xff]
      %v4180 = vld [vmem:[%s3 + $0xc8] sm:$0xff]
      %v4181 = vld [vmem:[%s3 + $0xd0] sm:$0xff]
      %v4182 = vld [vmem:[%s3 + $0xd8] sm:$0xff]
      %v4183 = vld [vmem:[%s3 + $0xe0] sm:$0xff]
      %v4184 = vld [vmem:[%s3 + $0xe8] sm:$0xff]
      %v4185 = vld [vmem:[%s3 + $0xf0] sm:$0xff]
      %v4186 = vld [vmem:[%s3 + $0xf8] sm:$0xff]
      %v4187 = vld [vmem:[%s3 + $0x100] sm:$0xff]
      %v4188 = vld [vmem:[%s3 + $0x108] sm:$0xff]
      %v4189 = vld [vmem:[%s3 + $0x110] sm:$0xff]
      %v4190 = vld [vmem:[%s3 + $0x118] sm:$0xff]
      %v4191 = vld [vmem:[%s3 + $0x120] sm:$0xff]
      %v4192 = vld [vmem:[%s3 + $0x128] sm:$0xff]
      %v4193 = vld [vmem:[%s3 + $0x130] sm:$0xff]
      %v4194 = vld [vmem:[%s3 + $0x138] sm:$0xff]
      %v4195 = vld [vmem:[%s3 + $0x140] sm:$0xff]
      %v4196 = vld [vmem:[%s3 + $0x148] sm:$0xff]
      %v4197 = vld [vmem:[%s3 + $0x150] sm:$0xff]
      %v4198 = vld [vmem:[%s3 + $0x158] sm:$0xff]
      %v4199 = vld [vmem:[%s3 + $0x160] sm:$0xff]
      %v4200 = vld [vmem:[%s3 + $0x168] sm:$0xff]
      %v4201 = vld [vmem:[%s3 + $0x170] sm:$0xff]
      %v4202 = vld [vmem:[%s3 + $0x178] sm:$0xff]
      %v4203 = vld [vmem:[%s3 + $0x180] sm:$0xff]
      %v4204 = vld [vmem:[%s3 + $0x188] sm:$0xff]
      %v4205 = vld [vmem:[%s3 + $0x190] sm:$0xff]
      %v4206 = vld [vmem:[%s3 + $0x198] sm:$0xff]
      %v4207 = vld [vmem:[%s3 + $0x1a0] sm:$0xff]
      %v4208 = vld [vmem:[%s3 + $0x1a8] sm:$0xff]
      %v4209 = vld [vmem:[%s3 + $0x1b0] sm:$0xff]
      %v4210 = vld [vmem:[%s3 + $0x1b8] sm:$0xff]
      %v4211 = vld [vmem:[%s3 + $0x1c0] sm:$0xff]
      %v4212 = vld [vmem:[%s3 + $0x1c8] sm:$0xff]
      %v4213 = vld [vmem:[%s3 + $0x1d0] sm:$0xff]
      %v4214 = vld [vmem:[%s3 + $0x1d8] sm:$0xff]
      %v4215 = vld [vmem:[%s3 + $0x1e0] sm:$0xff]
      %v4216 = vld [vmem:[%s3 + $0x1e8] sm:$0xff]
      %v4217 = vld [vmem:[%s3 + $0x1f0] sm:$0xff]
      %v4218 = vld [vmem:[%s3 + $0x1f8] sm:$0xff]
      %v4219 = vld [vmem:[%s3 + $0x200] sm:$0xff]
      %v4220 = vld [vmem:[%s3 + $0x208] sm:$0xff]
      %v4221 = vld [vmem:[%s3 + $0x210] sm:$0xff]
      %v4222 = vld [vmem:[%s3 + $0x218] sm:$0xff]
      %v4223 = vld [vmem:[%s3 + $0x220] sm:$0xff]
      %v4224 = vld [vmem:[%s3 + $0x228] sm:$0xff]
      %v4225 = vld [vmem:[%s3 + $0x230] sm:$0xff]
      %v4226 = vld [vmem:[%s3 + $0x238] sm:$0xff]
      %v4227 = vld [vmem:[%s3 + $0x240] sm:$0xff]
      %v4228 = vld [vmem:[%s3 + $0x248] sm:$0xff]
      %v4229 = vld [vmem:[%s3 + $0x250] sm:$0xff]
      %v4230 = vld [vmem:[%s3 + $0x258] sm:$0xff]
      %v4231 = vld [vmem:[%s3 + $0x260] sm:$0xff]
      %v4232 = vld [vmem:[%s3 + $0x268] sm:$0xff]
      %v4233 = vld [vmem:[%s3 + $0x270] sm:$0xff]
      %v4234 = vld [vmem:[%s3 + $0x278] sm:$0xff]
      %v4235 = vld [vmem:[%s3 + $0x280] sm:$0xff]
      %v4236 = vld [vmem:[%s3 + $0x288] sm:$0xff]
      %v4237 = vld [vmem:[%s3 + $0x290] sm:$0xff]
      %v4238 = vld [vmem:[%s3 + $0x298] sm:$0xff]
      %v4239 = vld [vmem:[%s3 + $0x2a0] sm:$0xff]
      %v4240 = vld [vmem:[%s3 + $0x2a8] sm:$0xff]
      %v4241 = vld [vmem:[%s3 + $0x2b0] sm:$0xff]
      %v4242 = vld [vmem:[%s3 + $0x2b8] sm:$0xff]
      %v4243 = vld [vmem:[%s3 + $0x2c0] sm:$0xff]
      %v4244 = vld [vmem:[%s3 + $0x2c8] sm:$0xff]
      %v4245 = vld [vmem:[%s3 + $0x2d0] sm:$0xff]
      %v4246 = vld [vmem:[%s3 + $0x2d8] sm:$0xff]
      %v4247 = vld [vmem:[%s3 + $0x2e0] sm:$0xff]
      %v4248 = vld [vmem:[%s3 + $0x2e8] sm:$0xff]
      %v4249 = vld [vmem:[%s3 + $0x2f0] sm:$0xff]
      %v4250 = vld [vmem:[%s3 + $0x2f8] sm:$0xff]
      %v4251 = vld [vmem:[%s3 + $0x300] sm:$0xff]
      %v4252 = vld [vmem:[%s3 + $0x308] sm:$0xff]
      %v4253 = vld [vmem:[%s3 + $0x310] sm:$0xff]
      %v4254 = vld [vmem:[%s3 + $0x318] sm:$0xff]
      %v4255 = vld [vmem:[%s3 + $0x320] sm:$0xff]
      %v4256 = vld [vmem:[%s3 + $0x328] sm:$0xff]
      %v4257 = vld [vmem:[%s3 + $0x330] sm:$0xff]
      %v4258 = vld [vmem:[%s3 + $0x338] sm:$0xff]
      %v4259 = vld [vmem:[%s3 + $0x340] sm:$0xff]
      %v4260 = vld [vmem:[%s3 + $0x348] sm:$0xff]
      %v4261 = vld [vmem:[%s3 + $0x350] sm:$0xff]
      %v4262 = vld [vmem:[%s3 + $0x358] sm:$0xff]
      %v4263 = vld [vmem:[%s3 + $0x360] sm:$0xff]
      %v4264 = vld [vmem:[%s3 + $0x368] sm:$0xff]
      %v4265 = vld [vmem:[%s3 + $0x370] sm:$0xff]
      %v4266 = vld [vmem:[%s3 + $0x378] sm:$0xff]
      %v4267 = vld [vmem:[%s3 + $0x380] sm:$0xff]
      %v4268 = vld [vmem:[%s3 + $0x388] sm:$0xff]
      %v4269 = vld [vmem:[%s3 + $0x390] sm:$0xff]
      %v4270 = vld [vmem:[%s3 + $0x398] sm:$0xff]
      %v4271 = vld [vmem:[%s3 + $0x3a0] sm:$0xff]
      %v4272 = vld [vmem:[%s3 + $0x3a8] sm:$0xff]
      %v4273 = vld [vmem:[%s3 + $0x3b0] sm:$0xff]
      %v4274 = vld [vmem:[%s3 + $0x3b8] sm:$0xff]
      %v4275 = vld [vmem:[%s3 + $0x3c0] sm:$0xff]
      %v4276 = vld [vmem:[%s3 + $0x3c8] sm:$0xff]
      %v4277 = vld [vmem:[%s3 + $0x3d0] sm:$0xff]
      %v4278 = vld [vmem:[%s3 + $0x3d8] sm:$0xff]
      %v4279 = vld [vmem:[%s3 + $0x3e0] sm:$0xff]
      %v4280 = vld [vmem:[%s3 + $0x3e8] sm:$0xff]
      %v4281 = vld [vmem:[%s3 + $0x3f0] sm:$0xff]
      %v4282 = vld [vmem:[%s3 + $0x3f8] sm:$0xff]
      %v4284 = vunpack.c.l.b16 %v4154
      %v4285 = vunpack.c.h.b16 %v4154
      %v4286 = vpack.c.b16 %v4284, %v4284
      %v4287 = vpack.c.b16 %v4285, %v4285
      %v4418 = vunpack.c.l.b16 %v4155
      %v4419 = vunpack.c.h.b16 %v4155
      %v4420 = vunpack.c.l.b16 %v4156
      %v4421 = vunpack.c.h.b16 %v4156
      %v4422 = vunpack.c.l.b16 %v4157
      %v4423 = vunpack.c.h.b16 %v4157
      %v4424 = vunpack.c.l.b16 %v4158
      %v4425 = vunpack.c.h.b16 %v4158
      %v4426 = vunpack.c.l.b16 %v4159
      %v4427 = vunpack.c.h.b16 %v4159
      %v4428 = vunpack.c.l.b16 %v4160
      %v4429 = vunpack.c.h.b16 %v4160
      %v4430 = vunpack.c.l.b16 %v4161
      %v4431 = vunpack.c.h.b16 %v4161
      %v4432 = vunpack.c.l.b16 %v4162
      %v4433 = vunpack.c.h.b16 %v4162
      %v4434 = vunpack.c.l.b16 %v4163
      %v4435 = vunpack.c.h.b16 %v4163
      %v4436 = vunpack.c.l.b16 %v4164
      %v4437 = vunpack.c.h.b16 %v4164
      %v4438 = vunpack.c.l.b16 %v4165
      %v4439 = vunpack.c.h.b16 %v4165
      %v4440 = vunpack.c.l.b16 %v4166
      %v4441 = vunpack.c.h.b16 %v4166
      %v4442 = vunpack.c.l.b16 %v4167
      %v4443 = vunpack.c.h.b16 %v4167
      %v4444 = vunpack.c.l.b16 %v4168
      %v4445 = vunpack.c.h.b16 %v4168
      %v4446 = vunpack.c.l.b16 %v4169
      %v4447 = vunpack.c.h.b16 %v4169
      %v4448 = vunpack.c.l.b16 %v4170
      %v4449 = vunpack.c.h.b16 %v4170
      %v4450 = vunpack.c.l.b16 %v4171
      %v4451 = vunpack.c.h.b16 %v4171
      %v4452 = vunpack.c.l.b16 %v4172
      %v4453 = vunpack.c.h.b16 %v4172
      %v4454 = vunpack.c.l.b16 %v4173
      %v4455 = vunpack.c.h.b16 %v4173
      %v4456 = vunpack.c.l.b16 %v4174
      %v4457 = vunpack.c.h.b16 %v4174
      %v4458 = vunpack.c.l.b16 %v4175
      %v4459 = vunpack.c.h.b16 %v4175
      %v4460 = vunpack.c.l.b16 %v4176
      %v4461 = vunpack.c.h.b16 %v4176
      %v4462 = vunpack.c.l.b16 %v4177
      %v4463 = vunpack.c.h.b16 %v4177
      %v4464 = vunpack.c.l.b16 %v4178
      %v4465 = vunpack.c.h.b16 %v4178
      %v4466 = vunpack.c.l.b16 %v4179
      %v4467 = vunpack.c.h.b16 %v4179
      %v4468 = vunpack.c.l.b16 %v4180
      %v4469 = vunpack.c.h.b16 %v4180
      %v4470 = vunpack.c.l.b16 %v4181
      %v4471 = vunpack.c.h.b16 %v4181
      %v4472 = vunpack.c.l.b16 %v4182
      %v4473 = vunpack.c.h.b16 %v4182
      %v4474 = vunpack.c.l.b16 %v4183
      %v4475 = vunpack.c.h.b16 %v4183
      %v4476 = vunpack.c.l.b16 %v4184
      %v4477 = vunpack.c.h.b16 %v4184
      %v4478 = vunpack.c.l.b16 %v4185
      %v4479 = vunpack.c.h.b16 %v4185
      %v4480 = vunpack.c.l.b16 %v4186
      %v4481 = vunpack.c.h.b16 %v4186
      %v4482 = vunpack.c.l.b16 %v4187
      %v4483 = vunpack.c.h.b16 %v4187
      %v4484 = vunpack.c.l.b16 %v4188
      %v4485 = vunpack.c.h.b16 %v4188
      %v4486 = vunpack.c.l.b16 %v4189
      %v4487 = vunpack.c.h.b16 %v4189
      %v4488 = vunpack.c.l.b16 %v4190
      %v4489 = vunpack.c.h.b16 %v4190
      %v4490 = vunpack.c.l.b16 %v4191
      %v4491 = vunpack.c.h.b16 %v4191
      %v4492 = vunpack.c.l.b16 %v4192
      %v4493 = vunpack.c.h.b16 %v4192
      %v4494 = vunpack.c.l.b16 %v4193
      %v4495 = vunpack.c.h.b16 %v4193
      %v4496 = vunpack.c.l.b16 %v4194
      %v4497 = vunpack.c.h.b16 %v4194
      %v4498 = vunpack.c.l.b16 %v4195
      %v4499 = vunpack.c.h.b16 %v4195
      %v4500 = vunpack.c.l.b16 %v4196
      %v4501 = vunpack.c.h.b16 %v4196
      %v4502 = vunpack.c.l.b16 %v4197
      %v4503 = vunpack.c.h.b16 %v4197
      %v4504 = vunpack.c.l.b16 %v4198
      %v4505 = vunpack.c.h.b16 %v4198
      %v4506 = vunpack.c.l.b16 %v4199
      %v4507 = vunpack.c.h.b16 %v4199
      %v4508 = vunpack.c.l.b16 %v4200
      %v4509 = vunpack.c.h.b16 %v4200
      %v4510 = vunpack.c.l.b16 %v4201
      %v4511 = vunpack.c.h.b16 %v4201
      %v4512 = vunpack.c.l.b16 %v4202
      %v4513 = vunpack.c.h.b16 %v4202
      %v4514 = vunpack.c.l.b16 %v4203
      %v4515 = vunpack.c.h.b16 %v4203
      %v4516 = vunpack.c.l.b16 %v4204
      %v4517 = vunpack.c.h.b16 %v4204
      %v4518 = vunpack.c.l.b16 %v4205
      %v4519 = vunpack.c.h.b16 %v4205
      %v4520 = vunpack.c.l.b16 %v4206
      %v4521 = vunpack.c.h.b16 %v4206
      %v4522 = vunpack.c.l.b16 %v4207
      %v4523 = vunpack.c.h.b16 %v4207
      %v4524 = vunpack.c.l.b16 %v4208
      %v4525 = vunpack.c.h.b16 %v4208
      %v4526 = vunpack.c.l.b16 %v4209
      %v4527 = vunpack.c.h.b16 %v4209
      %v4528 = vunpack.c.l.b16 %v4210
      %v4529 = vunpack.c.h.b16 %v4210
      %v4530 = vunpack.c.l.b16 %v4211
      %v4531 = vunpack.c.h.b16 %v4211
      %v4532 = vunpack.c.l.b16 %v4212
      %v4533 = vunpack.c.h.b16 %v4212
      %v4534 = vunpack.c.l.b16 %v4213
      %v4535 = vunpack.c.h.b16 %v4213
      %v4536 = vunpack.c.l.b16 %v4214
      %v4537 = vunpack.c.h.b16 %v4214
      %v4538 = vunpack.c.l.b16 %v4215
      %v4539 = vunpack.c.h.b16 %v4215
      %v4540 = vunpack.c.l.b16 %v4216
      %v4541 = vunpack.c.h.b16 %v4216
      %v4542 = vunpack.c.l.b16 %v4217
      %v4543 = vunpack.c.h.b16 %v4217
      %v4544 = vunpack.c.l.b16 %v4218
      %v4545 = vunpack.c.h.b16 %v4218
      %v4546 = vunpack.c.l.b16 %v4219
      %v4547 = vunpack.c.h.b16 %v4219
      %v4548 = vunpack.c.l.b16 %v4220
      %v4549 = vunpack.c.h.b16 %v4220
      %v4550 = vunpack.c.l.b16 %v4221
      %v4551 = vunpack.c.h.b16 %v4221
      %v4552 = vunpack.c.l.b16 %v4222
      %v4553 = vunpack.c.h.b16 %v4222
      %v4554 = vunpack.c.l.b16 %v4223
      %v4555 = vunpack.c.h.b16 %v4223
      %v4556 = vunpack.c.l.b16 %v4224
      %v4557 = vunpack.c.h.b16 %v4224
      %v4558 = vunpack.c.l.b16 %v4225
      %v4559 = vunpack.c.h.b16 %v4225
      %v4560 = vunpack.c.l.b16 %v4226
      %v4561 = vunpack.c.h.b16 %v4226
      %v4562 = vunpack.c.l.b16 %v4227
      %v4563 = vunpack.c.h.b16 %v4227
      %v4564 = vunpack.c.l.b16 %v4228
      %v4565 = vunpack.c.h.b16 %v4228
      %v4566 = vunpack.c.l.b16 %v4229
      %v4567 = vunpack.c.h.b16 %v4229
      %v4568 = vunpack.c.l.b16 %v4230
      %v4569 = vunpack.c.h.b16 %v4230
      %v4570 = vunpack.c.l.b16 %v4231
      %v4571 = vunpack.c.h.b16 %v4231
      %v4572 = vunpack.c.l.b16 %v4232
      %v4573 = vunpack.c.h.b16 %v4232
      %v4574 = vunpack.c.l.b16 %v4233
      %v4575 = vunpack.c.h.b16 %v4233
      %v4576 = vunpack.c.l.b16 %v4234
      %v4577 = vunpack.c.h.b16 %v4234
      %v4578 = vunpack.c.l.b16 %v4235
      %v4579 = vunpack.c.h.b16 %v4235
      %v4580 = vunpack.c.l.b16 %v4236
      %v4581 = vunpack.c.h.b16 %v4236
      %v4582 = vunpack.c.l.b16 %v4237
      %v4583 = vunpack.c.h.b16 %v4237
      %v4584 = vunpack.c.l.b16 %v4238
      %v4585 = vunpack.c.h.b16 %v4238
      %v4586 = vunpack.c.l.b16 %v4239
      %v4587 = vunpack.c.h.b16 %v4239
      %v4588 = vunpack.c.l.b16 %v4240
      %v4589 = vunpack.c.h.b16 %v4240
      %v4590 = vunpack.c.l.b16 %v4241
      %v4591 = vunpack.c.h.b16 %v4241
      %v4592 = vunpack.c.l.b16 %v4242
      %v4593 = vunpack.c.h.b16 %v4242
      %v4594 = vunpack.c.l.b16 %v4243
      %v4595 = vunpack.c.h.b16 %v4243
      %v4596 = vunpack.c.l.b16 %v4244
      %v4597 = vunpack.c.h.b16 %v4244
      %v4598 = vunpack.c.l.b16 %v4245
      %v4599 = vunpack.c.h.b16 %v4245
      %v4600 = vunpack.c.l.b16 %v4246
      %v4601 = vunpack.c.h.b16 %v4246
      %v4602 = vunpack.c.l.b16 %v4247
      %v4603 = vunpack.c.h.b16 %v4247
      %v4604 = vunpack.c.l.b16 %v4248
      %v4605 = vunpack.c.h.b16 %v4248
      %v4606 = vunpack.c.l.b16 %v4249
      %v4607 = vunpack.c.h.b16 %v4249
      %v4608 = vunpack.c.l.b16 %v4250
      %v4609 = vunpack.c.h.b16 %v4250
      %v4610 = vunpack.c.l.b16 %v4251
      %v4611 = vunpack.c.h.b16 %v4251
      %v4612 = vunpack.c.l.b16 %v4252
      %v4613 = vunpack.c.h.b16 %v4252
      %v4614 = vunpack.c.l.b16 %v4253
      %v4615 = vunpack.c.h.b16 %v4253
      %v4616 = vunpack.c.l.b16 %v4254
      %v4617 = vunpack.c.h.b16 %v4254
      %v4618 = vunpack.c.l.b16 %v4255
      %v4619 = vunpack.c.h.b16 %v4255
      %v4620 = vunpack.c.l.b16 %v4256
      %v4621 = vunpack.c.h.b16 %v4256
      %v4622 = vunpack.c.l.b16 %v4257
      %v4623 = vunpack.c.h.b16 %v4257
      %v4624 = vunpack.c.l.b16 %v4258
      %v4625 = vunpack.c.h.b16 %v4258
      %v4626 = vunpack.c.l.b16 %v4259
      %v4627 = vunpack.c.h.b16 %v4259
      %v4628 = vunpack.c.l.b16 %v4260
      %v4629 = vunpack.c.h.b16 %v4260
      %v4630 = vunpack.c.l.b16 %v4261
      %v4631 = vunpack.c.h.b16 %v4261
      %v4632 = vunpack.c.l.b16 %v4262
      %v4633 = vunpack.c.h.b16 %v4262
      %v4634 = vunpack.c.l.b16 %v4263
      %v4635 = vunpack.c.h.b16 %v4263
      %v4636 = vunpack.c.l.b16 %v4264
      %v4637 = vunpack.c.h.b16 %v4264
      %v4638 = vunpack.c.l.b16 %v4265
      %v4639 = vunpack.c.h.b16 %v4265
      %v4640 = vunpack.c.l.b16 %v4266
      %v4641 = vunpack.c.h.b16 %v4266
      %v4642 = vunpack.c.l.b16 %v4267
      %v4643 = vunpack.c.h.b16 %v4267
      %v4644 = vunpack.c.l.b16 %v4268
      %v4645 = vunpack.c.h.b16 %v4268
      %v4646 = vunpack.c.l.b16 %v4269
      %v4647 = vunpack.c.h.b16 %v4269
      %v4648 = vunpack.c.l.b16 %v4270
      %v4649 = vunpack.c.h.b16 %v4270
      %v4650 = vunpack.c.l.b16 %v4271
      %v4651 = vunpack.c.h.b16 %v4271
      %v4652 = vunpack.c.l.b16 %v4272
      %v4653 = vunpack.c.h.b16 %v4272
      %v4654 = vunpack.c.l.b16 %v4273
      %v4655 = vunpack.c.h.b16 %v4273
      %v4656 = vunpack.c.l.b16 %v4274
      %v4657 = vunpack.c.h.b16 %v4274
      %v4658 = vunpack.c.l.b16 %v4275
      %v4659 = vunpack.c.h.b16 %v4275
      %v4660 = vunpack.c.l.b16 %v4276
      %v4661 = vunpack.c.h.b16 %v4276
      %v4662 = vunpack.c.l.b16 %v4277
      %v4663 = vunpack.c.h.b16 %v4277
      %v4664 = vunpack.c.l.b16 %v4278
      %v4665 = vunpack.c.h.b16 %v4278
      %v4666 = vunpack.c.l.b16 %v4279
      %v4667 = vunpack.c.h.b16 %v4279
      %v4668 = vunpack.c.l.b16 %v4280
      %v4669 = vunpack.c.h.b16 %v4280
      %v4670 = vunpack.c.l.b16 %v4281
      %v4671 = vunpack.c.h.b16 %v4281
      %v4672 = vunpack.c.l.b16 %v4282
      %v4673 = vunpack.c.h.b16 %v4282
      %v4674 = vpack.c.b16 %v4426, %v4418
      %v4675 = vpack.c.b16 %v4427, %v4419
      %v4676 = vpack.c.b16 %v4428, %v4420
      %v4677 = vpack.c.b16 %v4429, %v4421
      %v4678 = vpack.c.b16 %v4430, %v4422
      %v4679 = vpack.c.b16 %v4431, %v4423
      %v4680 = vpack.c.b16 %v4432, %v4424
      %v4681 = vpack.c.b16 %v4433, %v4425
      %v4682 = vpack.c.b16 %v4442, %v4434
      %v4683 = vpack.c.b16 %v4443, %v4435
      %v4684 = vpack.c.b16 %v4444, %v4436
      %v4685 = vpack.c.b16 %v4445, %v4437
      %v4686 = vpack.c.b16 %v4446, %v4438
      %v4687 = vpack.c.b16 %v4447, %v4439
      %v4688 = vpack.c.b16 %v4448, %v4440
      %v4689 = vpack.c.b16 %v4449, %v4441
      %v4690 = vpack.c.b16 %v4458, %v4450
      %v4691 = vpack.c.b16 %v4459, %v4451
      %v4692 = vpack.c.b16 %v4460, %v4452
      %v4693 = vpack.c.b16 %v4461, %v4453
      %v4694 = vpack.c.b16 %v4462, %v4454
      %v4695 = vpack.c.b16 %v4463, %v4455
      %v4696 = vpack.c.b16 %v4464, %v4456
      %v4697 = vpack.c.b16 %v4465, %v4457
      %v4698 = vpack.c.b16 %v4474, %v4466
      %v4699 = vpack.c.b16 %v4475, %v4467
      %v4700 = vpack.c.b16 %v4476, %v4468
      %v4701 = vpack.c.b16 %v4477, %v4469
      %v4702 = vpack.c.b16 %v4478, %v4470
      %v4703 = vpack.c.b16 %v4479, %v4471
      %v4704 = vpack.c.b16 %v4480, %v4472
      %v4705 = vpack.c.b16 %v4481, %v4473
      %v4706 = vpack.c.b16 %v4490, %v4482
      %v4707 = vpack.c.b16 %v4491, %v4483
      %v4708 = vpack.c.b16 %v4492, %v4484
      %v4709 = vpack.c.b16 %v4493, %v4485
      %v4710 = vpack.c.b16 %v4494, %v4486
      %v4711 = vpack.c.b16 %v4495, %v4487
      %v4712 = vpack.c.b16 %v4496, %v4488
      %v4713 = vpack.c.b16 %v4497, %v4489
      %v4714 = vpack.c.b16 %v4506, %v4498
      %v4715 = vpack.c.b16 %v4507, %v4499
      %v4716 = vpack.c.b16 %v4508, %v4500
      %v4717 = vpack.c.b16 %v4509, %v4501
      %v4718 = vpack.c.b16 %v4510, %v4502
      %v4719 = vpack.c.b16 %v4511, %v4503
      %v4720 = vpack.c.b16 %v4512, %v4504
      %v4721 = vpack.c.b16 %v4513, %v4505
      %v4722 = vpack.c.b16 %v4522, %v4514
      %v4723 = vpack.c.b16 %v4523, %v4515
      %v4724 = vpack.c.b16 %v4524, %v4516
      %v4725 = vpack.c.b16 %v4525, %v4517
      %v4726 = vpack.c.b16 %v4526, %v4518
      %v4727 = vpack.c.b16 %v4527, %v4519
      %v4728 = vpack.c.b16 %v4528, %v4520
      %v4729 = vpack.c.b16 %v4529, %v4521
      %v4730 = vpack.c.b16 %v4538, %v4530
      %v4731 = vpack.c.b16 %v4539, %v4531
      %v4732 = vpack.c.b16 %v4540, %v4532
      %v4733 = vpack.c.b16 %v4541, %v4533
      %v4734 = vpack.c.b16 %v4542, %v4534
      %v4735 = vpack.c.b16 %v4543, %v4535
      %v4736 = vpack.c.b16 %v4544, %v4536
      %v4737 = vpack.c.b16 %v4545, %v4537
      %v4738 = vpack.c.b16 %v4554, %v4546
      %v4739 = vpack.c.b16 %v4555, %v4547
      %v4740 = vpack.c.b16 %v4556, %v4548
      %v4741 = vpack.c.b16 %v4557, %v4549
      %v4742 = vpack.c.b16 %v4558, %v4550
      %v4743 = vpack.c.b16 %v4559, %v4551
      %v4744 = vpack.c.b16 %v4560, %v4552
      %v4745 = vpack.c.b16 %v4561, %v4553
      %v4746 = vpack.c.b16 %v4570, %v4562
      %v4747 = vpack.c.b16 %v4571, %v4563
      %v4748 = vpack.c.b16 %v4572, %v4564
      %v4749 = vpack.c.b16 %v4573, %v4565
      %v4750 = vpack.c.b16 %v4574, %v4566
      %v4751 = vpack.c.b16 %v4575, %v4567
      %v4752 = vpack.c.b16 %v4576, %v4568
      %v4753 = vpack.c.b16 %v4577, %v4569
      %v4754 = vpack.c.b16 %v4586, %v4578
      %v4755 = vpack.c.b16 %v4587, %v4579
      %v4756 = vpack.c.b16 %v4588, %v4580
      %v4757 = vpack.c.b16 %v4589, %v4581
      %v4758 = vpack.c.b16 %v4590, %v4582
      %v4759 = vpack.c.b16 %v4591, %v4583
      %v4760 = vpack.c.b16 %v4592, %v4584
      %v4761 = vpack.c.b16 %v4593, %v4585
      %v4762 = vpack.c.b16 %v4602, %v4594
      %v4763 = vpack.c.b16 %v4603, %v4595
      %v4764 = vpack.c.b16 %v4604, %v4596
      %v4765 = vpack.c.b16 %v4605, %v4597
      %v4766 = vpack.c.b16 %v4606, %v4598
      %v4767 = vpack.c.b16 %v4607, %v4599
      %v4768 = vpack.c.b16 %v4608, %v4600
      %v4769 = vpack.c.b16 %v4609, %v4601
      %v4770 = vpack.c.b16 %v4618, %v4610
      %v4771 = vpack.c.b16 %v4619, %v4611
      %v4772 = vpack.c.b16 %v4620, %v4612
      %v4773 = vpack.c.b16 %v4621, %v4613
      %v4774 = vpack.c.b16 %v4622, %v4614
      %v4775 = vpack.c.b16 %v4623, %v4615
      %v4776 = vpack.c.b16 %v4624, %v4616
      %v4777 = vpack.c.b16 %v4625, %v4617
      %v4778 = vpack.c.b16 %v4634, %v4626
      %v4779 = vpack.c.b16 %v4635, %v4627
      %v4780 = vpack.c.b16 %v4636, %v4628
      %v4781 = vpack.c.b16 %v4637, %v4629
      %v4782 = vpack.c.b16 %v4638, %v4630
      %v4783 = vpack.c.b16 %v4639, %v4631
      %v4784 = vpack.c.b16 %v4640, %v4632
      %v4785 = vpack.c.b16 %v4641, %v4633
      %v4786 = vpack.c.b16 %v4650, %v4642
      %v4787 = vpack.c.b16 %v4651, %v4643
      %v4788 = vpack.c.b16 %v4652, %v4644
      %v4789 = vpack.c.b16 %v4653, %v4645
      %v4790 = vpack.c.b16 %v4654, %v4646
      %v4791 = vpack.c.b16 %v4655, %v4647
      %v4792 = vpack.c.b16 %v4656, %v4648
      %v4793 = vpack.c.b16 %v4657, %v4649
      %v4794 = vpack.c.b16 %v4666, %v4658
      %v4795 = vpack.c.b16 %v4667, %v4659
      %v4796 = vpack.c.b16 %v4668, %v4660
      %v4797 = vpack.c.b16 %v4669, %v4661
      %v4798 = vpack.c.b16 %v4670, %v4662
      %v4799 = vpack.c.b16 %v4671, %v4663
      %v4800 = vpack.c.b16 %v4672, %v4664
      %v4801 = vpack.c.b16 %v4673, %v4665
      %4930 = vmatprep.subr.bf16.mxu0 %v4731
      %4931 = vmatpush1.bf16.msra.mxu0 %v4730
      %4932 = vmatprep.subr.bf16.mxu0 %v4723
      %4933 = vmatpush1.bf16.msra.mxu0 %v4722
      %4934 = vmatprep.subr.bf16.mxu0 %v4715
      %4935 = vmatpush1.bf16.msra.mxu0 %v4714
      %4936 = vmatprep.subr.bf16.mxu0 %v4707
      %4937 = vmatpush1.bf16.msra.mxu0 %v4706
      %4938 = vmatprep.subr.bf16.mxu0 %v4699
      %4939 = vmatpush1.bf16.msra.mxu0 %v4698
      %4940 = vmatprep.subr.bf16.mxu0 %v4691
      %4941 = vmatpush1.bf16.msra.mxu0 %v4690
      %4942 = vmatprep.subr.bf16.mxu0 %v4683
      %4943 = vmatpush1.bf16.msra.mxu0 %v4682
      %4944 = vmatprep.subr.bf16.mxu0 %v4675
      %4945 = vmatpush1.bf16.msra.mxu0 %v4674
      %4946 = vmatprep.subr.bf16.mxu0 %v4795
      %4947 = vmatpush2.bf16.msra.mxu0 %v4794
      %4948 = vmatprep.subr.bf16.mxu0 %v4787
      %4949 = vmatpush2.bf16.msra.mxu0 %v4786
      %4950 = vmatprep.subr.bf16.mxu0 %v4779
      %4951 = vmatpush2.bf16.msra.mxu0 %v4778
      %4952 = vmatprep.subr.bf16.mxu0 %v4771
      %4953 = vmatpush2.bf16.msra.mxu0 %v4770
      %4954 = vmatprep.subr.bf16.mxu0 %v4763
      %4955 = vmatpush2.bf16.msra.mxu0 %v4762
      %4956 = vmatprep.subr.bf16.mxu0 %v4755
      %4957 = vmatpush2.bf16.msra.mxu0 %v4754
      %4958 = vmatprep.subr.bf16.mxu0 %v4747
      %4959 = vmatpush2.bf16.msra.mxu0 %v4746
      %4960 = vmatprep.subr.bf16.mxu0 %v4739
      %4961 = vmatpush2.bf16.msra.mxu0 %v4738
      %4962 = vmatprep.mubr.bf16.mxu0 %v4287
      %4963 = vmatmul.mubr.bf16.gmra.mxu0 %v4286
      %v4964 = vpop.f32.mrf.mxu0
      %v4965 = vadd.f32 0.0, %v4964
      %v4966 = vpop.f32.mrf.mxu0
      %v4967 = vadd.f32 0.0, %v4966
      %v4968 = vpop.f32.mrf.mxu0
      %v4969 = vpop.f32.mrf.mxu0
      %4970 = vdwg.mxu0
      %4971 = vmatprep.subr.bf16.mxu0 %v4733
      %4972 = vmatpush1.bf16.msra.mxu0 %v4732
      %4973 = vmatprep.subr.bf16.mxu0 %v4725
      %4974 = vmatpush1.bf16.msra.mxu0 %v4724
      %4975 = vmatprep.subr.bf16.mxu0 %v4717
      %4976 = vmatpush1.bf16.msra.mxu0 %v4716
      %4977 = vmatprep.subr.bf16.mxu0 %v4709
      %4978 = vmatpush1.bf16.msra.mxu0 %v4708
      %4979 = vmatprep.subr.bf16.mxu0 %v4701
      %4980 = vmatpush1.bf16.msra.mxu0 %v4700
      %4981 = vmatprep.subr.bf16.mxu0 %v4693
      %4982 = vmatpush1.bf16.msra.mxu0 %v4692
      %4983 = vmatprep.subr.bf16.mxu0 %v4685
      %4984 = vmatpush1.bf16.msra.mxu0 %v4684
      %4985 = vmatprep.subr.bf16.mxu0 %v4677
      %4986 = vmatpush1.bf16.msra.mxu0 %v4676
      %4987 = vmatprep.subr.bf16.mxu0 %v4797
      %4988 = vmatpush2.bf16.msra.mxu0 %v4796
      %4989 = vmatprep.subr.bf16.mxu0 %v4789
      %4990 = vmatpush2.bf16.msra.mxu0 %v4788
      %4991 = vmatprep.subr.bf16.mxu0 %v4781
      %4992 = vmatpush2.bf16.msra.mxu0 %v4780
      %4993 = vmatprep.subr.bf16.mxu0 %v4773
      %4994 = vmatpush2.bf16.msra.mxu0 %v4772
      %4995 = vmatprep.subr.bf16.mxu0 %v4765
      %4996 = vmatpush2.bf16.msra.mxu0 %v4764
      %4997 = vmatprep.subr.bf16.mxu0 %v4757
      %4998 = vmatpush2.bf16.msra.mxu0 %v4756
      %4999 = vmatprep.subr.bf16.mxu0 %v4749
      %5000 = vmatpush2.bf16.msra.mxu0 %v4748
      %5001 = vmatprep.subr.bf16.mxu0 %v4741
      %5002 = vmatpush2.bf16.msra.mxu0 %v4740
      %5003 = vmatprep.mubr.bf16.mxu0 %v4287
      %5004 = vmatmul.mubr.bf16.gmra.mxu0 %v4286
      %v5005 = vpop.f32.mrf.mxu0
      %v5006 = vadd.f32 0.0, %v5005
      %v5007 = vpop.f32.mrf.mxu0
      %v5008 = vadd.f32 0.0, %v5007
      %v5009 = vpop.f32.mrf.mxu0
      %v5010 = vpop.f32.mrf.mxu0
      %5011 = vdwg.mxu0
      %5012 = vmatprep.subr.bf16.mxu0 %v4735
      %5013 = vmatpush1.bf16.msra.mxu0 %v4734
      %5014 = vmatprep.subr.bf16.mxu0 %v4727
      %5015 = vmatpush1.bf16.msra.mxu0 %v4726
      %5016 = vmatprep.subr.bf16.mxu0 %v4719
      %5017 = vmatpush1.bf16.msra.mxu0 %v4718
      %5018 = vmatprep.subr.bf16.mxu0 %v4711
      %5019 = vmatpush1.bf16.msra.mxu0 %v4710
      %5020 = vmatprep.subr.bf16.mxu0 %v4703
      %5021 = vmatpush1.bf16.msra.mxu0 %v4702
      %5022 = vmatprep.subr.bf16.mxu0 %v4695
      %5023 = vmatpush1.bf16.msra.mxu0 %v4694
      %5024 = vmatprep.subr.bf16.mxu0 %v4687
      %5025 = vmatpush1.bf16.msra.mxu0 %v4686
      %5026 = vmatprep.subr.bf16.mxu0 %v4679
      %5027 = vmatpush1.bf16.msra.mxu0 %v4678
      %5028 = vmatprep.subr.bf16.mxu0 %v4799
      %5029 = vmatpush2.bf16.msra.mxu0 %v4798
      %5030 = vmatprep.subr.bf16.mxu0 %v4791
      %5031 = vmatpush2.bf16.msra.mxu0 %v4790
      %5032 = vmatprep.subr.bf16.mxu0 %v4783
      %5033 = vmatpush2.bf16.msra.mxu0 %v4782
      %5034 = vmatprep.subr.bf16.mxu0 %v4775
      %5035 = vmatpush2.bf16.msra.mxu0 %v4774
      %5036 = vmatprep.subr.bf16.mxu0 %v4767
      %5037 = vmatpush2.bf16.msra.mxu0 %v4766
      %5038 = vmatprep.subr.bf16.mxu0 %v4759
      %5039 = vmatpush2.bf16.msra.mxu0 %v4758
      %5040 = vmatprep.subr.bf16.mxu0 %v4751
      %5041 = vmatpush2.bf16.msra.mxu0 %v4750
      %5042 = vmatprep.subr.bf16.mxu0 %v4743
      %5043 = vmatpush2.bf16.msra.mxu0 %v4742
      %5044 = vmatprep.mubr.bf16.mxu0 %v4287
      %5045 = vmatmul.mubr.bf16.gmra.mxu0 %v4286
      %v5046 = vpop.f32.mrf.mxu0
      %v5047 = vadd.f32 0.0, %v5046
      %v5048 = vpop.f32.mrf.mxu0
      %v5049 = vadd.f32 0.0, %v5048
      %v5050 = vpop.f32.mrf.mxu0
      %v5051 = vpop.f32.mrf.mxu0
      %5052 = vdwg.mxu0
      %5053 = vmatprep.subr.bf16.mxu0 %v4737
      %5054 = vmatpush1.bf16.msra.mxu0 %v4736
      %5055 = vmatprep.subr.bf16.mxu0 %v4729
      %5056 = vmatpush1.bf16.msra.mxu0 %v4728
      %5057 = vmatprep.subr.bf16.mxu0 %v4721
      %5058 = vmatpush1.bf16.msra.mxu0 %v4720
      %5059 = vmatprep.subr.bf16.mxu0 %v4713
      %5060 = vmatpush1.bf16.msra.mxu0 %v4712
      %5061 = vmatprep.subr.bf16.mxu0 %v4705
      %5062 = vmatpush1.bf16.msra.mxu0 %v4704
      %5063 = vmatprep.subr.bf16.mxu0 %v4697
      %5064 = vmatpush1.bf16.msra.mxu0 %v4696
      %5065 = vmatprep.subr.bf16.mxu0 %v4689
      %5066 = vmatpush1.bf16.msra.mxu0 %v4688
      %5067 = vmatprep.subr.bf16.mxu0 %v4681
      %5068 = vmatpush1.bf16.msra.mxu0 %v4680
      %5069 = vmatprep.subr.bf16.mxu0 %v4801
      %5070 = vmatpush2.bf16.msra.mxu0 %v4800
      %5071 = vmatprep.subr.bf16.mxu0 %v4793
      %5072 = vmatpush2.bf16.msra.mxu0 %v4792
      %5073 = vmatprep.subr.bf16.mxu0 %v4785
      %5074 = vmatpush2.bf16.msra.mxu0 %v4784
      %5075 = vmatprep.subr.bf16.mxu0 %v4777
      %5076 = vmatpush2.bf16.msra.mxu0 %v4776
      %5077 = vmatprep.subr.bf16.mxu0 %v4769
      %5078 = vmatpush2.bf16.msra.mxu0 %v4768
      %5079 = vmatprep.subr.bf16.mxu0 %v4761
      %5080 = vmatpush2.bf16.msra.mxu0 %v4760
      %5081 = vmatprep.subr.bf16.mxu0 %v4753
      %5082 = vmatpush2.bf16.msra.mxu0 %v4752
      %5083 = vmatprep.subr.bf16.mxu0 %v4745
      %5084 = vmatpush2.bf16.msra.mxu0 %v4744
      %5085 = vmatprep.mubr.bf16.mxu0 %v4287
      %5086 = vmatmul.mubr.bf16.gmra.mxu0 %v4286
      %v5087 = vpop.f32.mrf.mxu0
      %v5088 = vadd.f32 0.0, %v5087
      %v5089 = vpop.f32.mrf.mxu0
      %v5090 = vadd.f32 0.0, %v5089
      %v5091 = vpop.f32.mrf.mxu0
      %v5092 = vpop.f32.mrf.mxu0
      %5093 = vdwg.mxu0
      %v5094 = vld [vmem:[%s2074] sm:$0xff]
      %v5095 = vld [vmem:[%s2074 + $0x8] sm:$0xff]
      %v5096 = vunpack.c.l.bf16 %v5094
      %v5097 = vunpack.c.h.bf16 %v5094
      %v5098 = vunpack.c.l.bf16 %v5095
      %v5099 = vunpack.c.h.bf16 %v5095
      %v5100 = vadd.f32 %v5096, %v4965
      %v5101 = vadd.f32 %v5097, %v4967
      %v5102 = vadd.f32 %v5098, %v5006
      %v5103 = vadd.f32 %v5099, %v5008
      %v5104 = vld [vmem:[%s2061 + $0x10] sm:$0xff]
      %v5105 = vld [vmem:[%s2061 + $0x18] sm:$0xff]
      %v5106 = vunpack.c.l.bf16 %v5104
      %v5107 = vunpack.c.h.bf16 %v5104
      %v5108 = vunpack.c.l.bf16 %v5105
      %v5109 = vunpack.c.h.bf16 %v5105
      %v5110 = vadd.f32 %v5106, %v5047
      %v5111 = vadd.f32 %v5107, %v5049
      %v5112 = vadd.f32 %v5108, %v5088
      %v5113 = vadd.f32 %v5109, %v5090
      %v5114 = vld [vmem:[#allocation4] sm:$0xff]
      %v5115 = vmul.f32 %v5100, 0.5
      %v5116 = vtanh.pop %v5115
      %v5117 = vmul.f32 %v5116, 0.5
      %v5118 = vadd.f32 %v5117, 0.5
      %v5119 = vmul.f32 %v5101, 0.5
      %v5120 = vtanh.pop %v5119
      %v5121 = vmul.f32 %v5120, 0.5
      %v5122 = vadd.f32 %v5121, 0.5
      %v5123 = vtanh.pop %v5102
      %v5124 = vmul.f32 %v5103, 0.5
      %v5125 = vtanh.pop %v5124
      %v5126 = vmul.f32 %v5125, 0.5
      %v5127 = vadd.f32 %v5126, 0.5
      %v5128 = vmul.f32 %v5122, %v5114
      %v5129 = vmul.f32 %v5118, %v5123
      %v5130 = vadd.f32 %v5128, %v5129
      %v5131 = vtanh.pop %v5130
      %v5132 = vmul.f32 %v5127, %v5131
      %v5133 = vld [vmem:[#allocation4 + $0x8] sm:$0xff]
      %v5134 = vmul.f32 %v5110, 0.5
      %v5135 = vtanh.pop %v5134
      %v5136 = vmul.f32 %v5135, 0.5
      %v5137 = vadd.f32 %v5136, 0.5
      %v5138 = vmul.f32 %v5111, 0.5
      %v5139 = vtanh.pop %v5138
      %v5140 = vmul.f32 %v5139, 0.5
      %v5141 = vadd.f32 %v5140, 0.5
      %v5142 = vtanh.pop %v5112
      %v5143 = vmul.f32 %v5113, 0.5
      %v5144 = vtanh.pop %v5143
      %v5145 = vmul.f32 %v5144, 0.5
      %v5146 = vadd.f32 %v5145, 0.5
      %v5147 = vmul.f32 %v5141, %v5133
      %v5148 = vmul.f32 %v5137, %v5142
      %v5149 = vadd.f32 %v5147, %v5148
      %v5150 = vtanh.pop %v5149
      %v5151 = vmul.f32 %v5146, %v5150
      %v5152 = vpack.c.bf16 %v5132, %v5132
      %v5153 = vpack.c.bf16 %v5151, %v5151
      %5154 = vst [vmem:[#allocation3] sm:$0xf] %v5152
      %5155 = vst [vmem:[#allocation3 + $0x4] sm:$0xf] %v5153
      %5156 = vst [vmem:[#allocation4] sm:$0xff] %v5130
      %5157 = vst [vmem:[#allocation4 + $0x8] sm:$0xff] %v5149
      %s5158 = scalar_lea.vmem %s317, 12
      %5159 = vst [vmem:[%s5158] sm:$0xf] %v5152
      %5160 = vst [vmem:[%s324] sm:$0xf] %v5153
      %p5161 = scmp.eq.s32.totalorder %s19, 1
      // Predicated region
      $region45: #{word_rnn_forward.1} parent=39 // pred_check
        %p5162 = pneg %p5161
      $region46: #{word_rnn_forward.1} parent=39 // pred_check_branch
        %5164 = sbr.rel (%p5162) target = $region48
      $region47: #{word_rnn_forward.1} parent=39 // pred_region
        %v5165 = vld [vmem:[#allocation3] sm:$0xff]
        %v5166 = vunpack.c.l.bf16 %v5165
        %v5167 = vunpack.c.h.bf16 %v5165
        %5168 = vst [vmem:[%s7] sm:$0xff] %v5166
        %5169 = vst [vmem:[%s7 + $0x8] sm:$0xff] %v5167
      $region48: #{word_rnn_forward.1} parent=39 // pred_fallthru
        _
      %s5170 = smul.u32 4, %s19
      %p5171 = scmp.lt.s32.totalorder %s5170, 7
      %s5172 = scalar_select %p5171, %s5170, 7
      %s5173 = smul.addr %s5172, 4
      %s5174 = scalar_lea.vmem %s5, %s5173
      %s5175 = ssub.s32 1, %s19
      %s5176 = smul.u32 4, %s5175
      %p5177 = scmp.lt.s32.totalorder %s5176, 7
      %s5178 = scalar_select %p5177, %s5176, 7
      %s5179 = smul.addr %s5178, 4
      %s5180 = scalar_lea.vmem %s6, %s5179
      // Predicated region
      $region49: #{word_rnn_forward.1} parent=39 // pred_check
        %p5181 = pneg %p154
      $region50: #{word_rnn_forward.1} parent=39 // pred_check_branch
        %5183 = sbr.rel (%p5181) target = $region52
      $region51: #{word_rnn_forward.1} parent=39 // pred_region
        %s5184 = smul.u32 4, %s19
      $region52: #{word_rnn_forward.1} parent=39 // pred_fallthru
        _
      // Predicated region
      $region53: #{word_rnn_forward.1} parent=39 // pred_check
        %p5185 = pneg %p182
      $region54: #{word_rnn_forward.1} parent=39 // pred_check_branch
        %5187 = sbr.rel (%p5185) target = $region56
      $region55: #{word_rnn_forward.1} parent=39 // pred_region
        %s5188 = ssub.s32 1, %s19
        %s5189 = smul.u32 4, %s5188
      $region56: #{word_rnn_forward.1} parent=39 // pred_fallthru
        _
      // Predicated region
      $region57: #{word_rnn_forward.1} parent=39 // pred_check
        %p5190 = pneg %p203
      $region58: #{word_rnn_forward.1} parent=39 // pred_check_branch
        %5192 = sbr.rel (%p5190) target = $region60
      $region59: #{word_rnn_forward.1} parent=39 // pred_region
        _
      $region60: #{word_rnn_forward.1} parent=39 // pred_fallthru
        _
      // Predicated region
      $region61: #{word_rnn_forward.1} parent=39 // pred_check
        %p5193 = pneg %p203
      $region62: #{word_rnn_forward.1} parent=39 // pred_check_branch
        %5195 = sbr.rel (%p5193) target = $region64
      $region63: #{word_rnn_forward.1} parent=39 // pred_region
        _
      $region64: #{word_rnn_forward.1} parent=39 // pred_fallthru
        _
    $region40: #{word_rnn_forward.1} parent=5 // pred_fallthru
      _
    %p5196 = scmp.le.s32.totalorder 2, %s14
    // Predicated region
    $region65: #{word_rnn_forward.1} parent=5 // pred_check
      %p5197 = pneg %p5196
    $region66: #{word_rnn_forward.1} parent=5 // pred_check_branch
      %5199 = sbr.rel (%p5197) target = $region68
    $region67: #{word_rnn_forward.1} parent=5 // pred_region
      %s5200 = ssub.s32 %s14, 2
      // Predicated region
      $region69: #{word_rnn_forward.1} parent=67 // pred_check
        %p5201 = pneg %p160
      $region70: #{word_rnn_forward.1} parent=67 // pred_check_branch
        %5203 = sbr.rel (%p5201) target = $region72
      $region71: #{word_rnn_forward.1} parent=67 // pred_region
        %s5204 = smul.u32 4, %s20
        %p5205 = scmp.lt.s32.totalorder %s5204, 7
        %s5206 = scalar_select %p5205, %s5204, 7
        %s5207 = smul.addr %s5206, 4
        %s5208 = scalar_lea.vmem %s5, %s5207
      $region72: #{word_rnn_forward.1} parent=67 // pred_fallthru
        _
      // Predicated region
      $region73: #{word_rnn_forward.1} parent=67 // pred_check
        %p5209 = pneg %p188
      $region74: #{word_rnn_forward.1} parent=67 // pred_check_branch
        %5211 = sbr.rel (%p5209) target = $region76
      $region75: #{word_rnn_forward.1} parent=67 // pred_region
        %s5212 = ssub.s32 1, %s20
        %s5213 = smul.u32 4, %s5212
        %p5214 = scmp.lt.s32.totalorder %s5213, 7
        %s5215 = scalar_select %p5214, %s5213, 7
        %s5216 = smul.addr %s5215, 4
        %s5217 = scalar_lea.vmem %s6, %s5216
      $region76: #{word_rnn_forward.1} parent=67 // pred_fallthru
        _
    $region68: #{word_rnn_forward.1} parent=5 // pred_fallthru
      _
  $region6: #{word_rnn_forward.1} parent=0 // loop_footer
    %s18 = sadd.s32 1, %s14
  $region7: #{word_rnn_forward.1} parent=0 // loop_footer_branch
    %13 = sbr.rel target = $region3
  $region8: #{word_rnn_forward.1} parent=0 // loop_exit
    _

</llo_original>
